<compile_context>
chip_gen: v5e
topology: v5e:2x2
jax: 0.10.0
libtpu: 0.0.40
codegen_flags: <defaults>
</compile_context>

<pallas_src>
import random
import numpy as np
import jax
import jax.numpy as jnp
from jax import lax
from jax.experimental import pallas as pl
from jax.experimental.pallas import tpu as pltpu

PAD_IDX = 0
BOS_IDX = 1

VMEM_SPEC = pl.BlockSpec(memory_space=pltpu.MemorySpace.VMEM)
SMEM_SPEC = pl.BlockSpec(memory_space=pltpu.MemorySpace.SMEM)


# ----------------------------------------------------------------------------
# Kernel 1: fused bidirectional encoder LSTM + h_last linear/tanh.
#   x_tm: (S, B, E) time-major embeddings.
#   outputs: hseq_f (S,B,H), hseq_b (S,B,H), h_init (B,H)
#   scratch:  xf/xb (S,B,4H) — hoisted input-to-hidden projections.
# ----------------------------------------------------------------------------
def _bilstm_encoder_kernel(x_ref, wih_f_ref, whh_f_ref, b_f_ref,
                           wih_b_ref, whh_b_ref, b_b_ref,
                           hw_f_ref, hw_b_ref, hlb_ref,
                           hseq_f_ref, hseq_b_ref, hinit_ref,
                           xf_ref, xb_ref):
    S, B, E = x_ref.shape
    H = hinit_ref.shape[1]

    # Hoisted input-to-hidden projections: one big MXU matmul per direction
    # (removes S tiny (B,E)x(E,4H) matmuls from the serial h->h critical path).
    x2 = x_ref[...].reshape(S * B, E)
    xf_ref[...] = (jnp.dot(x2, wih_f_ref[...], preferred_element_type=jnp.float32)
                   + b_f_ref[...]).reshape(S, B, 4 * H)
    xb_ref[...] = (jnp.dot(x2, wih_b_ref[...], preferred_element_type=jnp.float32)
                   + b_b_ref[...]).reshape(S, B, 4 * H)

    def cell(pre, h, c, whh_ref):
        gates = pre + jnp.dot(h, whh_ref[...], preferred_element_type=jnp.float32)
        i = jax.nn.sigmoid(gates[:, 0 * H:1 * H])
        f = jax.nn.sigmoid(gates[:, 1 * H:2 * H])
        g = jnp.tanh(gates[:, 2 * H:3 * H])
        o = jax.nn.sigmoid(gates[:, 3 * H:4 * H])
        c_new = f * c + i * g
        h_new = o * jnp.tanh(c_new)
        return h_new, c_new

    zeros = jnp.zeros((B, H), jnp.float32)

    def step(t, carry):
        h_f, c_f, h_b, c_b = carry
        h_f, c_f = cell(xf_ref[t], h_f, c_f, whh_f_ref)            # forward dir
        h_b, c_b = cell(xb_ref[S - 1 - t], h_b, c_b, whh_b_ref)    # backward dir
        hseq_f_ref[t] = h_f
        hseq_b_ref[S - 1 - t] = h_b
        return h_f, c_f, h_b, c_b

    h_f, _, h_b, _ = lax.fori_loop(0, S, step, (zeros, zeros, zeros, zeros),
                                   unroll=True)

    # h_last transform: tanh(Linear([h_fwd | h_bwd])) with split weights (no concat).
    hinit_ref[...] = jnp.tanh(
        jnp.dot(h_f, hw_f_ref[...], preferred_element_type=jnp.float32)
        + jnp.dot(h_b, hw_b_ref[...], preferred_element_type=jnp.float32)
        + hlb_ref[...])


def bilstm_encoder(p, x_tm):
    S, B, _ = x_tm.shape
    H = p['enc_whh_f'].shape[0]
    return pl.pallas_call(
        _bilstm_encoder_kernel,
        out_shape=(jax.ShapeDtypeStruct((S, B, H), jnp.float32),
                   jax.ShapeDtypeStruct((S, B, H), jnp.float32),
                   jax.ShapeDtypeStruct((B, H), jnp.float32)),
        in_specs=[VMEM_SPEC] * 10,
        out_specs=(VMEM_SPEC, VMEM_SPEC, VMEM_SPEC),
        scratch_shapes=[pltpu.VMEM((S, B, 4 * H), jnp.float32),
                        pltpu.VMEM((S, B, 4 * H), jnp.float32)],
    )(x_tm, p['enc_wih_f'], p['enc_whh_f'], p['enc_b_f'],
      p['enc_wih_b'], p['enc_whh_b'], p['enc_b_b'],
      p['enc_hw_f'], p['enc_hw_b'], p['enc_hb'])


# ----------------------------------------------------------------------------
# Kernel 2: full decoder sequence (attention + LSTM cell + output projection +
# greedy/teacher-forced feedback) for all T steps inside one kernel.
# Encoder outputs arrive fused + batch-major: (B, S, 2H).
# ----------------------------------------------------------------------------
def _decoder_seq_kernel(tf_ref,                       # SMEM (T,) int32 teacher-forcing flags
                        tgt_ref,                      # (T, B, 1) int32
                        mask_ref,                     # (B, S) f32 (1.0 where PAD)
                        enc_ref,                      # (B, S, 2H)
                        h0_ref,                       # (B, H)
                        emb_tbl_ref,                  # (Vt, E)
                        awh_ref, awe_ref,             # (H,H), (2H,H)
                        ab_ref, av_ref,               # (1,H) each
                        wie_ref, wic_ref, whh_ref, lb_ref,
                        owh_ref, owc_ref, owe_ref, ob_ref,
                        logits_ref):                  # out (T, B, Vt)
    B, S, H2 = enc_ref.shape
    H = h0_ref.shape[1]
    T, _, Vt = logits_ref.shape

    # ---- loop-invariant hoists (computed once, reused every serial step) ----
    # enc-dependent half of the attention energy (batch-major, single fused matmul).
    enc_proj = (jnp.dot(enc_ref[...].reshape(B * S, H2), awe_ref[...],
                        preferred_element_type=jnp.float32).reshape(B, S, H)
                + ab_ref[...].reshape(1, 1, H))
    av_b = jnp.broadcast_to(av_ref[...].reshape(1, 1, H), (B, S, H))
    pad = mask_ref[...] > 0.5                                       # (B, S) bool
    iota_bv = lax.broadcasted_iota(jnp.int32, (B, Vt), 1)           # one-hot + argmax
    lb = jnp.broadcast_to(lb_ref[...], (B, 4 * H))
    ob = jnp.broadcast_to(ob_ref[...], (B, Vt))

    h0 = h0_ref[...]
    c0 = jnp.zeros((B, H), jnp.float32)
    bos_ids = jnp.full((B, 1), BOS_IDX, dtype=jnp.int32)

    def step(t, carry):
        h, c, ids = carry

        # Embedding lookup as one-hot MXU matmul (fine for tiny Vt).
        onehot = (ids == iota_bv).astype(jnp.float32)                # (B, Vt)
        emb = jnp.dot(onehot, emb_tbl_ref[...],
                      preferred_element_type=jnp.float32)            # (B, E)

        # Attention: tanh(W_h h + W_e enc + b) . v, lane-dense masked softmax over S.
        hp = jnp.dot(h, awh_ref[...], preferred_element_type=jnp.float32)   # (B, H)
        eh = jnp.tanh(enc_proj + hp[:, None, :])                            # (B, S, H)
        scores = jnp.sum(eh * av_b, axis=-1)                                # (B, S)
        scores = jnp.where(pad, -1e10, scores)
        scores = scores - jnp.max(scores, axis=-1, keepdims=True)
        pr = jnp.exp(scores)
        attn = pr * pl.reciprocal(jnp.sum(pr, axis=-1, keepdims=True),
                                  approx=True)                              # (B, S)

        # Context as a batched MXU matmul (B,1,S) x (B,S,2H) -> (B, 2H).
        ctx = jnp.einsum('bqs,bsh->bqh', attn[:, None, :], enc_ref[...],
                         preferred_element_type=jnp.float32).reshape(B, H2)

        # Decoder LSTM cell; input [emb | ctx] via split weights (no concat).
        gates = (jnp.dot(emb, wie_ref[...], preferred_element_type=jnp.float32)
                 + jnp.dot(ctx, wic_ref[...], preferred_element_type=jnp.float32)
                 + jnp.dot(h, whh_ref[...], preferred_element_type=jnp.float32)
                 + lb)                                                       # (B, 4H)
        i = jax.nn.sigmoid(gates[:, 0 * H:1 * H])
        f = jax.nn.sigmoid(gates[:, 1 * H:2 * H])
        g = jnp.tanh(gates[:, 2 * H:3 * H])
        o = jax.nn.sigmoid(gates[:, 3 * H:4 * H])
        c_new = f * c + i * g
        h_new = o * jnp.tanh(c_new)

        # Output projection over [h_new | ctx | emb] via split weights.
        logits = (jnp.dot(h_new, owh_ref[...], preferred_element_type=jnp.float32)
                  + jnp.dot(ctx, owc_ref[...], preferred_element_type=jnp.float32)
                  + jnp.dot(emb, owe_ref[...], preferred_element_type=jnp.float32)
                  + ob)                                                      # (B, Vt)
        logits_ref[t] = logits

        # Next input ids: teacher forcing vs greedy argmax (first max index).
        mx = jnp.max(logits, axis=-1, keepdims=True)
        top1 = jnp.min(jnp.where(logits >= mx, iota_bv, Vt),
                       axis=-1, keepdims=True)                               # (B, 1)
        use_t = (tf_ref[t] > 0).astype(jnp.int32)
        next_ids = use_t * tgt_ref[t] + (1 - use_t) * top1
        return h_new, c_new, next_ids

    lax.fori_loop(0, T, step, (h0, c0, bos_ids), unroll=True)


def decoder_decode(p, tf_mask, tgt_tm, mask_bm, enc_bm, h0):
    B, S, _ = enc_bm.shape
    T = tgt_tm.shape[0]
    Vt = p['dec_ow_h'].shape[1]
    return pl.pallas_call(
        _decoder_seq_kernel,
        out_shape=jax.ShapeDtypeStruct((T, B, Vt), jnp.float32),
        in_specs=[SMEM_SPEC] + [VMEM_SPEC] * 17,
        out_specs=VMEM_SPEC,
    )(tf_mask, tgt_tm, mask_bm, enc_bm, h0,
      p['dec_emb'],
      p['attn_wh'], p['attn_we'], p['attn_b'], p['attn_v'],
      p['dec_wih_e'], p['dec_wih_c'], p['dec_whh'], p['dec_b'],
      p['dec_ow_h'], p['dec_ow_c'], p['dec_ow_e'], p['dec_ob'])


# ----------------------------------------------------------------------------
# Full forward (jitted). Teacher-forcing decisions are a runtime int32 mask.
# ----------------------------------------------------------------------------
@jax.jit
def seq2seq_forward(p, src_ids, tgt_ids, tf_mask):
    # Encoder embeddings gathered directly time-major.
    x_tm = p['enc_emb'][src_ids.T].astype(jnp.float32)               # (S, B, E)
    enc_f, enc_b, h0 = bilstm_encoder(p, x_tm)                       # (S,B,H)x2, (B,H)

    # One-time fuse + transpose (outside both recurrences) to the batch-major
    # (B, S, 2H) layout the decoder consumes (lane-dense softmax over S).
    enc_bm = jnp.transpose(jnp.concatenate([enc_f, enc_b], axis=-1), (1, 0, 2))

    mask_bm = (src_ids == PAD_IDX).astype(jnp.float32)               # (B, S)
    tgt_tm = tgt_ids.astype(jnp.int32).T[:, :, None]                 # (T, B, 1)

    logits_tm = decoder_decode(p, tf_mask, tgt_tm, mask_bm, enc_bm, h0)  # (T,B,Vt)
    return jnp.transpose(logits_tm, (1, 0, 2))                       # (B, T, Vt)


# ----------------------------------------------------------------------------
# Deterministic parameter initialization (shapes match the PyTorch module, with
# concat-weights stored pre-split / pre-fused and pre-transposed to (in, out)).
# ----------------------------------------------------------------------------
def init_params(key, Vs, Vt, E, H):
    ks = jax.random.split(key, 28)

    def u(k, shape, fan):
        s = 1.0 / float(np.sqrt(fan))
        return jax.random.uniform(k, shape, jnp.float32, -s, s)

    p = {}
    p['enc_emb'] = jax.random.normal(ks[0], (Vs, E), jnp.float32)
    p['dec_emb'] = jax.random.normal(ks[1], (Vt, E), jnp.float32)
    # encoder bidirectional LSTM (transposed weights; bias = b_ih + b_hh)
    p['enc_wih_f'] = u(ks[2], (E, 4 * H), H)
    p['enc_whh_f'] = u(ks[3], (H, 4 * H), H)
    p['enc_b_f'] = u(ks[4], (1, 4 * H), H) + u(ks[5], (1, 4 * H), H)
    p['enc_wih_b'] = u(ks[6], (E, 4 * H), H)
    p['enc_whh_b'] = u(ks[7], (H, 4 * H), H)
    p['enc_b_b'] = u(ks[8], (1, 4 * H), H) + u(ks[9], (1, 4 * H), H)
    # encoder h_last transform Linear(2H -> H), split over [h_fwd | h_bwd]
    p['enc_hw_f'] = u(ks[10], (H, H), 2 * H)
    p['enc_hw_b'] = u(ks[11], (H, H), 2 * H)
    p['enc_hb'] = u(ks[12], (1, H), 2 * H)
    # attention Linear(3H -> H) split over [h | enc(2H)]; v xavier_uniform
    p['attn_wh'] = u(ks[13], (H, H), 3 * H)
    p['attn_we'] = u(ks[14], (2 * H, H), 3 * H)
    p['attn_b'] = u(ks[15], (1, H), 3 * H)
    lim = float(np.sqrt(6.0 / (H + 1)))
    p['attn_v'] = jax.random.uniform(ks[16], (1, H), jnp.float32, -lim, lim)
    # decoder LSTM, input = [emb | ctx(2H)]
    p['dec_wih_e'] = u(ks[17], (E, 4 * H), H)
    p['dec_wih_c'] = u(ks[18], (2 * H, 4 * H), H)
    p['dec_whh'] = u(ks[19], (H, 4 * H), H)
    p['dec_b'] = u(ks[20], (1, 4 * H), H) + u(ks[21], (1, 4 * H), H)
    # output projection Linear(3H + E -> Vt) split over [h | ctx(2H) | emb]
    fin = 3 * H + E
    p['dec_ow_h'] = u(ks[22], (H, Vt), fin)
    p['dec_ow_c'] = u(ks[23], (2 * H, Vt), fin)
    p['dec_ow_e'] = u(ks[24], (E, Vt), fin)
    p['dec_ob'] = u(ks[25], (1, Vt), fin)
    return p


if __name__ == "__main__":
    B, S, T = 2, 8, 6
    E, H = 32, 32
    Vs, Vt = 40, 48

    key = jax.random.PRNGKey(0)
    k_par, k_src, k_tgt = jax.random.split(key, 3)
    params = init_params(k_par, Vs, Vt, E, H)

    # token ids >= 2 so no PAD tokens appear (src_lengths == S for every sequence)
    src_ids = jax.random.randint(k_src, (B, S), 2, Vs, dtype=jnp.int32)
    tgt_ids = jax.random.randint(k_tgt, (B, T), 2, Vt, dtype=jnp.int32)

    # Per-step teacher-forcing decisions (PyTorch draws random.random() each step);
    # ratio = 1.0 -> always teacher-forced, matching the previous demo.
    random.seed(0)
    teacher_forcing_ratio = 1.0
    tf_mask = jnp.array(
        [1 if random.random() < teacher_forcing_ratio else 0 for _ in range(T)],
        dtype=jnp.int32)

    out = seq2seq_forward(params, src_ids, tgt_ids, tf_mask)
    out = jax.block_until_ready(out)
    assert out.shape == (B, T, Vt), out.shape
    assert bool(jnp.all(jnp.isfinite(out)))
    print("KERNEL_OK")
</pallas_src>

<mosaic_0001>
module attributes {stable_mosaic.version = 11 : i64} {
  func.func @_bilstm_encoder_kernel(%arg0: memref<8x2x32xf32, #tpu.memory_space<vmem>>, %arg1: memref<32x128xf32, #tpu.memory_space<vmem>>, %arg2: memref<32x128xf32, #tpu.memory_space<vmem>>, %arg3: memref<1x128xf32, #tpu.memory_space<vmem>>, %arg4: memref<32x128xf32, #tpu.memory_space<vmem>>, %arg5: memref<32x128xf32, #tpu.memory_space<vmem>>, %arg6: memref<1x128xf32, #tpu.memory_space<vmem>>, %arg7: memref<32x32xf32, #tpu.memory_space<vmem>>, %arg8: memref<32x32xf32, #tpu.memory_space<vmem>>, %arg9: memref<1x32xf32, #tpu.memory_space<vmem>>, %arg10: memref<8x2x32xf32, #tpu.memory_space<vmem>>, %arg11: memref<8x2x32xf32, #tpu.memory_space<vmem>>, %arg12: memref<2x32xf32, #tpu.memory_space<vmem>>, %arg13: memref<8x2x128xf32, #tpu.memory_space<vmem>>, %arg14: memref<8x2x128xf32, #tpu.memory_space<vmem>>) attributes {dimension_semantics = [], scalar_prefetch = 0 : i64, scratch_operands = 2 : i64, tpu.core_type = #tpu.core_type<tc>} {
    %c0 = arith.constant 0 : index
    %c0_0 = arith.constant 0 : index
    %c0_1 = arith.constant 0 : index
    %0 = vector.load %arg0[%c0, %c0_0, %c0_1] : memref<8x2x32xf32, #tpu.memory_space<vmem>>, vector<8x2x32xf32>
    %1 = vector.shape_cast %0 : vector<8x2x32xf32> to vector<16x32xf32>
    %c0_2 = arith.constant 0 : index
    %c0_3 = arith.constant 0 : index
    %2 = vector.load %arg1[%c0_2, %c0_3] : memref<32x128xf32, #tpu.memory_space<vmem>>, vector<32x128xf32>
    %cst = arith.constant dense<0.000000e+00> : vector<16x128xf32>
    %3 = tpu.matmul %1, %2, %cst {dimension_numbers = #tpu.dot_dimension_numbers<[1], [0], [0], [1], [0, 0, 1, 1], [], []>} : vector<16x32xf32>, vector<32x128xf32>, vector<16x128xf32> -> vector<16x128xf32>
    %c0_4 = arith.constant 0 : index
    %c0_5 = arith.constant 0 : index
    %4 = vector.load %arg3[%c0_4, %c0_5] : memref<1x128xf32, #tpu.memory_space<vmem>>, vector<1x128xf32>
    %5 = vector.broadcast %4 : vector<1x128xf32> to vector<16x128xf32>
    %6 = arith.addf %3, %5 : vector<16x128xf32>
    %7 = vector.shape_cast %6 : vector<16x128xf32> to vector<8x2x128xf32>
    %c0_6 = arith.constant 0 : index
    %c0_7 = arith.constant 0 : index
    %c0_8 = arith.constant 0 : index
    %8 = vector.load %arg13[%c0_6, %c0_7, %c0_8] : memref<8x2x128xf32, #tpu.memory_space<vmem>>, vector<8x2x128xf32>
    tpu.vector_store %arg13[%c0_6, %c0_7, %c0_8], %7 {strides = array<i32>} : memref<8x2x128xf32, #tpu.memory_space<vmem>>, vector<8x2x128xf32>,
    %c0_9 = arith.constant 0 : index
    %c0_10 = arith.constant 0 : index
    %9 = vector.load %arg4[%c0_9, %c0_10] : memref<32x128xf32, #tpu.memory_space<vmem>>, vector<32x128xf32>
    %cst_11 = arith.constant dense<0.000000e+00> : vector<16x128xf32>
    %10 = tpu.matmul %1, %9, %cst_11 {dimension_numbers = #tpu.dot_dimension_numbers<[1], [0], [0], [1], [0, 0, 1, 1], [], []>} : vector<16x32xf32>, vector<32x128xf32>, vector<16x128xf32> -> vector<16x128xf32>
    %c0_12 = arith.constant 0 : index
    %c0_13 = arith.constant 0 : index
    %11 = vector.load %arg6[%c0_12, %c0_13] : memref<1x128xf32, #tpu.memory_space<vmem>>, vector<1x128xf32>
    %12 = vector.broadcast %11 : vector<1x128xf32> to vector<16x128xf32>
    %13 = arith.addf %10, %12 : vector<16x128xf32>
    %14 = vector.shape_cast %13 : vector<16x128xf32> to vector<8x2x128xf32>
    %c0_14 = arith.constant 0 : index
    %c0_15 = arith.constant 0 : index
    %c0_16 = arith.constant 0 : index
    %15 = vector.load %arg14[%c0_14, %c0_15, %c0_16] : memref<8x2x128xf32, #tpu.memory_space<vmem>>, vector<8x2x128xf32>
    tpu.vector_store %arg14[%c0_14, %c0_15, %c0_16], %14 {strides = array<i32>} : memref<8x2x128xf32, #tpu.memory_space<vmem>>, vector<8x2x128xf32>,
    %cst_17 = arith.constant 0.000000e+00 : f32
    %16 = vector.broadcast %cst_17 : f32 to vector<2x32xf32>
    %c0_i32 = arith.constant 0 : i32
    %17 = arith.index_cast %c0_i32 : i32 to index
    %c0_18 = arith.constant 0 : index
    %c0_19 = arith.constant 0 : index
    %18 = vector.load %arg13[%17, %c0_18, %c0_19] : memref<8x2x128xf32, #tpu.memory_space<vmem>>, vector<1x2x128xf32>
    %19 = vector.shape_cast %18 : vector<1x2x128xf32> to vector<2x128xf32>
    %c0_20 = arith.constant 0 : index
    %c0_21 = arith.constant 0 : index
    %20 = vector.load %arg2[%c0_20, %c0_21] : memref<32x128xf32, #tpu.memory_space<vmem>>, vector<32x128xf32>
    %cst_22 = arith.constant dense<0.000000e+00> : vector<2x128xf32>
    %21 = tpu.matmul %16, %20, %cst_22 {dimension_numbers = #tpu.dot_dimension_numbers<[1], [0], [0], [1], [0, 0, 1, 1], [], []>} : vector<2x32xf32>, vector<32x128xf32>, vector<2x128xf32> -> vector<2x128xf32>
    %22 = arith.addf %19, %21 : vector<2x128xf32>
    %23 = vector.extract_strided_slice %22 {offsets = [0, 0], sizes = [2, 32], strides = [1, 1]} : vector<2x128xf32> to vector<2x32xf32>
    %24 = arith.negf %23 : vector<2x32xf32>
    %25 = math.exp %24 : vector<2x32xf32>
    %cst_23 = arith.constant 1.000000e+00 : f32
    %26 = vector.broadcast %cst_23 : f32 to vector<2x32xf32>
    %27 = arith.addf %26, %25 : vector<2x32xf32>
    %28 = arith.divf %26, %27 : vector<2x32xf32>
    %29 = vector.extract_strided_slice %22 {offsets = [0, 32], sizes = [2, 32], strides = [1, 1]} : vector<2x128xf32> to vector<2x32xf32>
    %30 = arith.negf %29 : vector<2x32xf32>
    %31 = math.exp %30 : vector<2x32xf32>
    %cst_24 = arith.constant 1.000000e+00 : f32
    %32 = vector.broadcast %cst_24 : f32 to vector<2x32xf32>
    %33 = arith.addf %32, %31 : vector<2x32xf32>
    %34 = arith.divf %32, %33 : vector<2x32xf32>
    %35 = vector.extract_strided_slice %22 {offsets = [0, 64], sizes = [2, 32], strides = [1, 1]} : vector<2x128xf32> to vector<2x32xf32>
    %36 = math.tanh %35 : vector<2x32xf32>
    %37 = vector.extract_strided_slice %22 {offsets = [0, 96], sizes = [2, 32], strides = [1, 1]} : vector<2x128xf32> to vector<2x32xf32>
    %38 = arith.negf %37 : vector<2x32xf32>
    %39 = math.exp %38 : vector<2x32xf32>
    %cst_25 = arith.constant 1.000000e+00 : f32
    %40 = vector.broadcast %cst_25 : f32 to vector<2x32xf32>
    %41 = arith.addf %40, %39 : vector<2x32xf32>
    %42 = arith.divf %40, %41 : vector<2x32xf32>
    %43 = arith.mulf %34, %16 : vector<2x32xf32>
    %44 = arith.mulf %28, %36 : vector<2x32xf32>
    %45 = arith.addf %43, %44 : vector<2x32xf32>
    %46 = math.tanh %45 : vector<2x32xf32>
    %47 = arith.mulf %42, %46 : vector<2x32xf32>
    %c7_i32 = arith.constant 7 : i32
    %48 = arith.subi %c7_i32, %c0_i32 : i32
    %49 = arith.index_cast %48 : i32 to index
    %c0_26 = arith.constant 0 : index
    %c0_27 = arith.constant 0 : index
    %50 = vector.load %arg14[%49, %c0_26, %c0_27] : memref<8x2x128xf32, #tpu.memory_space<vmem>>, vector<1x2x128xf32>
    %51 = vector.shape_cast %50 : vector<1x2x128xf32> to vector<2x128xf32>
    %c0_28 = arith.constant 0 : index
    %c0_29 = arith.constant 0 : index
    %52 = vector.load %arg5[%c0_28, %c0_29] : memref<32x128xf32, #tpu.memory_space<vmem>>, vector<32x128xf32>
    %cst_30 = arith.constant dense<0.000000e+00> : vector<2x128xf32>
    %53 = tpu.matmul %16, %52, %cst_30 {dimension_numbers = #tpu.dot_dimension_numbers<[1], [0], [0], [1], [0, 0, 1, 1], [], []>} : vector<2x32xf32>, vector<32x128xf32>, vector<2x128xf32> -> vector<2x128xf32>
    %54 = arith.addf %51, %53 : vector<2x128xf32>
    %55 = vector.extract_strided_slice %54 {offsets = [0, 0], sizes = [2, 32], strides = [1, 1]} : vector<2x128xf32> to vector<2x32xf32>
    %56 = arith.negf %55 : vector<2x32xf32>
    %57 = math.exp %56 : vector<2x32xf32>
    %cst_31 = arith.constant 1.000000e+00 : f32
    %58 = vector.broadcast %cst_31 : f32 to vector<2x32xf32>
    %59 = arith.addf %58, %57 : vector<2x32xf32>
    %60 = arith.divf %58, %59 : vector<2x32xf32>
    %61 = vector.extract_strided_slice %54 {offsets = [0, 32], sizes = [2, 32], strides = [1, 1]} : vector<2x128xf32> to vector<2x32xf32>
    %62 = arith.negf %61 : vector<2x32xf32>
    %63 = math.exp %62 : vector<2x32xf32>
    %cst_32 = arith.constant 1.000000e+00 : f32
    %64 = vector.broadcast %cst_32 : f32 to vector<2x32xf32>
    %65 = arith.addf %64, %63 : vector<2x32xf32>
    %66 = arith.divf %64, %65 : vector<2x32xf32>
    %67 = vector.extract_strided_slice %54 {offsets = [0, 64], sizes = [2, 32], strides = [1, 1]} : vector<2x128xf32> to vector<2x32xf32>
    %68 = math.tanh %67 : vector<2x32xf32>
    %69 = vector.extract_strided_slice %54 {offsets = [0, 96], sizes = [2, 32], strides = [1, 1]} : vector<2x128xf32> to vector<2x32xf32>
    %70 = arith.negf %69 : vector<2x32xf32>
    %71 = math.exp %70 : vector<2x32xf32>
    %cst_33 = arith.constant 1.000000e+00 : f32
    %72 = vector.broadcast %cst_33 : f32 to vector<2x32xf32>
    %73 = arith.addf %72, %71 : vector<2x32xf32>
    %74 = arith.divf %72, %73 : vector<2x32xf32>
    %75 = arith.mulf %66, %16 : vector<2x32xf32>
    %76 = arith.mulf %60, %68 : vector<2x32xf32>
    %77 = arith.addf %75, %76 : vector<2x32xf32>
    %78 = math.tanh %77 : vector<2x32xf32>
    %79 = arith.mulf %74, %78 : vector<2x32xf32>
    %80 = arith.index_cast %c0_i32 : i32 to index
    %c0_34 = arith.constant 0 : index
    %c0_35 = arith.constant 0 : index
    %81 = vector.load %arg10[%80, %c0_34, %c0_35] : memref<8x2x32xf32, #tpu.memory_space<vmem>>, vector<1x2x32xf32>
    %82 = vector.shape_cast %81 : vector<1x2x32xf32> to vector<2x32xf32>
    %83 = vector.shape_cast %47 : vector<2x32xf32> to vector<1x2x32xf32>
    tpu.vector_store %arg10[%80, %c0_34, %c0_35], %83 {strides = array<i32>} : memref<8x2x32xf32, #tpu.memory_space<vmem>>, vector<1x2x32xf32>,
    %c7_i32_36 = arith.constant 7 : i32
    %84 = arith.subi %c7_i32_36, %c0_i32 : i32
    %85 = arith.index_cast %84 : i32 to index
    %c0_37 = arith.constant 0 : index
    %c0_38 = arith.constant 0 : index
    %86 = vector.load %arg11[%85, %c0_37, %c0_38] : memref<8x2x32xf32, #tpu.memory_space<vmem>>, vector<1x2x32xf32>
    %87 = vector.shape_cast %86 : vector<1x2x32xf32> to vector<2x32xf32>
    %88 = vector.shape_cast %79 : vector<2x32xf32> to vector<1x2x32xf32>
    tpu.vector_store %arg11[%85, %c0_37, %c0_38], %88 {strides = array<i32>} : memref<8x2x32xf32, #tpu.memory_space<vmem>>, vector<1x2x32xf32>,
    %c1_i32 = arith.constant 1 : i32
    %89 = arith.index_cast %c1_i32 : i32 to index
    %c0_39 = arith.constant 0 : index
    %c0_40 = arith.constant 0 : index
    %90 = vector.load %arg13[%89, %c0_39, %c0_40] : memref<8x2x128xf32, #tpu.memory_space<vmem>>, vector<1x2x128xf32>
    %91 = vector.shape_cast %90 : vector<1x2x128xf32> to vector<2x128xf32>
    %c0_41 = arith.constant 0 : index
    %c0_42 = arith.constant 0 : index
    %92 = vector.load %arg2[%c0_41, %c0_42] : memref<32x128xf32, #tpu.memory_space<vmem>>, vector<32x128xf32>
    %cst_43 = arith.constant dense<0.000000e+00> : vector<2x128xf32>
    %93 = tpu.matmul %47, %92, %cst_43 {dimension_numbers = #tpu.dot_dimension_numbers<[1], [0], [0], [1], [0, 0, 1, 1], [], []>} : vector<2x32xf32>, vector<32x128xf32>, vector<2x128xf32> -> vector<2x128xf32>
    %94 = arith.addf %91, %93 : vector<2x128xf32>
    %95 = vector.extract_strided_slice %94 {offsets = [0, 0], sizes = [2, 32], strides = [1, 1]} : vector<2x128xf32> to vector<2x32xf32>
    %96 = arith.negf %95 : vector<2x32xf32>
    %97 = math.exp %96 : vector<2x32xf32>
    %cst_44 = arith.constant 1.000000e+00 : f32
    %98 = vector.broadcast %cst_44 : f32 to vector<2x32xf32>
    %99 = arith.addf %98, %97 : vector<2x32xf32>
    %100 = arith.divf %98, %99 : vector<2x32xf32>
    %101 = vector.extract_strided_slice %94 {offsets = [0, 32], sizes = [2, 32], strides = [1, 1]} : vector<2x128xf32> to vector<2x32xf32>
    %102 = arith.negf %101 : vector<2x32xf32>
    %103 = math.exp %102 : vector<2x32xf32>
    %cst_45 = arith.constant 1.000000e+00 : f32
    %104 = vector.broadcast %cst_45 : f32 to vector<2x32xf32>
    %105 = arith.addf %104, %103 : vector<2x32xf32>
    %106 = arith.divf %104, %105 : vector<2x32xf32>
    %107 = vector.extract_strided_slice %94 {offsets = [0, 64], sizes = [2, 32], strides = [1, 1]} : vector<2x128xf32> to vector<2x32xf32>
    %108 = math.tanh %107 : vector<2x32xf32>
    %109 = vector.extract_strided_slice %94 {offsets = [0, 96], sizes = [2, 32], strides = [1, 1]} : vector<2x128xf32> to vector<2x32xf32>
    %110 = arith.negf %109 : vector<2x32xf32>
    %111 = math.exp %110 : vector<2x32xf32>
    %cst_46 = arith.constant 1.000000e+00 : f32
    %112 = vector.broadcast %cst_46 : f32 to vector<2x32xf32>
    %113 = arith.addf %112, %111 : vector<2x32xf32>
    %114 = arith.divf %112, %113 : vector<2x32xf32>
    %115 = arith.mulf %106, %45 : vector<2x32xf32>
    %116 = arith.mulf %100, %108 : vector<2x32xf32>
    %117 = arith.addf %115, %116 : vector<2x32xf32>
    %118 = math.tanh %117 : vector<2x32xf32>
    %119 = arith.mulf %114, %118 : vector<2x32xf32>
    %c7_i32_47 = arith.constant 7 : i32
    %120 = arith.subi %c7_i32_47, %c1_i32 : i32
    %121 = arith.index_cast %120 : i32 to index
    %c0_48 = arith.constant 0 : index
    %c0_49 = arith.constant 0 : index
    %122 = vector.load %arg14[%121, %c0_48, %c0_49] : memref<8x2x128xf32, #tpu.memory_space<vmem>>, vector<1x2x128xf32>
    %123 = vector.shape_cast %122 : vector<1x2x128xf32> to vector<2x128xf32>
    %c0_50 = arith.constant 0 : index
    %c0_51 = arith.constant 0 : index
    %124 = vector.load %arg5[%c0_50, %c0_51] : memref<32x128xf32, #tpu.memory_space<vmem>>, vector<32x128xf32>
    %cst_52 = arith.constant dense<0.000000e+00> : vector<2x128xf32>
    %125 = tpu.matmul %79, %124, %cst_52 {dimension_numbers = #tpu.dot_dimension_numbers<[1], [0], [0], [1], [0, 0, 1, 1], [], []>} : vector<2x32xf32>, vector<32x128xf32>, vector<2x128xf32> -> vector<2x128xf32>
    %126 = arith.addf %123, %125 : vector<2x128xf32>
    %127 = vector.extract_strided_slice %126 {offsets = [0, 0], sizes = [2, 32], strides = [1, 1]} : vector<2x128xf32> to vector<2x32xf32>
    %128 = arith.negf %127 : vector<2x32xf32>
    %129 = math.exp %128 : vector<2x32xf32>
    %cst_53 = arith.constant 1.000000e+00 : f32
    %130 = vector.broadcast %cst_53 : f32 to vector<2x32xf32>
    %131 = arith.addf %130, %129 : vector<2x32xf32>
    %132 = arith.divf %130, %131 : vector<2x32xf32>
    %133 = vector.extract_strided_slice %126 {offsets = [0, 32], sizes = [2, 32], strides = [1, 1]} : vector<2x128xf32> to vector<2x32xf32>
    %134 = arith.negf %133 : vector<2x32xf32>
    %135 = math.exp %134 : vector<2x32xf32>
    %cst_54 = arith.constant 1.000000e+00 : f32
    %136 = vector.broadcast %cst_54 : f32 to vector<2x32xf32>
    %137 = arith.addf %136, %135 : vector<2x32xf32>
    %138 = arith.divf %136, %137 : vector<2x32xf32>
    %139 = vector.extract_strided_slice %126 {offsets = [0, 64], sizes = [2, 32], strides = [1, 1]} : vector<2x128xf32> to vector<2x32xf32>
    %140 = math.tanh %139 : vector<2x32xf32>
    %141 = vector.extract_strided_slice %126 {offsets = [0, 96], sizes = [2, 32], strides = [1, 1]} : vector<2x128xf32> to vector<2x32xf32>
    %142 = arith.negf %141 : vector<2x32xf32>
    %143 = math.exp %142 : vector<2x32xf32>
    %cst_55 = arith.constant 1.000000e+00 : f32
    %144 = vector.broadcast %cst_55 : f32 to vector<2x32xf32>
    %145 = arith.addf %144, %143 : vector<2x32xf32>
    %146 = arith.divf %144, %145 : vector<2x32xf32>
    %147 = arith.mulf %138, %77 : vector<2x32xf32>
    %148 = arith.mulf %132, %140 : vector<2x32xf32>
    %149 = arith.addf %147, %148 : vector<2x32xf32>
    %150 = math.tanh %149 : vector<2x32xf32>
    %151 = arith.mulf %146, %150 : vector<2x32xf32>
    %152 = arith.index_cast %c1_i32 : i32 to index
    %c0_56 = arith.constant 0 : index
    %c0_57 = arith.constant 0 : index
    %153 = vector.load %arg10[%152, %c0_56, %c0_57] : memref<8x2x32xf32, #tpu.memory_space<vmem>>, vector<1x2x32xf32>
    %154 = vector.shape_cast %153 : vector<1x2x32xf32> to vector<2x32xf32>
    %155 = vector.shape_cast %119 : vector<2x32xf32> to vector<1x2x32xf32>
    tpu.vector_store %arg10[%152, %c0_56, %c0_57], %155 {strides = array<i32>} : memref<8x2x32xf32, #tpu.memory_space<vmem>>, vector<1x2x32xf32>,
    %c7_i32_58 = arith.constant 7 : i32
    %156 = arith.subi %c7_i32_58, %c1_i32 : i32
    %157 = arith.index_cast %156 : i32 to index
    %c0_59 = arith.constant 0 : index
    %c0_60 = arith.constant 0 : index
    %158 = vector.load %arg11[%157, %c0_59, %c0_60] : memref<8x2x32xf32, #tpu.memory_space<vmem>>, vector<1x2x32xf32>
    %159 = vector.shape_cast %158 : vector<1x2x32xf32> to vector<2x32xf32>
    %160 = vector.shape_cast %151 : vector<2x32xf32> to vector<1x2x32xf32>
    tpu.vector_store %arg11[%157, %c0_59, %c0_60], %160 {strides = array<i32>} : memref<8x2x32xf32, #tpu.memory_space<vmem>>, vector<1x2x32xf32>,
    %c2_i32 = arith.constant 2 : i32
    %161 = arith.index_cast %c2_i32 : i32 to index
    %c0_61 = arith.constant 0 : index
    %c0_62 = arith.constant 0 : index
    %162 = vector.load %arg13[%161, %c0_61, %c0_62] : memref<8x2x128xf32, #tpu.memory_space<vmem>>, vector<1x2x128xf32>
    %163 = vector.shape_cast %162 : vector<1x2x128xf32> to vector<2x128xf32>
    %c0_63 = arith.constant 0 : index
    %c0_64 = arith.constant 0 : index
    %164 = vector.load %arg2[%c0_63, %c0_64] : memref<32x128xf32, #tpu.memory_space<vmem>>, vector<32x128xf32>
    %cst_65 = arith.constant dense<0.000000e+00> : vector<2x128xf32>
    %165 = tpu.matmul %119, %164, %cst_65 {dimension_numbers = #tpu.dot_dimension_numbers<[1], [0], [0], [1], [0, 0, 1, 1], [], []>} : vector<2x32xf32>, vector<32x128xf32>, vector<2x128xf32> -> vector<2x128xf32>
    %166 = arith.addf %163, %165 : vector<2x128xf32>
    %167 = vector.extract_strided_slice %166 {offsets = [0, 0], sizes = [2, 32], strides = [1, 1]} : vector<2x128xf32> to vector<2x32xf32>
    %168 = arith.negf %167 : vector<2x32xf32>
    %169 = math.exp %168 : vector<2x32xf32>
    %cst_66 = arith.constant 1.000000e+00 : f32
    %170 = vector.broadcast %cst_66 : f32 to vector<2x32xf32>
    %171 = arith.addf %170, %169 : vector<2x32xf32>
    %172 = arith.divf %170, %171 : vector<2x32xf32>
    %173 = vector.extract_strided_slice %166 {offsets = [0, 32], sizes = [2, 32], strides = [1, 1]} : vector<2x128xf32> to vector<2x32xf32>
    %174 = arith.negf %173 : vector<2x32xf32>
    %175 = math.exp %174 : vector<2x32xf32>
    %cst_67 = arith.constant 1.000000e+00 : f32
    %176 = vector.broadcast %cst_67 : f32 to vector<2x32xf32>
    %177 = arith.addf %176, %175 : vector<2x32xf32>
    %178 = arith.divf %176, %177 : vector<2x32xf32>
    %179 = vector.extract_strided_slice %166 {offsets = [0, 64], sizes = [2, 32], strides = [1, 1]} : vector<2x128xf32> to vector<2x32xf32>
    %180 = math.tanh %179 : vector<2x32xf32>
    %181 = vector.extract_strided_slice %166 {offsets = [0, 96], sizes = [2, 32], strides = [1, 1]} : vector<2x128xf32> to vector<2x32xf32>
    %182 = arith.negf %181 : vector<2x32xf32>
    %183 = math.exp %182 : vector<2x32xf32>
    %cst_68 = arith.constant 1.000000e+00 : f32
    %184 = vector.broadcast %cst_68 : f32 to vector<2x32xf32>
    %185 = arith.addf %184, %183 : vector<2x32xf32>
    %186 = arith.divf %184, %185 : vector<2x32xf32>
    %187 = arith.mulf %178, %117 : vector<2x32xf32>
    %188 = arith.mulf %172, %180 : vector<2x32xf32>
    %189 = arith.addf %187, %188 : vector<2x32xf32>
    %190 = math.tanh %189 : vector<2x32xf32>
    %191 = arith.mulf %186, %190 : vector<2x32xf32>
    %c7_i32_69 = arith.constant 7 : i32
    %192 = arith.subi %c7_i32_69, %c2_i32 : i32
    %193 = arith.index_cast %192 : i32 to index
    %c0_70 = arith.constant 0 : index
    %c0_71 = arith.constant 0 : index
    %194 = vector.load %arg14[%193, %c0_70, %c0_71] : memref<8x2x128xf32, #tpu.memory_space<vmem>>, vector<1x2x128xf32>
    %195 = vector.shape_cast %194 : vector<1x2x128xf32> to vector<2x128xf32>
    %c0_72 = arith.constant 0 : index
    %c0_73 = arith.constant 0 : index
    %196 = vector.load %arg5[%c0_72, %c0_73] : memref<32x128xf32, #tpu.memory_space<vmem>>, vector<32x128xf32>
    %cst_74 = arith.constant dense<0.000000e+00> : vector<2x128xf32>
    %197 = tpu.matmul %151, %196, %cst_74 {dimension_numbers = #tpu.dot_dimension_numbers<[1], [0], [0], [1], [0, 0, 1, 1], [], []>} : vector<2x32xf32>, vector<32x128xf32>, vector<2x128xf32> -> vector<2x128xf32>
    %198 = arith.addf %195, %197 : vector<2x128xf32>
    %199 = vector.extract_strided_slice %198 {offsets = [0, 0], sizes = [2, 32], strides = [1, 1]} : vector<2x128xf32> to vector<2x32xf32>
    %200 = arith.negf %199 : vector<2x32xf32>
    %201 = math.exp %200 : vector<2x32xf32>
    %cst_75 = arith.constant 1.000000e+00 : f32
    %202 = vector.broadcast %cst_75 : f32 to vector<2x32xf32>
    %203 = arith.addf %202, %201 : vector<2x32xf32>
    %204 = arith.divf %202, %203 : vector<2x32xf32>
    %205 = vector.extract_strided_slice %198 {offsets = [0, 32], sizes = [2, 32], strides = [1, 1]} : vector<2x128xf32> to vector<2x32xf32>
    %206 = arith.negf %205 : vector<2x32xf32>
    %207 = math.exp %206 : vector<2x32xf32>
    %cst_76 = arith.constant 1.000000e+00 : f32
    %208 = vector.broadcast %cst_76 : f32 to vector<2x32xf32>
    %209 = arith.addf %208, %207 : vector<2x32xf32>
    %210 = arith.divf %208, %209 : vector<2x32xf32>
    %211 = vector.extract_strided_slice %198 {offsets = [0, 64], sizes = [2, 32], strides = [1, 1]} : vector<2x128xf32> to vector<2x32xf32>
    %212 = math.tanh %211 : vector<2x32xf32>
    %213 = vector.extract_strided_slice %198 {offsets = [0, 96], sizes = [2, 32], strides = [1, 1]} : vector<2x128xf32> to vector<2x32xf32>
    %214 = arith.negf %213 : vector<2x32xf32>
    %215 = math.exp %214 : vector<2x32xf32>
    %cst_77 = arith.constant 1.000000e+00 : f32
    %216 = vector.broadcast %cst_77 : f32 to vector<2x32xf32>
    %217 = arith.addf %216, %215 : vector<2x32xf32>
    %218 = arith.divf %216, %217 : vector<2x32xf32>
    %219 = arith.mulf %210, %149 : vector<2x32xf32>
    %220 = arith.mulf %204, %212 : vector<2x32xf32>
    %221 = arith.addf %219, %220 : vector<2x32xf32>
    %222 = math.tanh %221 : vector<2x32xf32>
    %223 = arith.mulf %218, %222 : vector<2x32xf32>
    %224 = arith.index_cast %c2_i32 : i32 to index
    %c0_78 = arith.constant 0 : index
    %c0_79 = arith.constant 0 : index
    %225 = vector.load %arg10[%224, %c0_78, %c0_79] : memref<8x2x32xf32, #tpu.memory_space<vmem>>, vector<1x2x32xf32>
    %226 = vector.shape_cast %225 : vector<1x2x32xf32> to vector<2x32xf32>
    %227 = vector.shape_cast %191 : vector<2x32xf32> to vector<1x2x32xf32>
    tpu.vector_store %arg10[%224, %c0_78, %c0_79], %227 {strides = array<i32>} : memref<8x2x32xf32, #tpu.memory_space<vmem>>, vector<1x2x32xf32>,
    %c7_i32_80 = arith.constant 7 : i32
    %228 = arith.subi %c7_i32_80, %c2_i32 : i32
    %229 = arith.index_cast %228 : i32 to index
    %c0_81 = arith.constant 0 : index
    %c0_82 = arith.constant 0 : index
    %230 = vector.load %arg11[%229, %c0_81, %c0_82] : memref<8x2x32xf32, #tpu.memory_space<vmem>>, vector<1x2x32xf32>
    %231 = vector.shape_cast %230 : vector<1x2x32xf32> to vector<2x32xf32>
    %232 = vector.shape_cast %223 : vector<2x32xf32> to vector<1x2x32xf32>
    tpu.vector_store %arg11[%229, %c0_81, %c0_82], %232 {strides = array<i32>} : memref<8x2x32xf32, #tpu.memory_space<vmem>>, vector<1x2x32xf32>,
    %c3_i32 = arith.constant 3 : i32
    %233 = arith.index_cast %c3_i32 : i32 to index
    %c0_83 = arith.constant 0 : index
    %c0_84 = arith.constant 0 : index
    %234 = vector.load %arg13[%233, %c0_83, %c0_84] : memref<8x2x128xf32, #tpu.memory_space<vmem>>, vector<1x2x128xf32>
    %235 = vector.shape_cast %234 : vector<1x2x128xf32> to vector<2x128xf32>
    %c0_85 = arith.constant 0 : index
    %c0_86 = arith.constant 0 : index
    %236 = vector.load %arg2[%c0_85, %c0_86] : memref<32x128xf32, #tpu.memory_space<vmem>>, vector<32x128xf32>
    %cst_87 = arith.constant dense<0.000000e+00> : vector<2x128xf32>
    %237 = tpu.matmul %191, %236, %cst_87 {dimension_numbers = #tpu.dot_dimension_numbers<[1], [0], [0], [1], [0, 0, 1, 1], [], []>} : vector<2x32xf32>, vector<32x128xf32>, vector<2x128xf32> -> vector<2x128xf32>
    %238 = arith.addf %235, %237 : vector<2x128xf32>
    %239 = vector.extract_strided_slice %238 {offsets = [0, 0], sizes = [2, 32], strides = [1, 1]} : vector<2x128xf32> to vector<2x32xf32>
    %240 = arith.negf %239 : vector<2x32xf32>
    %241 = math.exp %240 : vector<2x32xf32>
    %cst_88 = arith.constant 1.000000e+00 : f32
    %242 = vector.broadcast %cst_88 : f32 to vector<2x32xf32>
    %243 = arith.addf %242, %241 : vector<2x32xf32>
    %244 = arith.divf %242, %243 : vector<2x32xf32>
    %245 = vector.extract_strided_slice %238 {offsets = [0, 32], sizes = [2, 32], strides = [1, 1]} : vector<2x128xf32> to vector<2x32xf32>
    %246 = arith.negf %245 : vector<2x32xf32>
    %247 = math.exp %246 : vector<2x32xf32>
    %cst_89 = arith.constant 1.000000e+00 : f32
    %248 = vector.broadcast %cst_89 : f32 to vector<2x32xf32>
    %249 = arith.addf %248, %247 : vector<2x32xf32>
    %250 = arith.divf %248, %249 : vector<2x32xf32>
    %251 = vector.extract_strided_slice %238 {offsets = [0, 64], sizes = [2, 32], strides = [1, 1]} : vector<2x128xf32> to vector<2x32xf32>
    %252 = math.tanh %251 : vector<2x32xf32>
    %253 = vector.extract_strided_slice %238 {offsets = [0, 96], sizes = [2, 32], strides = [1, 1]} : vector<2x128xf32> to vector<2x32xf32>
    %254 = arith.negf %253 : vector<2x32xf32>
    %255 = math.exp %254 : vector<2x32xf32>
    %cst_90 = arith.constant 1.000000e+00 : f32
    %256 = vector.broadcast %cst_90 : f32 to vector<2x32xf32>
    %257 = arith.addf %256, %255 : vector<2x32xf32>
    %258 = arith.divf %256, %257 : vector<2x32xf32>
    %259 = arith.mulf %250, %189 : vector<2x32xf32>
    %260 = arith.mulf %244, %252 : vector<2x32xf32>
    %261 = arith.addf %259, %260 : vector<2x32xf32>
    %262 = math.tanh %261 : vector<2x32xf32>
    %263 = arith.mulf %258, %262 : vector<2x32xf32>
    %c7_i32_91 = arith.constant 7 : i32
    %264 = arith.subi %c7_i32_91, %c3_i32 : i32
    %265 = arith.index_cast %264 : i32 to index
    %c0_92 = arith.constant 0 : index
    %c0_93 = arith.constant 0 : index
    %266 = vector.load %arg14[%265, %c0_92, %c0_93] : memref<8x2x128xf32, #tpu.memory_space<vmem>>, vector<1x2x128xf32>
    %267 = vector.shape_cast %266 : vector<1x2x128xf32> to vector<2x128xf32>
    %c0_94 = arith.constant 0 : index
    %c0_95 = arith.constant 0 : index
    %268 = vector.load %arg5[%c0_94, %c0_95] : memref<32x128xf32, #tpu.memory_space<vmem>>, vector<32x128xf32>
    %cst_96 = arith.constant dense<0.000000e+00> : vector<2x128xf32>
    %269 = tpu.matmul %223, %268, %cst_96 {dimension_numbers = #tpu.dot_dimension_numbers<[1], [0], [0], [1], [0, 0, 1, 1], [], []>} : vector<2x32xf32>, vector<32x128xf32>, vector<2x128xf32> -> vector<2x128xf32>
    %270 = arith.addf %267, %269 : vector<2x128xf32>
    %271 = vector.extract_strided_slice %270 {offsets = [0, 0], sizes = [2, 32], strides = [1, 1]} : vector<2x128xf32> to vector<2x32xf32>
    %272 = arith.negf %271 : vector<2x32xf32>
    %273 = math.exp %272 : vector<2x32xf32>
    %cst_97 = arith.constant 1.000000e+00 : f32
    %274 = vector.broadcast %cst_97 : f32 to vector<2x32xf32>
    %275 = arith.addf %274, %273 : vector<2x32xf32>
    %276 = arith.divf %274, %275 : vector<2x32xf32>
    %277 = vector.extract_strided_slice %270 {offsets = [0, 32], sizes = [2, 32], strides = [1, 1]} : vector<2x128xf32> to vector<2x32xf32>
    %278 = arith.negf %277 : vector<2x32xf32>
    %279 = math.exp %278 : vector<2x32xf32>
    %cst_98 = arith.constant 1.000000e+00 : f32
    %280 = vector.broadcast %cst_98 : f32 to vector<2x32xf32>
    %281 = arith.addf %280, %279 : vector<2x32xf32>
    %282 = arith.divf %280, %281 : vector<2x32xf32>
    %283 = vector.extract_strided_slice %270 {offsets = [0, 64], sizes = [2, 32], strides = [1, 1]} : vector<2x128xf32> to vector<2x32xf32>
    %284 = math.tanh %283 : vector<2x32xf32>
    %285 = vector.extract_strided_slice %270 {offsets = [0, 96], sizes = [2, 32], strides = [1, 1]} : vector<2x128xf32> to vector<2x32xf32>
    %286 = arith.negf %285 : vector<2x32xf32>
    %287 = math.exp %286 : vector<2x32xf32>
    %cst_99 = arith.constant 1.000000e+00 : f32
    %288 = vector.broadcast %cst_99 : f32 to vector<2x32xf32>
    %289 = arith.addf %288, %287 : vector<2x32xf32>
    %290 = arith.divf %288, %289 : vector<2x32xf32>
    %291 = arith.mulf %282, %221 : vector<2x32xf32>
    %292 = arith.mulf %276, %284 : vector<2x32xf32>
    %293 = arith.addf %291, %292 : vector<2x32xf32>
    %294 = math.tanh %293 : vector<2x32xf32>
    %295 = arith.mulf %290, %294 : vector<2x32xf32>
    %296 = arith.index_cast %c3_i32 : i32 to index
    %c0_100 = arith.constant 0 : index
    %c0_101 = arith.constant 0 : index
    %297 = vector.load %arg10[%296, %c0_100, %c0_101] : memref<8x2x32xf32, #tpu.memory_space<vmem>>, vector<1x2x32xf32>
    %298 = vector.shape_cast %297 : vector<1x2x32xf32> to vector<2x32xf32>
    %299 = vector.shape_cast %263 : vector<2x32xf32> to vector<1x2x32xf32>
    tpu.vector_store %arg10[%296, %c0_100, %c0_101], %299 {strides = array<i32>} : memref<8x2x32xf32, #tpu.memory_space<vmem>>, vector<1x2x32xf32>,
    %c7_i32_102 = arith.constant 7 : i32
    %300 = arith.subi %c7_i32_102, %c3_i32 : i32
    %301 = arith.index_cast %300 : i32 to index
    %c0_103 = arith.constant 0 : index
    %c0_104 = arith.constant 0 : index
    %302 = vector.load %arg11[%301, %c0_103, %c0_104] : memref<8x2x32xf32, #tpu.memory_space<vmem>>, vector<1x2x32xf32>
    %303 = vector.shape_cast %302 : vector<1x2x32xf32> to vector<2x32xf32>
    %304 = vector.shape_cast %295 : vector<2x32xf32> to vector<1x2x32xf32>
    tpu.vector_store %arg11[%301, %c0_103, %c0_104], %304 {strides = array<i32>} : memref<8x2x32xf32, #tpu.memory_space<vmem>>, vector<1x2x32xf32>,
    %c4_i32 = arith.constant 4 : i32
    %305 = arith.index_cast %c4_i32 : i32 to index
    %c0_105 = arith.constant 0 : index
    %c0_106 = arith.constant 0 : index
    %306 = vector.load %arg13[%305, %c0_105, %c0_106] : memref<8x2x128xf32, #tpu.memory_space<vmem>>, vector<1x2x128xf32>
    %307 = vector.shape_cast %306 : vector<1x2x128xf32> to vector<2x128xf32>
    %c0_107 = arith.constant 0 : index
    %c0_108 = arith.constant 0 : index
    %308 = vector.load %arg2[%c0_107, %c0_108] : memref<32x128xf32, #tpu.memory_space<vmem>>, vector<32x128xf32>
    %cst_109 = arith.constant dense<0.000000e+00> : vector<2x128xf32>
    %309 = tpu.matmul %263, %308, %cst_109 {dimension_numbers = #tpu.dot_dimension_numbers<[1], [0], [0], [1], [0, 0, 1, 1], [], []>} : vector<2x32xf32>, vector<32x128xf32>, vector<2x128xf32> -> vector<2x128xf32>
    %310 = arith.addf %307, %309 : vector<2x128xf32>
    %311 = vector.extract_strided_slice %310 {offsets = [0, 0], sizes = [2, 32], strides = [1, 1]} : vector<2x128xf32> to vector<2x32xf32>
    %312 = arith.negf %311 : vector<2x32xf32>
    %313 = math.exp %312 : vector<2x32xf32>
    %cst_110 = arith.constant 1.000000e+00 : f32
    %314 = vector.broadcast %cst_110 : f32 to vector<2x32xf32>
    %315 = arith.addf %314, %313 : vector<2x32xf32>
    %316 = arith.divf %314, %315 : vector<2x32xf32>
    %317 = vector.extract_strided_slice %310 {offsets = [0, 32], sizes = [2, 32], strides = [1, 1]} : vector<2x128xf32> to vector<2x32xf32>
    %318 = arith.negf %317 : vector<2x32xf32>
    %319 = math.exp %318 : vector<2x32xf32>
    %cst_111 = arith.constant 1.000000e+00 : f32
    %320 = vector.broadcast %cst_111 : f32 to vector<2x32xf32>
    %321 = arith.addf %320, %319 : vector<2x32xf32>
    %322 = arith.divf %320, %321 : vector<2x32xf32>
    %323 = vector.extract_strided_slice %310 {offsets = [0, 64], sizes = [2, 32], strides = [1, 1]} : vector<2x128xf32> to vector<2x32xf32>
    %324 = math.tanh %323 : vector<2x32xf32>
    %325 = vector.extract_strided_slice %310 {offsets = [0, 96], sizes = [2, 32], strides = [1, 1]} : vector<2x128xf32> to vector<2x32xf32>
    %326 = arith.negf %325 : vector<2x32xf32>
    %327 = math.exp %326 : vector<2x32xf32>
    %cst_112 = arith.constant 1.000000e+00 : f32
    %328 = vector.broadcast %cst_112 : f32 to vector<2x32xf32>
    %329 = arith.addf %328, %327 : vector<2x32xf32>
    %330 = arith.divf %328, %329 : vector<2x32xf32>
    %331 = arith.mulf %322, %261 : vector<2x32xf32>
    %332 = arith.mulf %316, %324 : vector<2x32xf32>
    %333 = arith.addf %331, %332 : vector<2x32xf32>
    %334 = math.tanh %333 : vector<2x32xf32>
    %335 = arith.mulf %330, %334 : vector<2x32xf32>
    %c7_i32_113 = arith.constant 7 : i32
    %336 = arith.subi %c7_i32_113, %c4_i32 : i32
    %337 = arith.index_cast %336 : i32 to index
    %c0_114 = arith.constant 0 : index
    %c0_115 = arith.constant 0 : index
    %338 = vector.load %arg14[%337, %c0_114, %c0_115] : memref<8x2x128xf32, #tpu.memory_space<vmem>>, vector<1x2x128xf32>
    %339 = vector.shape_cast %338 : vector<1x2x128xf32> to vector<2x128xf32>
    %c0_116 = arith.constant 0 : index
    %c0_117 = arith.constant 0 : index
    %340 = vector.load %arg5[%c0_116, %c0_117] : memref<32x128xf32, #tpu.memory_space<vmem>>, vector<32x128xf32>
    %cst_118 = arith.constant dense<0.000000e+00> : vector<2x128xf32>
    %341 = tpu.matmul %295, %340, %cst_118 {dimension_numbers = #tpu.dot_dimension_numbers<[1], [0], [0], [1], [0, 0, 1, 1], [], []>} : vector<2x32xf32>, vector<32x128xf32>, vector<2x128xf32> -> vector<2x128xf32>
    %342 = arith.addf %339, %341 : vector<2x128xf32>
    %343 = vector.extract_strided_slice %342 {offsets = [0, 0], sizes = [2, 32], strides = [1, 1]} : vector<2x128xf32> to vector<2x32xf32>
    %344 = arith.negf %343 : vector<2x32xf32>
    %345 = math.exp %344 : vector<2x32xf32>
    %cst_119 = arith.constant 1.000000e+00 : f32
    %346 = vector.broadcast %cst_119 : f32 to vector<2x32xf32>
    %347 = arith.addf %346, %345 : vector<2x32xf32>
    %348 = arith.divf %346, %347 : vector<2x32xf32>
    %349 = vector.extract_strided_slice %342 {offsets = [0, 32], sizes = [2, 32], strides = [1, 1]} : vector<2x128xf32> to vector<2x32xf32>
    %350 = arith.negf %349 : vector<2x32xf32>
    %351 = math.exp %350 : vector<2x32xf32>
    %cst_120 = arith.constant 1.000000e+00 : f32
    %352 = vector.broadcast %cst_120 : f32 to vector<2x32xf32>
    %353 = arith.addf %352, %351 : vector<2x32xf32>
    %354 = arith.divf %352, %353 : vector<2x32xf32>
    %355 = vector.extract_strided_slice %342 {offsets = [0, 64], sizes = [2, 32], strides = [1, 1]} : vector<2x128xf32> to vector<2x32xf32>
    %356 = math.tanh %355 : vector<2x32xf32>
    %357 = vector.extract_strided_slice %342 {offsets = [0, 96], sizes = [2, 32], strides = [1, 1]} : vector<2x128xf32> to vector<2x32xf32>
    %358 = arith.negf %357 : vector<2x32xf32>
    %359 = math.exp %358 : vector<2x32xf32>
    %cst_121 = arith.constant 1.000000e+00 : f32
    %360 = vector.broadcast %cst_121 : f32 to vector<2x32xf32>
    %361 = arith.addf %360, %359 : vector<2x32xf32>
    %362 = arith.divf %360, %361 : vector<2x32xf32>
    %363 = arith.mulf %354, %293 : vector<2x32xf32>
    %364 = arith.mulf %348, %356 : vector<2x32xf32>
    %365 = arith.addf %363, %364 : vector<2x32xf32>
    %366 = math.tanh %365 : vector<2x32xf32>
    %367 = arith.mulf %362, %366 : vector<2x32xf32>
    %368 = arith.index_cast %c4_i32 : i32 to index
    %c0_122 = arith.constant 0 : index
    %c0_123 = arith.constant 0 : index
    %369 = vector.load %arg10[%368, %c0_122, %c0_123] : memref<8x2x32xf32, #tpu.memory_space<vmem>>, vector<1x2x32xf32>
    %370 = vector.shape_cast %369 : vector<1x2x32xf32> to vector<2x32xf32>
    %371 = vector.shape_cast %335 : vector<2x32xf32> to vector<1x2x32xf32>
    tpu.vector_store %arg10[%368, %c0_122, %c0_123], %371 {strides = array<i32>} : memref<8x2x32xf32, #tpu.memory_space<vmem>>, vector<1x2x32xf32>,
    %c7_i32_124 = arith.constant 7 : i32
    %372 = arith.subi %c7_i32_124, %c4_i32 : i32
    %373 = arith.index_cast %372 : i32 to index
    %c0_125 = arith.constant 0 : index
    %c0_126 = arith.constant 0 : index
    %374 = vector.load %arg11[%373, %c0_125, %c0_126] : memref<8x2x32xf32, #tpu.memory_space<vmem>>, vector<1x2x32xf32>
    %375 = vector.shape_cast %374 : vector<1x2x32xf32> to vector<2x32xf32>
    %376 = vector.shape_cast %367 : vector<2x32xf32> to vector<1x2x32xf32>
    tpu.vector_store %arg11[%373, %c0_125, %c0_126], %376 {strides = array<i32>} : memref<8x2x32xf32, #tpu.memory_space<vmem>>, vector<1x2x32xf32>,
    %c5_i32 = arith.constant 5 : i32
    %377 = arith.index_cast %c5_i32 : i32 to index
    %c0_127 = arith.constant 0 : index
    %c0_128 = arith.constant 0 : index
    %378 = vector.load %arg13[%377, %c0_127, %c0_128] : memref<8x2x128xf32, #tpu.memory_space<vmem>>, vector<1x2x128xf32>
    %379 = vector.shape_cast %378 : vector<1x2x128xf32> to vector<2x128xf32>
    %c0_129 = arith.constant 0 : index
    %c0_130 = arith.constant 0 : index
    %380 = vector.load %arg2[%c0_129, %c0_130] : memref<32x128xf32, #tpu.memory_space<vmem>>, vector<32x128xf32>
    %cst_131 = arith.constant dense<0.000000e+00> : vector<2x128xf32>
    %381 = tpu.matmul %335, %380, %cst_131 {dimension_numbers = #tpu.dot_dimension_numbers<[1], [0], [0], [1], [0, 0, 1, 1], [], []>} : vector<2x32xf32>, vector<32x128xf32>, vector<2x128xf32> -> vector<2x128xf32>
    %382 = arith.addf %379, %381 : vector<2x128xf32>
    %383 = vector.extract_strided_slice %382 {offsets = [0, 0], sizes = [2, 32], strides = [1, 1]} : vector<2x128xf32> to vector<2x32xf32>
    %384 = arith.negf %383 : vector<2x32xf32>
    %385 = math.exp %384 : vector<2x32xf32>
    %cst_132 = arith.constant 1.000000e+00 : f32
    %386 = vector.broadcast %cst_132 : f32 to vector<2x32xf32>
    %387 = arith.addf %386, %385 : vector<2x32xf32>
    %388 = arith.divf %386, %387 : vector<2x32xf32>
    %389 = vector.extract_strided_slice %382 {offsets = [0, 32], sizes = [2, 32], strides = [1, 1]} : vector<2x128xf32> to vector<2x32xf32>
    %390 = arith.negf %389 : vector<2x32xf32>
    %391 = math.exp %390 : vector<2x32xf32>
    %cst_133 = arith.constant 1.000000e+00 : f32
    %392 = vector.broadcast %cst_133 : f32 to vector<2x32xf32>
    %393 = arith.addf %392, %391 : vector<2x32xf32>
    %394 = arith.divf %392, %393 : vector<2x32xf32>
    %395 = vector.extract_strided_slice %382 {offsets = [0, 64], sizes = [2, 32], strides = [1, 1]} : vector<2x128xf32> to vector<2x32xf32>
    %396 = math.tanh %395 : vector<2x32xf32>
    %397 = vector.extract_strided_slice %382 {offsets = [0, 96], sizes = [2, 32], strides = [1, 1]} : vector<2x128xf32> to vector<2x32xf32>
    %398 = arith.negf %397 : vector<2x32xf32>
    %399 = math.exp %398 : vector<2x32xf32>
    %cst_134 = arith.constant 1.000000e+00 : f32
    %400 = vector.broadcast %cst_134 : f32 to vector<2x32xf32>
    %401 = arith.addf %400, %399 : vector<2x32xf32>
    %402 = arith.divf %400, %401 : vector<2x32xf32>
    %403 = arith.mulf %394, %333 : vector<2x32xf32>
    %404 = arith.mulf %388, %396 : vector<2x32xf32>
    %405 = arith.addf %403, %404 : vector<2x32xf32>
    %406 = math.tanh %405 : vector<2x32xf32>
    %407 = arith.mulf %402, %406 : vector<2x32xf32>
    %c7_i32_135 = arith.constant 7 : i32
    %408 = arith.subi %c7_i32_135, %c5_i32 : i32
    %409 = arith.index_cast %408 : i32 to index
    %c0_136 = arith.constant 0 : index
    %c0_137 = arith.constant 0 : index
    %410 = vector.load %arg14[%409, %c0_136, %c0_137] : memref<8x2x128xf32, #tpu.memory_space<vmem>>, vector<1x2x128xf32>
    %411 = vector.shape_cast %410 : vector<1x2x128xf32> to vector<2x128xf32>
    %c0_138 = arith.constant 0 : index
    %c0_139 = arith.constant 0 : index
    %412 = vector.load %arg5[%c0_138, %c0_139] : memref<32x128xf32, #tpu.memory_space<vmem>>, vector<32x128xf32>
    %cst_140 = arith.constant dense<0.000000e+00> : vector<2x128xf32>
    %413 = tpu.matmul %367, %412, %cst_140 {dimension_numbers = #tpu.dot_dimension_numbers<[1], [0], [0], [1], [0, 0, 1, 1], [], []>} : vector<2x32xf32>, vector<32x128xf32>, vector<2x128xf32> -> vector<2x128xf32>
    %414 = arith.addf %411, %413 : vector<2x128xf32>
    %415 = vector.extract_strided_slice %414 {offsets = [0, 0], sizes = [2, 32], strides = [1, 1]} : vector<2x128xf32> to vector<2x32xf32>
    %416 = arith.negf %415 : vector<2x32xf32>
    %417 = math.exp %416 : vector<2x32xf32>
    %cst_141 = arith.constant 1.000000e+00 : f32
    %418 = vector.broadcast %cst_141 : f32 to vector<2x32xf32>
    %419 = arith.addf %418, %417 : vector<2x32xf32>
    %420 = arith.divf %418, %419 : vector<2x32xf32>
    %421 = vector.extract_strided_slice %414 {offsets = [0, 32], sizes = [2, 32], strides = [1, 1]} : vector<2x128xf32> to vector<2x32xf32>
    %422 = arith.negf %421 : vector<2x32xf32>
    %423 = math.exp %422 : vector<2x32xf32>
    %cst_142 = arith.constant 1.000000e+00 : f32
    %424 = vector.broadcast %cst_142 : f32 to vector<2x32xf32>
    %425 = arith.addf %424, %423 : vector<2x32xf32>
    %426 = arith.divf %424, %425 : vector<2x32xf32>
    %427 = vector.extract_strided_slice %414 {offsets = [0, 64], sizes = [2, 32], strides = [1, 1]} : vector<2x128xf32> to vector<2x32xf32>
    %428 = math.tanh %427 : vector<2x32xf32>
    %429 = vector.extract_strided_slice %414 {offsets = [0, 96], sizes = [2, 32], strides = [1, 1]} : vector<2x128xf32> to vector<2x32xf32>
    %430 = arith.negf %429 : vector<2x32xf32>
    %431 = math.exp %430 : vector<2x32xf32>
    %cst_143 = arith.constant 1.000000e+00 : f32
    %432 = vector.broadcast %cst_143 : f32 to vector<2x32xf32>
    %433 = arith.addf %432, %431 : vector<2x32xf32>
    %434 = arith.divf %432, %433 : vector<2x32xf32>
    %435 = arith.mulf %426, %365 : vector<2x32xf32>
    %436 = arith.mulf %420, %428 : vector<2x32xf32>
    %437 = arith.addf %435, %436 : vector<2x32xf32>
    %438 = math.tanh %437 : vector<2x32xf32>
    %439 = arith.mulf %434, %438 : vector<2x32xf32>
    %440 = arith.index_cast %c5_i32 : i32 to index
    %c0_144 = arith.constant 0 : index
    %c0_145 = arith.constant 0 : index
    %441 = vector.load %arg10[%440, %c0_144, %c0_145] : memref<8x2x32xf32, #tpu.memory_space<vmem>>, vector<1x2x32xf32>
    %442 = vector.shape_cast %441 : vector<1x2x32xf32> to vector<2x32xf32>
    %443 = vector.shape_cast %407 : vector<2x32xf32> to vector<1x2x32xf32>
    tpu.vector_store %arg10[%440, %c0_144, %c0_145], %443 {strides = array<i32>} : memref<8x2x32xf32, #tpu.memory_space<vmem>>, vector<1x2x32xf32>,
    %c7_i32_146 = arith.constant 7 : i32
    %444 = arith.subi %c7_i32_146, %c5_i32 : i32
    %445 = arith.index_cast %444 : i32 to index
    %c0_147 = arith.constant 0 : index
    %c0_148 = arith.constant 0 : index
    %446 = vector.load %arg11[%445, %c0_147, %c0_148] : memref<8x2x32xf32, #tpu.memory_space<vmem>>, vector<1x2x32xf32>
    %447 = vector.shape_cast %446 : vector<1x2x32xf32> to vector<2x32xf32>
    %448 = vector.shape_cast %439 : vector<2x32xf32> to vector<1x2x32xf32>
    tpu.vector_store %arg11[%445, %c0_147, %c0_148], %448 {strides = array<i32>} : memref<8x2x32xf32, #tpu.memory_space<vmem>>, vector<1x2x32xf32>,
    %c6_i32 = arith.constant 6 : i32
    %449 = arith.index_cast %c6_i32 : i32 to index
    %c0_149 = arith.constant 0 : index
    %c0_150 = arith.constant 0 : index
    %450 = vector.load %arg13[%449, %c0_149, %c0_150] : memref<8x2x128xf32, #tpu.memory_space<vmem>>, vector<1x2x128xf32>
    %451 = vector.shape_cast %450 : vector<1x2x128xf32> to vector<2x128xf32>
    %c0_151 = arith.constant 0 : index
    %c0_152 = arith.constant 0 : index
    %452 = vector.load %arg2[%c0_151, %c0_152] : memref<32x128xf32, #tpu.memory_space<vmem>>, vector<32x128xf32>
    %cst_153 = arith.constant dense<0.000000e+00> : vector<2x128xf32>
    %453 = tpu.matmul %407, %452, %cst_153 {dimension_numbers = #tpu.dot_dimension_numbers<[1], [0], [0], [1], [0, 0, 1, 1], [], []>} : vector<2x32xf32>, vector<32x128xf32>, vector<2x128xf32> -> vector<2x128xf32>
    %454 = arith.addf %451, %453 : vector<2x128xf32>
    %455 = vector.extract_strided_slice %454 {offsets = [0, 0], sizes = [2, 32], strides = [1, 1]} : vector<2x128xf32> to vector<2x32xf32>
    %456 = arith.negf %455 : vector<2x32xf32>
    %457 = math.exp %456 : vector<2x32xf32>
    %cst_154 = arith.constant 1.000000e+00 : f32
    %458 = vector.broadcast %cst_154 : f32 to vector<2x32xf32>
    %459 = arith.addf %458, %457 : vector<2x32xf32>
    %460 = arith.divf %458, %459 : vector<2x32xf32>
    %461 = vector.extract_strided_slice %454 {offsets = [0, 32], sizes = [2, 32], strides = [1, 1]} : vector<2x128xf32> to vector<2x32xf32>
    %462 = arith.negf %461 : vector<2x32xf32>
    %463 = math.exp %462 : vector<2x32xf32>
    %cst_155 = arith.constant 1.000000e+00 : f32
    %464 = vector.broadcast %cst_155 : f32 to vector<2x32xf32>
    %465 = arith.addf %464, %463 : vector<2x32xf32>
    %466 = arith.divf %464, %465 : vector<2x32xf32>
    %467 = vector.extract_strided_slice %454 {offsets = [0, 64], sizes = [2, 32], strides = [1, 1]} : vector<2x128xf32> to vector<2x32xf32>
    %468 = math.tanh %467 : vector<2x32xf32>
    %469 = vector.extract_strided_slice %454 {offsets = [0, 96], sizes = [2, 32], strides = [1, 1]} : vector<2x128xf32> to vector<2x32xf32>
    %470 = arith.negf %469 : vector<2x32xf32>
    %471 = math.exp %470 : vector<2x32xf32>
    %cst_156 = arith.constant 1.000000e+00 : f32
    %472 = vector.broadcast %cst_156 : f32 to vector<2x32xf32>
    %473 = arith.addf %472, %471 : vector<2x32xf32>
    %474 = arith.divf %472, %473 : vector<2x32xf32>
    %475 = arith.mulf %466, %405 : vector<2x32xf32>
    %476 = arith.mulf %460, %468 : vector<2x32xf32>
    %477 = arith.addf %475, %476 : vector<2x32xf32>
    %478 = math.tanh %477 : vector<2x32xf32>
    %479 = arith.mulf %474, %478 : vector<2x32xf32>
    %c7_i32_157 = arith.constant 7 : i32
    %480 = arith.subi %c7_i32_157, %c6_i32 : i32
    %481 = arith.index_cast %480 : i32 to index
    %c0_158 = arith.constant 0 : index
    %c0_159 = arith.constant 0 : index
    %482 = vector.load %arg14[%481, %c0_158, %c0_159] : memref<8x2x128xf32, #tpu.memory_space<vmem>>, vector<1x2x128xf32>
    %483 = vector.shape_cast %482 : vector<1x2x128xf32> to vector<2x128xf32>
    %c0_160 = arith.constant 0 : index
    %c0_161 = arith.constant 0 : index
    %484 = vector.load %arg5[%c0_160, %c0_161] : memref<32x128xf32, #tpu.memory_space<vmem>>, vector<32x128xf32>
    %cst_162 = arith.constant dense<0.000000e+00> : vector<2x128xf32>
    %485 = tpu.matmul %439, %484, %cst_162 {dimension_numbers = #tpu.dot_dimension_numbers<[1], [0], [0], [1], [0, 0, 1, 1], [], []>} : vector<2x32xf32>, vector<32x128xf32>, vector<2x128xf32> -> vector<2x128xf32>
    %486 = arith.addf %483, %485 : vector<2x128xf32>
    %487 = vector.extract_strided_slice %486 {offsets = [0, 0], sizes = [2, 32], strides = [1, 1]} : vector<2x128xf32> to vector<2x32xf32>
    %488 = arith.negf %487 : vector<2x32xf32>
    %489 = math.exp %488 : vector<2x32xf32>
    %cst_163 = arith.constant 1.000000e+00 : f32
    %490 = vector.broadcast %cst_163 : f32 to vector<2x32xf32>
    %491 = arith.addf %490, %489 : vector<2x32xf32>
    %492 = arith.divf %490, %491 : vector<2x32xf32>
    %493 = vector.extract_strided_slice %486 {offsets = [0, 32], sizes = [2, 32], strides = [1, 1]} : vector<2x128xf32> to vector<2x32xf32>
    %494 = arith.negf %493 : vector<2x32xf32>
    %495 = math.exp %494 : vector<2x32xf32>
    %cst_164 = arith.constant 1.000000e+00 : f32
    %496 = vector.broadcast %cst_164 : f32 to vector<2x32xf32>
    %497 = arith.addf %496, %495 : vector<2x32xf32>
    %498 = arith.divf %496, %497 : vector<2x32xf32>
    %499 = vector.extract_strided_slice %486 {offsets = [0, 64], sizes = [2, 32], strides = [1, 1]} : vector<2x128xf32> to vector<2x32xf32>
    %500 = math.tanh %499 : vector<2x32xf32>
    %501 = vector.extract_strided_slice %486 {offsets = [0, 96], sizes = [2, 32], strides = [1, 1]} : vector<2x128xf32> to vector<2x32xf32>
    %502 = arith.negf %501 : vector<2x32xf32>
    %503 = math.exp %502 : vector<2x32xf32>
    %cst_165 = arith.constant 1.000000e+00 : f32
    %504 = vector.broadcast %cst_165 : f32 to vector<2x32xf32>
    %505 = arith.addf %504, %503 : vector<2x32xf32>
    %506 = arith.divf %504, %505 : vector<2x32xf32>
    %507 = arith.mulf %498, %437 : vector<2x32xf32>
    %508 = arith.mulf %492, %500 : vector<2x32xf32>
    %509 = arith.addf %507, %508 : vector<2x32xf32>
    %510 = math.tanh %509 : vector<2x32xf32>
    %511 = arith.mulf %506, %510 : vector<2x32xf32>
    %512 = arith.index_cast %c6_i32 : i32 to index
    %c0_166 = arith.constant 0 : index
    %c0_167 = arith.constant 0 : index
    %513 = vector.load %arg10[%512, %c0_166, %c0_167] : memref<8x2x32xf32, #tpu.memory_space<vmem>>, vector<1x2x32xf32>
    %514 = vector.shape_cast %513 : vector<1x2x32xf32> to vector<2x32xf32>
    %515 = vector.shape_cast %479 : vector<2x32xf32> to vector<1x2x32xf32>
    tpu.vector_store %arg10[%512, %c0_166, %c0_167], %515 {strides = array<i32>} : memref<8x2x32xf32, #tpu.memory_space<vmem>>, vector<1x2x32xf32>,
    %c7_i32_168 = arith.constant 7 : i32
    %516 = arith.subi %c7_i32_168, %c6_i32 : i32
    %517 = arith.index_cast %516 : i32 to index
    %c0_169 = arith.constant 0 : index
    %c0_170 = arith.constant 0 : index
    %518 = vector.load %arg11[%517, %c0_169, %c0_170] : memref<8x2x32xf32, #tpu.memory_space<vmem>>, vector<1x2x32xf32>
    %519 = vector.shape_cast %518 : vector<1x2x32xf32> to vector<2x32xf32>
    %520 = vector.shape_cast %511 : vector<2x32xf32> to vector<1x2x32xf32>
    tpu.vector_store %arg11[%517, %c0_169, %c0_170], %520 {strides = array<i32>} : memref<8x2x32xf32, #tpu.memory_space<vmem>>, vector<1x2x32xf32>,
    %c7_i32_171 = arith.constant 7 : i32
    %521 = arith.index_cast %c7_i32_171 : i32 to index
    %c0_172 = arith.constant 0 : index
    %c0_173 = arith.constant 0 : index
    %522 = vector.load %arg13[%521, %c0_172, %c0_173] : memref<8x2x128xf32, #tpu.memory_space<vmem>>, vector<1x2x128xf32>
    %523 = vector.shape_cast %522 : vector<1x2x128xf32> to vector<2x128xf32>
    %c0_174 = arith.constant 0 : index
    %c0_175 = arith.constant 0 : index
    %524 = vector.load %arg2[%c0_174, %c0_175] : memref<32x128xf32, #tpu.memory_space<vmem>>, vector<32x128xf32>
    %cst_176 = arith.constant dense<0.000000e+00> : vector<2x128xf32>
    %525 = tpu.matmul %479, %524, %cst_176 {dimension_numbers = #tpu.dot_dimension_numbers<[1], [0], [0], [1], [0, 0, 1, 1], [], []>} : vector<2x32xf32>, vector<32x128xf32>, vector<2x128xf32> -> vector<2x128xf32>
    %526 = arith.addf %523, %525 : vector<2x128xf32>
    %527 = vector.extract_strided_slice %526 {offsets = [0, 0], sizes = [2, 32], strides = [1, 1]} : vector<2x128xf32> to vector<2x32xf32>
    %528 = arith.negf %527 : vector<2x32xf32>
    %529 = math.exp %528 : vector<2x32xf32>
    %cst_177 = arith.constant 1.000000e+00 : f32
    %530 = vector.broadcast %cst_177 : f32 to vector<2x32xf32>
    %531 = arith.addf %530, %529 : vector<2x32xf32>
    %532 = arith.divf %530, %531 : vector<2x32xf32>
    %533 = vector.extract_strided_slice %526 {offsets = [0, 32], sizes = [2, 32], strides = [1, 1]} : vector<2x128xf32> to vector<2x32xf32>
    %534 = arith.negf %533 : vector<2x32xf32>
    %535 = math.exp %534 : vector<2x32xf32>
    %cst_178 = arith.constant 1.000000e+00 : f32
    %536 = vector.broadcast %cst_178 : f32 to vector<2x32xf32>
    %537 = arith.addf %536, %535 : vector<2x32xf32>
    %538 = arith.divf %536, %537 : vector<2x32xf32>
    %539 = vector.extract_strided_slice %526 {offsets = [0, 64], sizes = [2, 32], strides = [1, 1]} : vector<2x128xf32> to vector<2x32xf32>
    %540 = math.tanh %539 : vector<2x32xf32>
    %541 = vector.extract_strided_slice %526 {offsets = [0, 96], sizes = [2, 32], strides = [1, 1]} : vector<2x128xf32> to vector<2x32xf32>
    %542 = arith.negf %541 : vector<2x32xf32>
    %543 = math.exp %542 : vector<2x32xf32>
    %cst_179 = arith.constant 1.000000e+00 : f32
    %544 = vector.broadcast %cst_179 : f32 to vector<2x32xf32>
    %545 = arith.addf %544, %543 : vector<2x32xf32>
    %546 = arith.divf %544, %545 : vector<2x32xf32>
    %547 = arith.mulf %538, %477 : vector<2x32xf32>
    %548 = arith.mulf %532, %540 : vector<2x32xf32>
    %549 = arith.addf %547, %548 : vector<2x32xf32>
    %550 = math.tanh %549 : vector<2x32xf32>
    %551 = arith.mulf %546, %550 : vector<2x32xf32>
    %c7_i32_180 = arith.constant 7 : i32
    %552 = arith.subi %c7_i32_180, %c7_i32_171 : i32
    %553 = arith.index_cast %552 : i32 to index
    %c0_181 = arith.constant 0 : index
    %c0_182 = arith.constant 0 : index
    %554 = vector.load %arg14[%553, %c0_181, %c0_182] : memref<8x2x128xf32, #tpu.memory_space<vmem>>, vector<1x2x128xf32>
    %555 = vector.shape_cast %554 : vector<1x2x128xf32> to vector<2x128xf32>
    %c0_183 = arith.constant 0 : index
    %c0_184 = arith.constant 0 : index
    %556 = vector.load %arg5[%c0_183, %c0_184] : memref<32x128xf32, #tpu.memory_space<vmem>>, vector<32x128xf32>
    %cst_185 = arith.constant dense<0.000000e+00> : vector<2x128xf32>
    %557 = tpu.matmul %511, %556, %cst_185 {dimension_numbers = #tpu.dot_dimension_numbers<[1], [0], [0], [1], [0, 0, 1, 1], [], []>} : vector<2x32xf32>, vector<32x128xf32>, vector<2x128xf32> -> vector<2x128xf32>
    %558 = arith.addf %555, %557 : vector<2x128xf32>
    %559 = vector.extract_strided_slice %558 {offsets = [0, 0], sizes = [2, 32], strides = [1, 1]} : vector<2x128xf32> to vector<2x32xf32>
    %560 = arith.negf %559 : vector<2x32xf32>
    %561 = math.exp %560 : vector<2x32xf32>
    %cst_186 = arith.constant 1.000000e+00 : f32
    %562 = vector.broadcast %cst_186 : f32 to vector<2x32xf32>
    %563 = arith.addf %562, %561 : vector<2x32xf32>
    %564 = arith.divf %562, %563 : vector<2x32xf32>
    %565 = vector.extract_strided_slice %558 {offsets = [0, 32], sizes = [2, 32], strides = [1, 1]} : vector<2x128xf32> to vector<2x32xf32>
    %566 = arith.negf %565 : vector<2x32xf32>
    %567 = math.exp %566 : vector<2x32xf32>
    %cst_187 = arith.constant 1.000000e+00 : f32
    %568 = vector.broadcast %cst_187 : f32 to vector<2x32xf32>
    %569 = arith.addf %568, %567 : vector<2x32xf32>
    %570 = arith.divf %568, %569 : vector<2x32xf32>
    %571 = vector.extract_strided_slice %558 {offsets = [0, 64], sizes = [2, 32], strides = [1, 1]} : vector<2x128xf32> to vector<2x32xf32>
    %572 = math.tanh %571 : vector<2x32xf32>
    %573 = vector.extract_strided_slice %558 {offsets = [0, 96], sizes = [2, 32], strides = [1, 1]} : vector<2x128xf32> to vector<2x32xf32>
    %574 = arith.negf %573 : vector<2x32xf32>
    %575 = math.exp %574 : vector<2x32xf32>
    %cst_188 = arith.constant 1.000000e+00 : f32
    %576 = vector.broadcast %cst_188 : f32 to vector<2x32xf32>
    %577 = arith.addf %576, %575 : vector<2x32xf32>
    %578 = arith.divf %576, %577 : vector<2x32xf32>
    %579 = arith.mulf %570, %509 : vector<2x32xf32>
    %580 = arith.mulf %564, %572 : vector<2x32xf32>
    %581 = arith.addf %579, %580 : vector<2x32xf32>
    %582 = math.tanh %581 : vector<2x32xf32>
    %583 = arith.mulf %578, %582 : vector<2x32xf32>
    %584 = arith.index_cast %c7_i32_171 : i32 to index
    %c0_189 = arith.constant 0 : index
    %c0_190 = arith.constant 0 : index
    %585 = vector.load %arg10[%584, %c0_189, %c0_190] : memref<8x2x32xf32, #tpu.memory_space<vmem>>, vector<1x2x32xf32>
    %586 = vector.shape_cast %585 : vector<1x2x32xf32> to vector<2x32xf32>
    %587 = vector.shape_cast %551 : vector<2x32xf32> to vector<1x2x32xf32>
    tpu.vector_store %arg10[%584, %c0_189, %c0_190], %587 {strides = array<i32>} : memref<8x2x32xf32, #tpu.memory_space<vmem>>, vector<1x2x32xf32>,
    %c7_i32_191 = arith.constant 7 : i32
    %588 = arith.subi %c7_i32_191, %c7_i32_171 : i32
    %589 = arith.index_cast %588 : i32 to index
    %c0_192 = arith.constant 0 : index
    %c0_193 = arith.constant 0 : index
    %590 = vector.load %arg11[%589, %c0_192, %c0_193] : memref<8x2x32xf32, #tpu.memory_space<vmem>>, vector<1x2x32xf32>
    %591 = vector.shape_cast %590 : vector<1x2x32xf32> to vector<2x32xf32>
    %592 = vector.shape_cast %583 : vector<2x32xf32> to vector<1x2x32xf32>
    tpu.vector_store %arg11[%589, %c0_192, %c0_193], %592 {strides = array<i32>} : memref<8x2x32xf32, #tpu.memory_space<vmem>>, vector<1x2x32xf32>,
    %c8_i32 = arith.constant 8 : i32
    %c0_194 = arith.constant 0 : index
    %c0_195 = arith.constant 0 : index
    %593 = vector.load %arg7[%c0_194, %c0_195] : memref<32x32xf32, #tpu.memory_space<vmem>>, vector<32x32xf32>
    %cst_196 = arith.constant dense<0.000000e+00> : vector<2x32xf32>
    %594 = tpu.matmul %551, %593, %cst_196 {dimension_numbers = #tpu.dot_dimension_numbers<[1], [0], [0], [1], [0, 0, 1, 1], [], []>} : vector<2x32xf32>, vector<32x32xf32>, vector<2x32xf32> -> vector<2x32xf32>
    %c0_197 = arith.constant 0 : index
    %c0_198 = arith.constant 0 : index
    %595 = vector.load %arg8[%c0_197, %c0_198] : memref<32x32xf32, #tpu.memory_space<vmem>>, vector<32x32xf32>
    %cst_199 = arith.constant dense<0.000000e+00> : vector<2x32xf32>
    %596 = tpu.matmul %583, %595, %cst_199 {dimension_numbers = #tpu.dot_dimension_numbers<[1], [0], [0], [1], [0, 0, 1, 1], [], []>} : vector<2x32xf32>, vector<32x32xf32>, vector<2x32xf32> -> vector<2x32xf32>
    %597 = arith.addf %594, %596 : vector<2x32xf32>
    %c0_200 = arith.constant 0 : index
    %c0_201 = arith.constant 0 : index
    %598 = vector.load %arg9[%c0_200, %c0_201] : memref<1x32xf32, #tpu.memory_space<vmem>>, vector<1x32xf32>
    %599 = vector.broadcast %598 : vector<1x32xf32> to vector<2x32xf32>
    %600 = arith.addf %597, %599 : vector<2x32xf32>
    %601 = math.tanh %600 : vector<2x32xf32>
    %c0_202 = arith.constant 0 : index
    %c0_203 = arith.constant 0 : index
    %602 = vector.load %arg12[%c0_202, %c0_203] : memref<2x32xf32, #tpu.memory_space<vmem>>, vector<2x32xf32>
    tpu.vector_store %arg12[%c0_202, %c0_203], %601 {strides = array<i32>} : memref<2x32xf32, #tpu.memory_space<vmem>>, vector<2x32xf32>,
    return
  }
}

module attributes {stable_mosaic.version = 11 : i64} {
  func.func @_decoder_seq_kernel(%arg0: memref<6xi32, #tpu.memory_space<smem>>, %arg1: memref<6x2x1xi32, #tpu.memory_space<vmem>>, %arg2: memref<2x8xf32, #tpu.memory_space<vmem>>, %arg3: memref<2x8x64xf32, #tpu.memory_space<vmem>>, %arg4: memref<2x32xf32, #tpu.memory_space<vmem>>, %arg5: memref<48x32xf32, #tpu.memory_space<vmem>>, %arg6: memref<32x32xf32, #tpu.memory_space<vmem>>, %arg7: memref<64x32xf32, #tpu.memory_space<vmem>>, %arg8: memref<1x32xf32, #tpu.memory_space<vmem>>, %arg9: memref<1x32xf32, #tpu.memory_space<vmem>>, %arg10: memref<32x128xf32, #tpu.memory_space<vmem>>, %arg11: memref<64x128xf32, #tpu.memory_space<vmem>>, %arg12: memref<32x128xf32, #tpu.memory_space<vmem>>, %arg13: memref<1x128xf32, #tpu.memory_space<vmem>>, %arg14: memref<32x48xf32, #tpu.memory_space<vmem>>, %arg15: memref<64x48xf32, #tpu.memory_space<vmem>>, %arg16: memref<32x48xf32, #tpu.memory_space<vmem>>, %arg17: memref<1x48xf32, #tpu.memory_space<vmem>>, %arg18: memref<6x2x48xf32, #tpu.memory_space<vmem>>) attributes {dimension_semantics = [], scalar_prefetch = 0 : i64, scratch_operands = 0 : i64, tpu.core_type = #tpu.core_type<tc>} {
    %c0 = arith.constant 0 : index
    %c0_0 = arith.constant 0 : index
    %c0_1 = arith.constant 0 : index
    %0 = vector.load %arg3[%c0, %c0_0, %c0_1] : memref<2x8x64xf32, #tpu.memory_space<vmem>>, vector<2x8x64xf32>
    %1 = vector.shape_cast %0 : vector<2x8x64xf32> to vector<16x64xf32>
    %c0_2 = arith.constant 0 : index
    %c0_3 = arith.constant 0 : index
    %2 = vector.load %arg7[%c0_2, %c0_3] : memref<64x32xf32, #tpu.memory_space<vmem>>, vector<64x32xf32>
    %cst = arith.constant dense<0.000000e+00> : vector<16x32xf32>
    %3 = tpu.matmul %1, %2, %cst {dimension_numbers = #tpu.dot_dimension_numbers<[1], [0], [0], [1], [0, 0, 1, 1], [], []>} : vector<16x64xf32>, vector<64x32xf32>, vector<16x32xf32> -> vector<16x32xf32>
    %4 = vector.shape_cast %3 : vector<16x32xf32> to vector<2x8x32xf32>
    %c0_4 = arith.constant 0 : index
    %c0_5 = arith.constant 0 : index
    %5 = vector.load %arg8[%c0_4, %c0_5] : memref<1x32xf32, #tpu.memory_space<vmem>>, vector<1x32xf32>
    %6 = vector.shape_cast %5 : vector<1x32xf32> to vector<1x1x32xf32>
    %7 = vector.broadcast %6 : vector<1x1x32xf32> to vector<2x8x32xf32>
    %8 = arith.addf %4, %7 : vector<2x8x32xf32>
    %c0_6 = arith.constant 0 : index
    %c0_7 = arith.constant 0 : index
    %9 = vector.load %arg9[%c0_6, %c0_7] : memref<1x32xf32, #tpu.memory_space<vmem>>, vector<1x32xf32>
    %10 = vector.shape_cast %9 : vector<1x32xf32> to vector<1x1x32xf32>
    %11 = vector.shape_cast %10 : vector<1x1x32xf32> to vector<1x1x32xf32>
    %12 = vector.broadcast %11 : vector<1x1x32xf32> to vector<2x8x32xf32>
    %c0_8 = arith.constant 0 : index
    %c0_9 = arith.constant 0 : index
    %13 = vector.load %arg2[%c0_8, %c0_9] : memref<2x8xf32, #tpu.memory_space<vmem>>, vector<2x8xf32>
    %cst_10 = arith.constant 5.000000e-01 : f32
    %14 = vector.broadcast %cst_10 : f32 to vector<2x8xf32>
    %15 = arith.cmpf ogt, %13, %14 : vector<2x8xf32>
    %16 = tpu.iota {dimensions = array<i32: 1>} : vector<2x48xi32>
    %c0_11 = arith.constant 0 : index
    %c0_12 = arith.constant 0 : index
    %17 = vector.load %arg13[%c0_11, %c0_12] : memref<1x128xf32, #tpu.memory_space<vmem>>, vector<1x128xf32>
    %18 = vector.shape_cast %17 : vector<1x128xf32> to vector<1x128xf32>
    %19 = vector.broadcast %18 : vector<1x128xf32> to vector<2x128xf32>
    %c0_13 = arith.constant 0 : index
    %c0_14 = arith.constant 0 : index
    %20 = vector.load %arg17[%c0_13, %c0_14] : memref<1x48xf32, #tpu.memory_space<vmem>>, vector<1x48xf32>
    %21 = vector.shape_cast %20 : vector<1x48xf32> to vector<1x48xf32>
    %22 = vector.broadcast %21 : vector<1x48xf32> to vector<2x48xf32>
    %c0_15 = arith.constant 0 : index
    %c0_16 = arith.constant 0 : index
    %23 = vector.load %arg4[%c0_15, %c0_16] : memref<2x32xf32, #tpu.memory_space<vmem>>, vector<2x32xf32>
    %cst_17 = arith.constant 0.000000e+00 : f32
    %24 = vector.broadcast %cst_17 : f32 to vector<2x32xf32>
    %c1_i32 = arith.constant 1 : i32
    %25 = vector.broadcast %c1_i32 : i32 to vector<2x1xi32>
    %c0_i32 = arith.constant 0 : i32
    %26 = vector.broadcast %25 : vector<2x1xi32> to vector<2x48xi32>
    %27 = arith.cmpi eq, %26, %16 : vector<2x48xi32>
    %28 = arith.extui %27 : vector<2x48xi1> to vector<2x48xi32>
    %29 = arith.sitofp %28 : vector<2x48xi32> to vector<2x48xf32>
    %c0_18 = arith.constant 0 : index
    %c0_19 = arith.constant 0 : index
    %30 = vector.load %arg5[%c0_18, %c0_19] : memref<48x32xf32, #tpu.memory_space<vmem>>, vector<48x32xf32>
    %cst_20 = arith.constant dense<0.000000e+00> : vector<2x32xf32>
    %31 = tpu.matmul %29, %30, %cst_20 {dimension_numbers = #tpu.dot_dimension_numbers<[1], [0], [0], [1], [0, 0, 1, 1], [], []>} : vector<2x48xf32>, vector<48x32xf32>, vector<2x32xf32> -> vector<2x32xf32>
    %c0_21 = arith.constant 0 : index
    %c0_22 = arith.constant 0 : index
    %32 = vector.load %arg6[%c0_21, %c0_22] : memref<32x32xf32, #tpu.memory_space<vmem>>, vector<32x32xf32>
    %cst_23 = arith.constant dense<0.000000e+00> : vector<2x32xf32>
    %33 = tpu.matmul %23, %32, %cst_23 {dimension_numbers = #tpu.dot_dimension_numbers<[1], [0], [0], [1], [0, 0, 1, 1], [], []>} : vector<2x32xf32>, vector<32x32xf32>, vector<2x32xf32> -> vector<2x32xf32>
    %34 = vector.shape_cast %33 : vector<2x32xf32> to vector<2x1x32xf32>
    %35 = vector.broadcast %34 : vector<2x1x32xf32> to vector<2x8x32xf32>
    %36 = arith.addf %8, %35 : vector<2x8x32xf32>
    %37 = math.tanh %36 : vector<2x8x32xf32>
    %38 = arith.mulf %37, %12 : vector<2x8x32xf32>
    %cst_24 = arith.constant dense<0.000000e+00> : vector<2x8xf32>
    %39 = vector.multi_reduction <add>, %38, %cst_24 [2] : vector<2x8x32xf32> to vector<2x8xf32>
    %cst_25 = arith.constant -1.000000e+10 : f32
    %40 = vector.broadcast %cst_25 : f32 to vector<2x8xf32>
    %41 = arith.select %15, %40, %39 : vector<2x8xi1>, vector<2x8xf32>
    %cst_26 = arith.constant dense<0xFF800000> : vector<2xf32>
    %42 = vector.multi_reduction <maximumf>, %41, %cst_26 [1] : vector<2x8xf32> to vector<2xf32>
    %43 = vector.shape_cast %42 : vector<2xf32> to vector<2x1xf32>
    %44 = vector.broadcast %43 : vector<2x1xf32> to vector<2x8xf32>
    %45 = arith.subf %41, %44 : vector<2x8xf32>
    %46 = math.exp %45 : vector<2x8xf32>
    %cst_27 = arith.constant dense<0.000000e+00> : vector<2xf32>
    %47 = vector.multi_reduction <add>, %46, %cst_27 [1] : vector<2x8xf32> to vector<2xf32>
    %48 = vector.shape_cast %47 : vector<2xf32> to vector<2x1xf32>
    %49 = tpu.reciprocal %48 {approx = true} : vector<2x1xf32> -> vector<2x1xf32>
    %50 = vector.broadcast %49 : vector<2x1xf32> to vector<2x8xf32>
    %51 = arith.mulf %46, %50 : vector<2x8xf32>
    %52 = vector.shape_cast %51 : vector<2x8xf32> to vector<2x1x8xf32>
    %c0_28 = arith.constant 0 : index
    %c0_29 = arith.constant 0 : index
    %c0_30 = arith.constant 0 : index
    %53 = vector.load %arg3[%c0_28, %c0_29, %c0_30] : memref<2x8x64xf32, #tpu.memory_space<vmem>>, vector<2x8x64xf32>
    "tpu.trace_start"() <{level = 10 : i32, message = "bqs,bsh->bqh"}> : () -> ()
    %cst_31 = arith.constant dense<0.000000e+00> : vector<2x1x64xf32>
    %54 = tpu.matmul %52, %53, %cst_31 {dimension_numbers = #tpu.dot_dimension_numbers<[2], [1], [1], [2], [0, 0, 0, 1, 1, 2], [0], [0]>} : vector<2x1x8xf32>, vector<2x8x64xf32>, vector<2x1x64xf32> -> vector<2x1x64xf32>
    "tpu.trace_stop"() : () -> ()
    %55 = vector.shape_cast %54 : vector<2x1x64xf32> to vector<2x64xf32>
    %c0_32 = arith.constant 0 : index
    %c0_33 = arith.constant 0 : index
    %56 = vector.load %arg10[%c0_32, %c0_33] : memref<32x128xf32, #tpu.memory_space<vmem>>, vector<32x128xf32>
    %cst_34 = arith.constant dense<0.000000e+00> : vector<2x128xf32>
    %57 = tpu.matmul %31, %56, %cst_34 {dimension_numbers = #tpu.dot_dimension_numbers<[1], [0], [0], [1], [0, 0, 1, 1], [], []>} : vector<2x32xf32>, vector<32x128xf32>, vector<2x128xf32> -> vector<2x128xf32>
    %c0_35 = arith.constant 0 : index
    %c0_36 = arith.constant 0 : index
    %58 = vector.load %arg11[%c0_35, %c0_36] : memref<64x128xf32, #tpu.memory_space<vmem>>, vector<64x128xf32>
    %cst_37 = arith.constant dense<0.000000e+00> : vector<2x128xf32>
    %59 = tpu.matmul %55, %58, %cst_37 {dimension_numbers = #tpu.dot_dimension_numbers<[1], [0], [0], [1], [0, 0, 1, 1], [], []>} : vector<2x64xf32>, vector<64x128xf32>, vector<2x128xf32> -> vector<2x128xf32>
    %60 = arith.addf %57, %59 : vector<2x128xf32>
    %c0_38 = arith.constant 0 : index
    %c0_39 = arith.constant 0 : index
    %61 = vector.load %arg12[%c0_38, %c0_39] : memref<32x128xf32, #tpu.memory_space<vmem>>, vector<32x128xf32>
    %cst_40 = arith.constant dense<0.000000e+00> : vector<2x128xf32>
    %62 = tpu.matmul %23, %61, %cst_40 {dimension_numbers = #tpu.dot_dimension_numbers<[1], [0], [0], [1], [0, 0, 1, 1], [], []>} : vector<2x32xf32>, vector<32x128xf32>, vector<2x128xf32> -> vector<2x128xf32>
    %63 = arith.addf %60, %62 : vector<2x128xf32>
    %64 = arith.addf %63, %19 : vector<2x128xf32>
    %65 = vector.extract_strided_slice %64 {offsets = [0, 0], sizes = [2, 32], strides = [1, 1]} : vector<2x128xf32> to vector<2x32xf32>
    %66 = arith.negf %65 : vector<2x32xf32>
    %67 = math.exp %66 : vector<2x32xf32>
    %cst_41 = arith.constant 1.000000e+00 : f32
    %68 = vector.broadcast %cst_41 : f32 to vector<2x32xf32>
    %69 = arith.addf %68, %67 : vector<2x32xf32>
    %70 = arith.divf %68, %69 : vector<2x32xf32>
    %71 = vector.extract_strided_slice %64 {offsets = [0, 32], sizes = [2, 32], strides = [1, 1]} : vector<2x128xf32> to vector<2x32xf32>
    %72 = arith.negf %71 : vector<2x32xf32>
    %73 = math.exp %72 : vector<2x32xf32>
    %cst_42 = arith.constant 1.000000e+00 : f32
    %74 = vector.broadcast %cst_42 : f32 to vector<2x32xf32>
    %75 = arith.addf %74, %73 : vector<2x32xf32>
    %76 = arith.divf %74, %75 : vector<2x32xf32>
    %77 = vector.extract_strided_slice %64 {offsets = [0, 64], sizes = [2, 32], strides = [1, 1]} : vector<2x128xf32> to vector<2x32xf32>
    %78 = math.tanh %77 : vector<2x32xf32>
    %79 = vector.extract_strided_slice %64 {offsets = [0, 96], sizes = [2, 32], strides = [1, 1]} : vector<2x128xf32> to vector<2x32xf32>
    %80 = arith.negf %79 : vector<2x32xf32>
    %81 = math.exp %80 : vector<2x32xf32>
    %cst_43 = arith.constant 1.000000e+00 : f32
    %82 = vector.broadcast %cst_43 : f32 to vector<2x32xf32>
    %83 = arith.addf %82, %81 : vector<2x32xf32>
    %84 = arith.divf %82, %83 : vector<2x32xf32>
    %85 = arith.mulf %76, %24 : vector<2x32xf32>
    %86 = arith.mulf %70, %78 : vector<2x32xf32>
    %87 = arith.addf %85, %86 : vector<2x32xf32>
    %88 = math.tanh %87 : vector<2x32xf32>
    %89 = arith.mulf %84, %88 : vector<2x32xf32>
    %c0_44 = arith.constant 0 : index
    %c0_45 = arith.constant 0 : index
    %90 = vector.load %arg14[%c0_44, %c0_45] : memref<32x48xf32, #tpu.memory_space<vmem>>, vector<32x48xf32>
    %cst_46 = arith.constant dense<0.000000e+00> : vector<2x48xf32>
    %91 = tpu.matmul %89, %90, %cst_46 {dimension_numbers = #tpu.dot_dimension_numbers<[1], [0], [0], [1], [0, 0, 1, 1], [], []>} : vector<2x32xf32>, vector<32x48xf32>, vector<2x48xf32> -> vector<2x48xf32>
    %c0_47 = arith.constant 0 : index
    %c0_48 = arith.constant 0 : index
    %92 = vector.load %arg15[%c0_47, %c0_48] : memref<64x48xf32, #tpu.memory_space<vmem>>, vector<64x48xf32>
    %cst_49 = arith.constant dense<0.000000e+00> : vector<2x48xf32>
    %93 = tpu.matmul %55, %92, %cst_49 {dimension_numbers = #tpu.dot_dimension_numbers<[1], [0], [0], [1], [0, 0, 1, 1], [], []>} : vector<2x64xf32>, vector<64x48xf32>, vector<2x48xf32> -> vector<2x48xf32>
    %94 = arith.addf %91, %93 : vector<2x48xf32>
    %c0_50 = arith.constant 0 : index
    %c0_51 = arith.constant 0 : index
    %95 = vector.load %arg16[%c0_50, %c0_51] : memref<32x48xf32, #tpu.memory_space<vmem>>, vector<32x48xf32>
    %cst_52 = arith.constant dense<0.000000e+00> : vector<2x48xf32>
    %96 = tpu.matmul %31, %95, %cst_52 {dimension_numbers = #tpu.dot_dimension_numbers<[1], [0], [0], [1], [0, 0, 1, 1], [], []>} : vector<2x32xf32>, vector<32x48xf32>, vector<2x48xf32> -> vector<2x48xf32>
    %97 = arith.addf %94, %96 : vector<2x48xf32>
    %98 = arith.addf %97, %22 : vector<2x48xf32>
    %99 = arith.index_cast %c0_i32 : i32 to index
    %c0_53 = arith.constant 0 : index
    %c0_54 = arith.constant 0 : index
    %100 = vector.load %arg18[%99, %c0_53, %c0_54] : memref<6x2x48xf32, #tpu.memory_space<vmem>>, vector<1x2x48xf32>
    %101 = vector.shape_cast %100 : vector<1x2x48xf32> to vector<2x48xf32>
    %102 = vector.shape_cast %98 : vector<2x48xf32> to vector<1x2x48xf32>
    tpu.vector_store %arg18[%99, %c0_53, %c0_54], %102 {strides = array<i32>} : memref<6x2x48xf32, #tpu.memory_space<vmem>>, vector<1x2x48xf32>,
    %cst_55 = arith.constant dense<0xFF800000> : vector<2xf32>
    %103 = vector.multi_reduction <maximumf>, %98, %cst_55 [1] : vector<2x48xf32> to vector<2xf32>
    %104 = vector.shape_cast %103 : vector<2xf32> to vector<2x1xf32>
    %105 = vector.broadcast %104 : vector<2x1xf32> to vector<2x48xf32>
    %106 = arith.cmpf oge, %98, %105 : vector<2x48xf32>
    %c48_i32 = arith.constant 48 : i32
    %107 = vector.broadcast %c48_i32 : i32 to vector<2x48xi32>
    %108 = arith.select %106, %16, %107 : vector<2x48xi1>, vector<2x48xi32>
    %cst_56 = arith.constant dense<2147483647> : vector<2xi32>
    %109 = vector.multi_reduction <minsi>, %108, %cst_56 [1] : vector<2x48xi32> to vector<2xi32>
    %110 = vector.shape_cast %109 : vector<2xi32> to vector<2x1xi32>
    %111 = arith.index_cast %c0_i32 : i32 to index
    %112 = memref.load %arg0[%111] : memref<6xi32, #tpu.memory_space<smem>>
    %c0_i32_57 = arith.constant 0 : i32
    %113 = arith.cmpi sgt, %112, %c0_i32_57 : i32
    %114 = arith.extui %113 : i1 to i32
    %115 = arith.index_cast %c0_i32 : i32 to index
    %c0_58 = arith.constant 0 : index
    %c0_59 = arith.constant 0 : index
    %116 = vector.load %arg1[%115, %c0_58, %c0_59] : memref<6x2x1xi32, #tpu.memory_space<vmem>>, vector<1x2x1xi32>
    %117 = vector.shape_cast %116 : vector<1x2x1xi32> to vector<2x1xi32>
    %118 = vector.broadcast %114 : i32 to vector<2x1xi32>
    %119 = arith.muli %118, %117 : vector<2x1xi32>
    %c1_i32_60 = arith.constant 1 : i32
    %120 = arith.subi %c1_i32_60, %114 : i32
    %121 = vector.broadcast %120 : i32 to vector<2x1xi32>
    %122 = arith.muli %121, %110 : vector<2x1xi32>
    %123 = arith.addi %119, %122 : vector<2x1xi32>
    %c1_i32_61 = arith.constant 1 : i32
    %124 = vector.broadcast %123 : vector<2x1xi32> to vector<2x48xi32>
    %125 = arith.cmpi eq, %124, %16 : vector<2x48xi32>
    %126 = arith.extui %125 : vector<2x48xi1> to vector<2x48xi32>
    %127 = arith.sitofp %126 : vector<2x48xi32> to vector<2x48xf32>
    %c0_62 = arith.constant 0 : index
    %c0_63 = arith.constant 0 : index
    %128 = vector.load %arg5[%c0_62, %c0_63] : memref<48x32xf32, #tpu.memory_space<vmem>>, vector<48x32xf32>
    %cst_64 = arith.constant dense<0.000000e+00> : vector<2x32xf32>
    %129 = tpu.matmul %127, %128, %cst_64 {dimension_numbers = #tpu.dot_dimension_numbers<[1], [0], [0], [1], [0, 0, 1, 1], [], []>} : vector<2x48xf32>, vector<48x32xf32>, vector<2x32xf32> -> vector<2x32xf32>
    %c0_65 = arith.constant 0 : index
    %c0_66 = arith.constant 0 : index
    %130 = vector.load %arg6[%c0_65, %c0_66] : memref<32x32xf32, #tpu.memory_space<vmem>>, vector<32x32xf32>
    %cst_67 = arith.constant dense<0.000000e+00> : vector<2x32xf32>
    %131 = tpu.matmul %89, %130, %cst_67 {dimension_numbers = #tpu.dot_dimension_numbers<[1], [0], [0], [1], [0, 0, 1, 1], [], []>} : vector<2x32xf32>, vector<32x32xf32>, vector<2x32xf32> -> vector<2x32xf32>
    %132 = vector.shape_cast %131 : vector<2x32xf32> to vector<2x1x32xf32>
    %133 = vector.broadcast %132 : vector<2x1x32xf32> to vector<2x8x32xf32>
    %134 = arith.addf %8, %133 : vector<2x8x32xf32>
    %135 = math.tanh %134 : vector<2x8x32xf32>
    %136 = arith.mulf %135, %12 : vector<2x8x32xf32>
    %cst_68 = arith.constant dense<0.000000e+00> : vector<2x8xf32>
    %137 = vector.multi_reduction <add>, %136, %cst_68 [2] : vector<2x8x32xf32> to vector<2x8xf32>
    %cst_69 = arith.constant -1.000000e+10 : f32
    %138 = vector.broadcast %cst_69 : f32 to vector<2x8xf32>
    %139 = arith.select %15, %138, %137 : vector<2x8xi1>, vector<2x8xf32>
    %cst_70 = arith.constant dense<0xFF800000> : vector<2xf32>
    %140 = vector.multi_reduction <maximumf>, %139, %cst_70 [1] : vector<2x8xf32> to vector<2xf32>
    %141 = vector.shape_cast %140 : vector<2xf32> to vector<2x1xf32>
    %142 = vector.broadcast %141 : vector<2x1xf32> to vector<2x8xf32>
    %143 = arith.subf %139, %142 : vector<2x8xf32>
    %144 = math.exp %143 : vector<2x8xf32>
    %cst_71 = arith.constant dense<0.000000e+00> : vector<2xf32>
    %145 = vector.multi_reduction <add>, %144, %cst_71 [1] : vector<2x8xf32> to vector<2xf32>
    %146 = vector.shape_cast %145 : vector<2xf32> to vector<2x1xf32>
    %147 = tpu.reciprocal %146 {approx = true} : vector<2x1xf32> -> vector<2x1xf32>
    %148 = vector.broadcast %147 : vector<2x1xf32> to vector<2x8xf32>
    %149 = arith.mulf %144, %148 : vector<2x8xf32>
    %150 = vector.shape_cast %149 : vector<2x8xf32> to vector<2x1x8xf32>
    %c0_72 = arith.constant 0 : index
    %c0_73 = arith.constant 0 : index
    %c0_74 = arith.constant 0 : index
    %151 = vector.load %arg3[%c0_72, %c0_73, %c0_74] : memref<2x8x64xf32, #tpu.memory_space<vmem>>, vector<2x8x64xf32>
    "tpu.trace_start"() <{level = 10 : i32, message = "bqs,bsh->bqh"}> : () -> ()
    %cst_75 = arith.constant dense<0.000000e+00> : vector<2x1x64xf32>
    %152 = tpu.matmul %150, %151, %cst_75 {dimension_numbers = #tpu.dot_dimension_numbers<[2], [1], [1], [2], [0, 0, 0, 1, 1, 2], [0], [0]>} : vector<2x1x8xf32>, vector<2x8x64xf32>, vector<2x1x64xf32> -> vector<2x1x64xf32>
    "tpu.trace_stop"() : () -> ()
    %153 = vector.shape_cast %152 : vector<2x1x64xf32> to vector<2x64xf32>
    %c0_76 = arith.constant 0 : index
    %c0_77 = arith.constant 0 : index
    %154 = vector.load %arg10[%c0_76, %c0_77] : memref<32x128xf32, #tpu.memory_space<vmem>>, vector<32x128xf32>
    %cst_78 = arith.constant dense<0.000000e+00> : vector<2x128xf32>
    %155 = tpu.matmul %129, %154, %cst_78 {dimension_numbers = #tpu.dot_dimension_numbers<[1], [0], [0], [1], [0, 0, 1, 1], [], []>} : vector<2x32xf32>, vector<32x128xf32>, vector<2x128xf32> -> vector<2x128xf32>
    %c0_79 = arith.constant 0 : index
    %c0_80 = arith.constant 0 : index
    %156 = vector.load %arg11[%c0_79, %c0_80] : memref<64x128xf32, #tpu.memory_space<vmem>>, vector<64x128xf32>
    %cst_81 = arith.constant dense<0.000000e+00> : vector<2x128xf32>
    %157 = tpu.matmul %153, %156, %cst_81 {dimension_numbers = #tpu.dot_dimension_numbers<[1], [0], [0], [1], [0, 0, 1, 1], [], []>} : vector<2x64xf32>, vector<64x128xf32>, vector<2x128xf32> -> vector<2x128xf32>
    %158 = arith.addf %155, %157 : vector<2x128xf32>
    %c0_82 = arith.constant 0 : index
    %c0_83 = arith.constant 0 : index
    %159 = vector.load %arg12[%c0_82, %c0_83] : memref<32x128xf32, #tpu.memory_space<vmem>>, vector<32x128xf32>
    %cst_84 = arith.constant dense<0.000000e+00> : vector<2x128xf32>
    %160 = tpu.matmul %89, %159, %cst_84 {dimension_numbers = #tpu.dot_dimension_numbers<[1], [0], [0], [1], [0, 0, 1, 1], [], []>} : vector<2x32xf32>, vector<32x128xf32>, vector<2x128xf32> -> vector<2x128xf32>
    %161 = arith.addf %158, %160 : vector<2x128xf32>
    %162 = arith.addf %161, %19 : vector<2x128xf32>
    %163 = vector.extract_strided_slice %162 {offsets = [0, 0], sizes = [2, 32], strides = [1, 1]} : vector<2x128xf32> to vector<2x32xf32>
    %164 = arith.negf %163 : vector<2x32xf32>
    %165 = math.exp %164 : vector<2x32xf32>
    %cst_85 = arith.constant 1.000000e+00 : f32
    %166 = vector.broadcast %cst_85 : f32 to vector<2x32xf32>
    %167 = arith.addf %166, %165 : vector<2x32xf32>
    %168 = arith.divf %166, %167 : vector<2x32xf32>
    %169 = vector.extract_strided_slice %162 {offsets = [0, 32], sizes = [2, 32], strides = [1, 1]} : vector<2x128xf32> to vector<2x32xf32>
    %170 = arith.negf %169 : vector<2x32xf32>
    %171 = math.exp %170 : vector<2x32xf32>
    %cst_86 = arith.constant 1.000000e+00 : f32
    %172 = vector.broadcast %cst_86 : f32 to vector<2x32xf32>
    %173 = arith.addf %172, %171 : vector<2x32xf32>
    %174 = arith.divf %172, %173 : vector<2x32xf32>
    %175 = vector.extract_strided_slice %162 {offsets = [0, 64], sizes = [2, 32], strides = [1, 1]} : vector<2x128xf32> to vector<2x32xf32>
    %176 = math.tanh %175 : vector<2x32xf32>
    %177 = vector.extract_strided_slice %162 {offsets = [0, 96], sizes = [2, 32], strides = [1, 1]} : vector<2x128xf32> to vector<2x32xf32>
    %178 = arith.negf %177 : vector<2x32xf32>
    %179 = math.exp %178 : vector<2x32xf32>
    %cst_87 = arith.constant 1.000000e+00 : f32
    %180 = vector.broadcast %cst_87 : f32 to vector<2x32xf32>
    %181 = arith.addf %180, %179 : vector<2x32xf32>
    %182 = arith.divf %180, %181 : vector<2x32xf32>
    %183 = arith.mulf %174, %87 : vector<2x32xf32>
    %184 = arith.mulf %168, %176 : vector<2x32xf32>
    %185 = arith.addf %183, %184 : vector<2x32xf32>
    %186 = math.tanh %185 : vector<2x32xf32>
    %187 = arith.mulf %182, %186 : vector<2x32xf32>
    %c0_88 = arith.constant 0 : index
    %c0_89 = arith.constant 0 : index
    %188 = vector.load %arg14[%c0_88, %c0_89] : memref<32x48xf32, #tpu.memory_space<vmem>>, vector<32x48xf32>
    %cst_90 = arith.constant dense<0.000000e+00> : vector<2x48xf32>
    %189 = tpu.matmul %187, %188, %cst_90 {dimension_numbers = #tpu.dot_dimension_numbers<[1], [0], [0], [1], [0, 0, 1, 1], [], []>} : vector<2x32xf32>, vector<32x48xf32>, vector<2x48xf32> -> vector<2x48xf32>
    %c0_91 = arith.constant 0 : index
    %c0_92 = arith.constant 0 : index
    %190 = vector.load %arg15[%c0_91, %c0_92] : memref<64x48xf32, #tpu.memory_space<vmem>>, vector<64x48xf32>
    %cst_93 = arith.constant dense<0.000000e+00> : vector<2x48xf32>
    %191 = tpu.matmul %153, %190, %cst_93 {dimension_numbers = #tpu.dot_dimension_numbers<[1], [0], [0], [1], [0, 0, 1, 1], [], []>} : vector<2x64xf32>, vector<64x48xf32>, vector<2x48xf32> -> vector<2x48xf32>
    %192 = arith.addf %189, %191 : vector<2x48xf32>
    %c0_94 = arith.constant 0 : index
    %c0_95 = arith.constant 0 : index
    %193 = vector.load %arg16[%c0_94, %c0_95] : memref<32x48xf32, #tpu.memory_space<vmem>>, vector<32x48xf32>
    %cst_96 = arith.constant dense<0.000000e+00> : vector<2x48xf32>
    %194 = tpu.matmul %129, %193, %cst_96 {dimension_numbers = #tpu.dot_dimension_numbers<[1], [0], [0], [1], [0, 0, 1, 1], [], []>} : vector<2x32xf32>, vector<32x48xf32>, vector<2x48xf32> -> vector<2x48xf32>
    %195 = arith.addf %192, %194 : vector<2x48xf32>
    %196 = arith.addf %195, %22 : vector<2x48xf32>
    %197 = arith.index_cast %c1_i32_61 : i32 to index
    %c0_97 = arith.constant 0 : index
    %c0_98 = arith.constant 0 : index
    %198 = vector.load %arg18[%197, %c0_97, %c0_98] : memref<6x2x48xf32, #tpu.memory_space<vmem>>, vector<1x2x48xf32>
    %199 = vector.shape_cast %198 : vector<1x2x48xf32> to vector<2x48xf32>
    %200 = vector.shape_cast %196 : vector<2x48xf32> to vector<1x2x48xf32>
    tpu.vector_store %arg18[%197, %c0_97, %c0_98], %200 {strides = array<i32>} : memref<6x2x48xf32, #tpu.memory_space<vmem>>, vector<1x2x48xf32>,
    %cst_99 = arith.constant dense<0xFF800000> : vector<2xf32>
    %201 = vector.multi_reduction <maximumf>, %196, %cst_99 [1] : vector<2x48xf32> to vector<2xf32>
    %202 = vector.shape_cast %201 : vector<2xf32> to vector<2x1xf32>
    %203 = vector.broadcast %202 : vector<2x1xf32> to vector<2x48xf32>
    %204 = arith.cmpf oge, %196, %203 : vector<2x48xf32>
    %c48_i32_100 = arith.constant 48 : i32
    %205 = vector.broadcast %c48_i32_100 : i32 to vector<2x48xi32>
    %206 = arith.select %204, %16, %205 : vector<2x48xi1>, vector<2x48xi32>
    %cst_101 = arith.constant dense<2147483647> : vector<2xi32>
    %207 = vector.multi_reduction <minsi>, %206, %cst_101 [1] : vector<2x48xi32> to vector<2xi32>
    %208 = vector.shape_cast %207 : vector<2xi32> to vector<2x1xi32>
    %209 = arith.index_cast %c1_i32_61 : i32 to index
    %210 = memref.load %arg0[%209] : memref<6xi32, #tpu.memory_space<smem>>
    %c0_i32_102 = arith.constant 0 : i32
    %211 = arith.cmpi sgt, %210, %c0_i32_102 : i32
    %212 = arith.extui %211 : i1 to i32
    %213 = arith.index_cast %c1_i32_61 : i32 to index
    %c0_103 = arith.constant 0 : index
    %c0_104 = arith.constant 0 : index
    %214 = vector.load %arg1[%213, %c0_103, %c0_104] : memref<6x2x1xi32, #tpu.memory_space<vmem>>, vector<1x2x1xi32>
    %215 = vector.shape_cast %214 : vector<1x2x1xi32> to vector<2x1xi32>
    %216 = vector.broadcast %212 : i32 to vector<2x1xi32>
    %217 = arith.muli %216, %215 : vector<2x1xi32>
    %c1_i32_105 = arith.constant 1 : i32
    %218 = arith.subi %c1_i32_105, %212 : i32
    %219 = vector.broadcast %218 : i32 to vector<2x1xi32>
    %220 = arith.muli %219, %208 : vector<2x1xi32>
    %221 = arith.addi %217, %220 : vector<2x1xi32>
    %c2_i32 = arith.constant 2 : i32
    %222 = vector.broadcast %221 : vector<2x1xi32> to vector<2x48xi32>
    %223 = arith.cmpi eq, %222, %16 : vector<2x48xi32>
    %224 = arith.extui %223 : vector<2x48xi1> to vector<2x48xi32>
    %225 = arith.sitofp %224 : vector<2x48xi32> to vector<2x48xf32>
    %c0_106 = arith.constant 0 : index
    %c0_107 = arith.constant 0 : index
    %226 = vector.load %arg5[%c0_106, %c0_107] : memref<48x32xf32, #tpu.memory_space<vmem>>, vector<48x32xf32>
    %cst_108 = arith.constant dense<0.000000e+00> : vector<2x32xf32>
    %227 = tpu.matmul %225, %226, %cst_108 {dimension_numbers = #tpu.dot_dimension_numbers<[1], [0], [0], [1], [0, 0, 1, 1], [], []>} : vector<2x48xf32>, vector<48x32xf32>, vector<2x32xf32> -> vector<2x32xf32>
    %c0_109 = arith.constant 0 : index
    %c0_110 = arith.constant 0 : index
    %228 = vector.load %arg6[%c0_109, %c0_110] : memref<32x32xf32, #tpu.memory_space<vmem>>, vector<32x32xf32>
    %cst_111 = arith.constant dense<0.000000e+00> : vector<2x32xf32>
    %229 = tpu.matmul %187, %228, %cst_111 {dimension_numbers = #tpu.dot_dimension_numbers<[1], [0], [0], [1], [0, 0, 1, 1], [], []>} : vector<2x32xf32>, vector<32x32xf32>, vector<2x32xf32> -> vector<2x32xf32>
    %230 = vector.shape_cast %229 : vector<2x32xf32> to vector<2x1x32xf32>
    %231 = vector.broadcast %230 : vector<2x1x32xf32> to vector<2x8x32xf32>
    %232 = arith.addf %8, %231 : vector<2x8x32xf32>
    %233 = math.tanh %232 : vector<2x8x32xf32>
    %234 = arith.mulf %233, %12 : vector<2x8x32xf32>
    %cst_112 = arith.constant dense<0.000000e+00> : vector<2x8xf32>
    %235 = vector.multi_reduction <add>, %234, %cst_112 [2] : vector<2x8x32xf32> to vector<2x8xf32>
    %cst_113 = arith.constant -1.000000e+10 : f32
    %236 = vector.broadcast %cst_113 : f32 to vector<2x8xf32>
    %237 = arith.select %15, %236, %235 : vector<2x8xi1>, vector<2x8xf32>
    %cst_114 = arith.constant dense<0xFF800000> : vector<2xf32>
    %238 = vector.multi_reduction <maximumf>, %237, %cst_114 [1] : vector<2x8xf32> to vector<2xf32>
    %239 = vector.shape_cast %238 : vector<2xf32> to vector<2x1xf32>
    %240 = vector.broadcast %239 : vector<2x1xf32> to vector<2x8xf32>
    %241 = arith.subf %237, %240 : vector<2x8xf32>
    %242 = math.exp %241 : vector<2x8xf32>
    %cst_115 = arith.constant dense<0.000000e+00> : vector<2xf32>
    %243 = vector.multi_reduction <add>, %242, %cst_115 [1] : vector<2x8xf32> to vector<2xf32>
    %244 = vector.shape_cast %243 : vector<2xf32> to vector<2x1xf32>
    %245 = tpu.reciprocal %244 {approx = true} : vector<2x1xf32> -> vector<2x1xf32>
    %246 = vector.broadcast %245 : vector<2x1xf32> to vector<2x8xf32>
    %247 = arith.mulf %242, %246 : vector<2x8xf32>
    %248 = vector.shape_cast %247 : vector<2x8xf32> to vector<2x1x8xf32>
    %c0_116 = arith.constant 0 : index
    %c0_117 = arith.constant 0 : index
    %c0_118 = arith.constant 0 : index
    %249 = vector.load %arg3[%c0_116, %c0_117, %c0_118] : memref<2x8x64xf32, #tpu.memory_space<vmem>>, vector<2x8x64xf32>
    "tpu.trace_start"() <{level = 10 : i32, message = "bqs,bsh->bqh"}> : () -> ()
    %cst_119 = arith.constant dense<0.000000e+00> : vector<2x1x64xf32>
    %250 = tpu.matmul %248, %249, %cst_119 {dimension_numbers = #tpu.dot_dimension_numbers<[2], [1], [1], [2], [0, 0, 0, 1, 1, 2], [0], [0]>} : vector<2x1x8xf32>, vector<2x8x64xf32>, vector<2x1x64xf32> -> vector<2x1x64xf32>
    "tpu.trace_stop"() : () -> ()
    %251 = vector.shape_cast %250 : vector<2x1x64xf32> to vector<2x64xf32>
    %c0_120 = arith.constant 0 : index
    %c0_121 = arith.constant 0 : index
    %252 = vector.load %arg10[%c0_120, %c0_121] : memref<32x128xf32, #tpu.memory_space<vmem>>, vector<32x128xf32>
    %cst_122 = arith.constant dense<0.000000e+00> : vector<2x128xf32>
    %253 = tpu.matmul %227, %252, %cst_122 {dimension_numbers = #tpu.dot_dimension_numbers<[1], [0], [0], [1], [0, 0, 1, 1], [], []>} : vector<2x32xf32>, vector<32x128xf32>, vector<2x128xf32> -> vector<2x128xf32>
    %c0_123 = arith.constant 0 : index
    %c0_124 = arith.constant 0 : index
    %254 = vector.load %arg11[%c0_123, %c0_124] : memref<64x128xf32, #tpu.memory_space<vmem>>, vector<64x128xf32>
    %cst_125 = arith.constant dense<0.000000e+00> : vector<2x128xf32>
    %255 = tpu.matmul %251, %254, %cst_125 {dimension_numbers = #tpu.dot_dimension_numbers<[1], [0], [0], [1], [0, 0, 1, 1], [], []>} : vector<2x64xf32>, vector<64x128xf32>, vector<2x128xf32> -> vector<2x128xf32>
    %256 = arith.addf %253, %255 : vector<2x128xf32>
    %c0_126 = arith.constant 0 : index
    %c0_127 = arith.constant 0 : index
    %257 = vector.load %arg12[%c0_126, %c0_127] : memref<32x128xf32, #tpu.memory_space<vmem>>, vector<32x128xf32>
    %cst_128 = arith.constant dense<0.000000e+00> : vector<2x128xf32>
    %258 = tpu.matmul %187, %257, %cst_128 {dimension_numbers = #tpu.dot_dimension_numbers<[1], [0], [0], [1], [0, 0, 1, 1], [], []>} : vector<2x32xf32>, vector<32x128xf32>, vector<2x128xf32> -> vector<2x128xf32>
    %259 = arith.addf %256, %258 : vector<2x128xf32>
    %260 = arith.addf %259, %19 : vector<2x128xf32>
    %261 = vector.extract_strided_slice %260 {offsets = [0, 0], sizes = [2, 32], strides = [1, 1]} : vector<2x128xf32> to vector<2x32xf32>
    %262 = arith.negf %261 : vector<2x32xf32>
    %263 = math.exp %262 : vector<2x32xf32>
    %cst_129 = arith.constant 1.000000e+00 : f32
    %264 = vector.broadcast %cst_129 : f32 to vector<2x32xf32>
    %265 = arith.addf %264, %263 : vector<2x32xf32>
    %266 = arith.divf %264, %265 : vector<2x32xf32>
    %267 = vector.extract_strided_slice %260 {offsets = [0, 32], sizes = [2, 32], strides = [1, 1]} : vector<2x128xf32> to vector<2x32xf32>
    %268 = arith.negf %267 : vector<2x32xf32>
    %269 = math.exp %268 : vector<2x32xf32>
    %cst_130 = arith.constant 1.000000e+00 : f32
    %270 = vector.broadcast %cst_130 : f32 to vector<2x32xf32>
    %271 = arith.addf %270, %269 : vector<2x32xf32>
    %272 = arith.divf %270, %271 : vector<2x32xf32>
    %273 = vector.extract_strided_slice %260 {offsets = [0, 64], sizes = [2, 32], strides = [1, 1]} : vector<2x128xf32> to vector<2x32xf32>
    %274 = math.tanh %273 : vector<2x32xf32>
    %275 = vector.extract_strided_slice %260 {offsets = [0, 96], sizes = [2, 32], strides = [1, 1]} : vector<2x128xf32> to vector<2x32xf32>
    %276 = arith.negf %275 : vector<2x32xf32>
    %277 = math.exp %276 : vector<2x32xf32>
    %cst_131 = arith.constant 1.000000e+00 : f32
    %278 = vector.broadcast %cst_131 : f32 to vector<2x32xf32>
    %279 = arith.addf %278, %277 : vector<2x32xf32>
    %280 = arith.divf %278, %279 : vector<2x32xf32>
    %281 = arith.mulf %272, %185 : vector<2x32xf32>
    %282 = arith.mulf %266, %274 : vector<2x32xf32>
    %283 = arith.addf %281, %282 : vector<2x32xf32>
    %284 = math.tanh %283 : vector<2x32xf32>
    %285 = arith.mulf %280, %284 : vector<2x32xf32>
    %c0_132 = arith.constant 0 : index
    %c0_133 = arith.constant 0 : index
    %286 = vector.load %arg14[%c0_132, %c0_133] : memref<32x48xf32, #tpu.memory_space<vmem>>, vector<32x48xf32>
    %cst_134 = arith.constant dense<0.000000e+00> : vector<2x48xf32>
    %287 = tpu.matmul %285, %286, %cst_134 {dimension_numbers = #tpu.dot_dimension_numbers<[1], [0], [0], [1], [0, 0, 1, 1], [], []>} : vector<2x32xf32>, vector<32x48xf32>, vector<2x48xf32> -> vector<2x48xf32>
    %c0_135 = arith.constant 0 : index
    %c0_136 = arith.constant 0 : index
    %288 = vector.load %arg15[%c0_135, %c0_136] : memref<64x48xf32, #tpu.memory_space<vmem>>, vector<64x48xf32>
    %cst_137 = arith.constant dense<0.000000e+00> : vector<2x48xf32>
    %289 = tpu.matmul %251, %288, %cst_137 {dimension_numbers = #tpu.dot_dimension_numbers<[1], [0], [0], [1], [0, 0, 1, 1], [], []>} : vector<2x64xf32>, vector<64x48xf32>, vector<2x48xf32> -> vector<2x48xf32>
    %290 = arith.addf %287, %289 : vector<2x48xf32>
    %c0_138 = arith.constant 0 : index
    %c0_139 = arith.constant 0 : index
    %291 = vector.load %arg16[%c0_138, %c0_139] : memref<32x48xf32, #tpu.memory_space<vmem>>, vector<32x48xf32>
    %cst_140 = arith.constant dense<0.000000e+00> : vector<2x48xf32>
    %292 = tpu.matmul %227, %291, %cst_140 {dimension_numbers = #tpu.dot_dimension_numbers<[1], [0], [0], [1], [0, 0, 1, 1], [], []>} : vector<2x32xf32>, vector<32x48xf32>, vector<2x48xf32> -> vector<2x48xf32>
    %293 = arith.addf %290, %292 : vector<2x48xf32>
    %294 = arith.addf %293, %22 : vector<2x48xf32>
    %295 = arith.index_cast %c2_i32 : i32 to index
    %c0_141 = arith.constant 0 : index
    %c0_142 = arith.constant 0 : index
    %296 = vector.load %arg18[%295, %c0_141, %c0_142] : memref<6x2x48xf32, #tpu.memory_space<vmem>>, vector<1x2x48xf32>
    %297 = vector.shape_cast %296 : vector<1x2x48xf32> to vector<2x48xf32>
    %298 = vector.shape_cast %294 : vector<2x48xf32> to vector<1x2x48xf32>
    tpu.vector_store %arg18[%295, %c0_141, %c0_142], %298 {strides = array<i32>} : memref<6x2x48xf32, #tpu.memory_space<vmem>>, vector<1x2x48xf32>,
    %cst_143 = arith.constant dense<0xFF800000> : vector<2xf32>
    %299 = vector.multi_reduction <maximumf>, %294, %cst_143 [1] : vector<2x48xf32> to vector<2xf32>
    %300 = vector.shape_cast %299 : vector<2xf32> to vector<2x1xf32>
    %301 = vector.broadcast %300 : vector<2x1xf32> to vector<2x48xf32>
    %302 = arith.cmpf oge, %294, %301 : vector<2x48xf32>
    %c48_i32_144 = arith.constant 48 : i32
    %303 = vector.broadcast %c48_i32_144 : i32 to vector<2x48xi32>
    %304 = arith.select %302, %16, %303 : vector<2x48xi1>, vector<2x48xi32>
    %cst_145 = arith.constant dense<2147483647> : vector<2xi32>
    %305 = vector.multi_reduction <minsi>, %304, %cst_145 [1] : vector<2x48xi32> to vector<2xi32>
    %306 = vector.shape_cast %305 : vector<2xi32> to vector<2x1xi32>
    %307 = arith.index_cast %c2_i32 : i32 to index
    %308 = memref.load %arg0[%307] : memref<6xi32, #tpu.memory_space<smem>>
    %c0_i32_146 = arith.constant 0 : i32
    %309 = arith.cmpi sgt, %308, %c0_i32_146 : i32
    %310 = arith.extui %309 : i1 to i32
    %311 = arith.index_cast %c2_i32 : i32 to index
    %c0_147 = arith.constant 0 : index
    %c0_148 = arith.constant 0 : index
    %312 = vector.load %arg1[%311, %c0_147, %c0_148] : memref<6x2x1xi32, #tpu.memory_space<vmem>>, vector<1x2x1xi32>
    %313 = vector.shape_cast %312 : vector<1x2x1xi32> to vector<2x1xi32>
    %314 = vector.broadcast %310 : i32 to vector<2x1xi32>
    %315 = arith.muli %314, %313 : vector<2x1xi32>
    %c1_i32_149 = arith.constant 1 : i32
    %316 = arith.subi %c1_i32_149, %310 : i32
    %317 = vector.broadcast %316 : i32 to vector<2x1xi32>
    %318 = arith.muli %317, %306 : vector<2x1xi32>
    %319 = arith.addi %315, %318 : vector<2x1xi32>
    %c3_i32 = arith.constant 3 : i32
    %320 = vector.broadcast %319 : vector<2x1xi32> to vector<2x48xi32>
    %321 = arith.cmpi eq, %320, %16 : vector<2x48xi32>
    %322 = arith.extui %321 : vector<2x48xi1> to vector<2x48xi32>
    %323 = arith.sitofp %322 : vector<2x48xi32> to vector<2x48xf32>
    %c0_150 = arith.constant 0 : index
    %c0_151 = arith.constant 0 : index
    %324 = vector.load %arg5[%c0_150, %c0_151] : memref<48x32xf32, #tpu.memory_space<vmem>>, vector<48x32xf32>
    %cst_152 = arith.constant dense<0.000000e+00> : vector<2x32xf32>
    %325 = tpu.matmul %323, %324, %cst_152 {dimension_numbers = #tpu.dot_dimension_numbers<[1], [0], [0], [1], [0, 0, 1, 1], [], []>} : vector<2x48xf32>, vector<48x32xf32>, vector<2x32xf32> -> vector<2x32xf32>
    %c0_153 = arith.constant 0 : index
    %c0_154 = arith.constant 0 : index
    %326 = vector.load %arg6[%c0_153, %c0_154] : memref<32x32xf32, #tpu.memory_space<vmem>>, vector<32x32xf32>
    %cst_155 = arith.constant dense<0.000000e+00> : vector<2x32xf32>
    %327 = tpu.matmul %285, %326, %cst_155 {dimension_numbers = #tpu.dot_dimension_numbers<[1], [0], [0], [1], [0, 0, 1, 1], [], []>} : vector<2x32xf32>, vector<32x32xf32>, vector<2x32xf32> -> vector<2x32xf32>
    %328 = vector.shape_cast %327 : vector<2x32xf32> to vector<2x1x32xf32>
    %329 = vector.broadcast %328 : vector<2x1x32xf32> to vector<2x8x32xf32>
    %330 = arith.addf %8, %329 : vector<2x8x32xf32>
    %331 = math.tanh %330 : vector<2x8x32xf32>
    %332 = arith.mulf %331, %12 : vector<2x8x32xf32>
    %cst_156 = arith.constant dense<0.000000e+00> : vector<2x8xf32>
    %333 = vector.multi_reduction <add>, %332, %cst_156 [2] : vector<2x8x32xf32> to vector<2x8xf32>
    %cst_157 = arith.constant -1.000000e+10 : f32
    %334 = vector.broadcast %cst_157 : f32 to vector<2x8xf32>
    %335 = arith.select %15, %334, %333 : vector<2x8xi1>, vector<2x8xf32>
    %cst_158 = arith.constant dense<0xFF800000> : vector<2xf32>
    %336 = vector.multi_reduction <maximumf>, %335, %cst_158 [1] : vector<2x8xf32> to vector<2xf32>
    %337 = vector.shape_cast %336 : vector<2xf32> to vector<2x1xf32>
    %338 = vector.broadcast %337 : vector<2x1xf32> to vector<2x8xf32>
    %339 = arith.subf %335, %338 : vector<2x8xf32>
    %340 = math.exp %339 : vector<2x8xf32>
    %cst_159 = arith.constant dense<0.000000e+00> : vector<2xf32>
    %341 = vector.multi_reduction <add>, %340, %cst_159 [1] : vector<2x8xf32> to vector<2xf32>
    %342 = vector.shape_cast %341 : vector<2xf32> to vector<2x1xf32>
    %343 = tpu.reciprocal %342 {approx = true} : vector<2x1xf32> -> vector<2x1xf32>
    %344 = vector.broadcast %343 : vector<2x1xf32> to vector<2x8xf32>
    %345 = arith.mulf %340, %344 : vector<2x8xf32>
    %346 = vector.shape_cast %345 : vector<2x8xf32> to vector<2x1x8xf32>
    %c0_160 = arith.constant 0 : index
    %c0_161 = arith.constant 0 : index
    %c0_162 = arith.constant 0 : index
    %347 = vector.load %arg3[%c0_160, %c0_161, %c0_162] : memref<2x8x64xf32, #tpu.memory_space<vmem>>, vector<2x8x64xf32>
    "tpu.trace_start"() <{level = 10 : i32, message = "bqs,bsh->bqh"}> : () -> ()
    %cst_163 = arith.constant dense<0.000000e+00> : vector<2x1x64xf32>
    %348 = tpu.matmul %346, %347, %cst_163 {dimension_numbers = #tpu.dot_dimension_numbers<[2], [1], [1], [2], [0, 0, 0, 1, 1, 2], [0], [0]>} : vector<2x1x8xf32>, vector<2x8x64xf32>, vector<2x1x64xf32> -> vector<2x1x64xf32>
    "tpu.trace_stop"() : () -> ()
    %349 = vector.shape_cast %348 : vector<2x1x64xf32> to vector<2x64xf32>
    %c0_164 = arith.constant 0 : index
    %c0_165 = arith.constant 0 : index
    %350 = vector.load %arg10[%c0_164, %c0_165] : memref<32x128xf32, #tpu.memory_space<vmem>>, vector<32x128xf32>
    %cst_166 = arith.constant dense<0.000000e+00> : vector<2x128xf32>
    %351 = tpu.matmul %325, %350, %cst_166 {dimension_numbers = #tpu.dot_dimension_numbers<[1], [0], [0], [1], [0, 0, 1, 1], [], []>} : vector<2x32xf32>, vector<32x128xf32>, vector<2x128xf32> -> vector<2x128xf32>
    %c0_167 = arith.constant 0 : index
    %c0_168 = arith.constant 0 : index
    %352 = vector.load %arg11[%c0_167, %c0_168] : memref<64x128xf32, #tpu.memory_space<vmem>>, vector<64x128xf32>
    %cst_169 = arith.constant dense<0.000000e+00> : vector<2x128xf32>
    %353 = tpu.matmul %349, %352, %cst_169 {dimension_numbers = #tpu.dot_dimension_numbers<[1], [0], [0], [1], [0, 0, 1, 1], [], []>} : vector<2x64xf32>, vector<64x128xf32>, vector<2x128xf32> -> vector<2x128xf32>
    %354 = arith.addf %351, %353 : vector<2x128xf32>
    %c0_170 = arith.constant 0 : index
    %c0_171 = arith.constant 0 : index
    %355 = vector.load %arg12[%c0_170, %c0_171] : memref<32x128xf32, #tpu.memory_space<vmem>>, vector<32x128xf32>
    %cst_172 = arith.constant dense<0.000000e+00> : vector<2x128xf32>
    %356 = tpu.matmul %285, %355, %cst_172 {dimension_numbers = #tpu.dot_dimension_numbers<[1], [0], [0], [1], [0, 0, 1, 1], [], []>} : vector<2x32xf32>, vector<32x128xf32>, vector<2x128xf32> -> vector<2x128xf32>
    %357 = arith.addf %354, %356 : vector<2x128xf32>
    %358 = arith.addf %357, %19 : vector<2x128xf32>
    %359 = vector.extract_strided_slice %358 {offsets = [0, 0], sizes = [2, 32], strides = [1, 1]} : vector<2x128xf32> to vector<2x32xf32>
    %360 = arith.negf %359 : vector<2x32xf32>
    %361 = math.exp %360 : vector<2x32xf32>
    %cst_173 = arith.constant 1.000000e+00 : f32
    %362 = vector.broadcast %cst_173 : f32 to vector<2x32xf32>
    %363 = arith.addf %362, %361 : vector<2x32xf32>
    %364 = arith.divf %362, %363 : vector<2x32xf32>
    %365 = vector.extract_strided_slice %358 {offsets = [0, 32], sizes = [2, 32], strides = [1, 1]} : vector<2x128xf32> to vector<2x32xf32>
    %366 = arith.negf %365 : vector<2x32xf32>
    %367 = math.exp %366 : vector<2x32xf32>
    %cst_174 = arith.constant 1.000000e+00 : f32
    %368 = vector.broadcast %cst_174 : f32 to vector<2x32xf32>
    %369 = arith.addf %368, %367 : vector<2x32xf32>
    %370 = arith.divf %368, %369 : vector<2x32xf32>
    %371 = vector.extract_strided_slice %358 {offsets = [0, 64], sizes = [2, 32], strides = [1, 1]} : vector<2x128xf32> to vector<2x32xf32>
    %372 = math.tanh %371 : vector<2x32xf32>
    %373 = vector.extract_strided_slice %358 {offsets = [0, 96], sizes = [2, 32], strides = [1, 1]} : vector<2x128xf32> to vector<2x32xf32>
    %374 = arith.negf %373 : vector<2x32xf32>
    %375 = math.exp %374 : vector<2x32xf32>
    %cst_175 = arith.constant 1.000000e+00 : f32
    %376 = vector.broadcast %cst_175 : f32 to vector<2x32xf32>
    %377 = arith.addf %376, %375 : vector<2x32xf32>
    %378 = arith.divf %376, %377 : vector<2x32xf32>
    %379 = arith.mulf %370, %283 : vector<2x32xf32>
    %380 = arith.mulf %364, %372 : vector<2x32xf32>
    %381 = arith.addf %379, %380 : vector<2x32xf32>
    %382 = math.tanh %381 : vector<2x32xf32>
    %383 = arith.mulf %378, %382 : vector<2x32xf32>
    %c0_176 = arith.constant 0 : index
    %c0_177 = arith.constant 0 : index
    %384 = vector.load %arg14[%c0_176, %c0_177] : memref<32x48xf32, #tpu.memory_space<vmem>>, vector<32x48xf32>
    %cst_178 = arith.constant dense<0.000000e+00> : vector<2x48xf32>
    %385 = tpu.matmul %383, %384, %cst_178 {dimension_numbers = #tpu.dot_dimension_numbers<[1], [0], [0], [1], [0, 0, 1, 1], [], []>} : vector<2x32xf32>, vector<32x48xf32>, vector<2x48xf32> -> vector<2x48xf32>
    %c0_179 = arith.constant 0 : index
    %c0_180 = arith.constant 0 : index
    %386 = vector.load %arg15[%c0_179, %c0_180] : memref<64x48xf32, #tpu.memory_space<vmem>>, vector<64x48xf32>
    %cst_181 = arith.constant dense<0.000000e+00> : vector<2x48xf32>
    %387 = tpu.matmul %349, %386, %cst_181 {dimension_numbers = #tpu.dot_dimension_numbers<[1], [0], [0], [1], [0, 0, 1, 1], [], []>} : vector<2x64xf32>, vector<64x48xf32>, vector<2x48xf32> -> vector<2x48xf32>
    %388 = arith.addf %385, %387 : vector<2x48xf32>
    %c0_182 = arith.constant 0 : index
    %c0_183 = arith.constant 0 : index
    %389 = vector.load %arg16[%c0_182, %c0_183] : memref<32x48xf32, #tpu.memory_space<vmem>>, vector<32x48xf32>
    %cst_184 = arith.constant dense<0.000000e+00> : vector<2x48xf32>
    %390 = tpu.matmul %325, %389, %cst_184 {dimension_numbers = #tpu.dot_dimension_numbers<[1], [0], [0], [1], [0, 0, 1, 1], [], []>} : vector<2x32xf32>, vector<32x48xf32>, vector<2x48xf32> -> vector<2x48xf32>
    %391 = arith.addf %388, %390 : vector<2x48xf32>
    %392 = arith.addf %391, %22 : vector<2x48xf32>
    %393 = arith.index_cast %c3_i32 : i32 to index
    %c0_185 = arith.constant 0 : index
    %c0_186 = arith.constant 0 : index
    %394 = vector.load %arg18[%393, %c0_185, %c0_186] : memref<6x2x48xf32, #tpu.memory_space<vmem>>, vector<1x2x48xf32>
    %395 = vector.shape_cast %394 : vector<1x2x48xf32> to vector<2x48xf32>
    %396 = vector.shape_cast %392 : vector<2x48xf32> to vector<1x2x48xf32>
    tpu.vector_store %arg18[%393, %c0_185, %c0_186], %396 {strides = array<i32>} : memref<6x2x48xf32, #tpu.memory_space<vmem>>, vector<1x2x48xf32>,
    %cst_187 = arith.constant dense<0xFF800000> : vector<2xf32>
    %397 = vector.multi_reduction <maximumf>, %392, %cst_187 [1] : vector<2x48xf32> to vector<2xf32>
    %398 = vector.shape_cast %397 : vector<2xf32> to vector<2x1xf32>
    %399 = vector.broadcast %398 : vector<2x1xf32> to vector<2x48xf32>
    %400 = arith.cmpf oge, %392, %399 : vector<2x48xf32>
    %c48_i32_188 = arith.constant 48 : i32
    %401 = vector.broadcast %c48_i32_188 : i32 to vector<2x48xi32>
    %402 = arith.select %400, %16, %401 : vector<2x48xi1>, vector<2x48xi32>
    %cst_189 = arith.constant dense<2147483647> : vector<2xi32>
    %403 = vector.multi_reduction <minsi>, %402, %cst_189 [1] : vector<2x48xi32> to vector<2xi32>
    %404 = vector.shape_cast %403 : vector<2xi32> to vector<2x1xi32>
    %405 = arith.index_cast %c3_i32 : i32 to index
    %406 = memref.load %arg0[%405] : memref<6xi32, #tpu.memory_space<smem>>
    %c0_i32_190 = arith.constant 0 : i32
    %407 = arith.cmpi sgt, %406, %c0_i32_190 : i32
    %408 = arith.extui %407 : i1 to i32
    %409 = arith.index_cast %c3_i32 : i32 to index
    %c0_191 = arith.constant 0 : index
    %c0_192 = arith.constant 0 : index
    %410 = vector.load %arg1[%409, %c0_191, %c0_192] : memref<6x2x1xi32, #tpu.memory_space<vmem>>, vector<1x2x1xi32>
    %411 = vector.shape_cast %410 : vector<1x2x1xi32> to vector<2x1xi32>
    %412 = vector.broadcast %408 : i32 to vector<2x1xi32>
    %413 = arith.muli %412, %411 : vector<2x1xi32>
    %c1_i32_193 = arith.constant 1 : i32
    %414 = arith.subi %c1_i32_193, %408 : i32
    %415 = vector.broadcast %414 : i32 to vector<2x1xi32>
    %416 = arith.muli %415, %404 : vector<2x1xi32>
    %417 = arith.addi %413, %416 : vector<2x1xi32>
    %c4_i32 = arith.constant 4 : i32
    %418 = vector.broadcast %417 : vector<2x1xi32> to vector<2x48xi32>
    %419 = arith.cmpi eq, %418, %16 : vector<2x48xi32>
    %420 = arith.extui %419 : vector<2x48xi1> to vector<2x48xi32>
    %421 = arith.sitofp %420 : vector<2x48xi32> to vector<2x48xf32>
    %c0_194 = arith.constant 0 : index
    %c0_195 = arith.constant 0 : index
    %422 = vector.load %arg5[%c0_194, %c0_195] : memref<48x32xf32, #tpu.memory_space<vmem>>, vector<48x32xf32>
    %cst_196 = arith.constant dense<0.000000e+00> : vector<2x32xf32>
    %423 = tpu.matmul %421, %422, %cst_196 {dimension_numbers = #tpu.dot_dimension_numbers<[1], [0], [0], [1], [0, 0, 1, 1], [], []>} : vector<2x48xf32>, vector<48x32xf32>, vector<2x32xf32> -> vector<2x32xf32>
    %c0_197 = arith.constant 0 : index
    %c0_198 = arith.constant 0 : index
    %424 = vector.load %arg6[%c0_197, %c0_198] : memref<32x32xf32, #tpu.memory_space<vmem>>, vector<32x32xf32>
    %cst_199 = arith.constant dense<0.000000e+00> : vector<2x32xf32>
    %425 = tpu.matmul %383, %424, %cst_199 {dimension_numbers = #tpu.dot_dimension_numbers<[1], [0], [0], [1], [0, 0, 1, 1], [], []>} : vector<2x32xf32>, vector<32x32xf32>, vector<2x32xf32> -> vector<2x32xf32>
    %426 = vector.shape_cast %425 : vector<2x32xf32> to vector<2x1x32xf32>
    %427 = vector.broadcast %426 : vector<2x1x32xf32> to vector<2x8x32xf32>
    %428 = arith.addf %8, %427 : vector<2x8x32xf32>
    %429 = math.tanh %428 : vector<2x8x32xf32>
    %430 = arith.mulf %429, %12 : vector<2x8x32xf32>
    %cst_200 = arith.constant dense<0.000000e+00> : vector<2x8xf32>
    %431 = vector.multi_reduction <add>, %430, %cst_200 [2] : vector<2x8x32xf32> to vector<2x8xf32>
    %cst_201 = arith.constant -1.000000e+10 : f32
    %432 = vector.broadcast %cst_201 : f32 to vector<2x8xf32>
    %433 = arith.select %15, %432, %431 : vector<2x8xi1>, vector<2x8xf32>
    %cst_202 = arith.constant dense<0xFF800000> : vector<2xf32>
    %434 = vector.multi_reduction <maximumf>, %433, %cst_202 [1] : vector<2x8xf32> to vector<2xf32>
    %435 = vector.shape_cast %434 : vector<2xf32> to vector<2x1xf32>
    %436 = vector.broadcast %435 : vector<2x1xf32> to vector<2x8xf32>
    %437 = arith.subf %433, %436 : vector<2x8xf32>
    %438 = math.exp %437 : vector<2x8xf32>
    %cst_203 = arith.constant dense<0.000000e+00> : vector<2xf32>
    %439 = vector.multi_reduction <add>, %438, %cst_203 [1] : vector<2x8xf32> to vector<2xf32>
    %440 = vector.shape_cast %439 : vector<2xf32> to vector<2x1xf32>
    %441 = tpu.reciprocal %440 {approx = true} : vector<2x1xf32> -> vector<2x1xf32>
    %442 = vector.broadcast %441 : vector<2x1xf32> to vector<2x8xf32>
    %443 = arith.mulf %438, %442 : vector<2x8xf32>
    %444 = vector.shape_cast %443 : vector<2x8xf32> to vector<2x1x8xf32>
    %c0_204 = arith.constant 0 : index
    %c0_205 = arith.constant 0 : index
    %c0_206 = arith.constant 0 : index
    %445 = vector.load %arg3[%c0_204, %c0_205, %c0_206] : memref<2x8x64xf32, #tpu.memory_space<vmem>>, vector<2x8x64xf32>
    "tpu.trace_start"() <{level = 10 : i32, message = "bqs,bsh->bqh"}> : () -> ()
    %cst_207 = arith.constant dense<0.000000e+00> : vector<2x1x64xf32>
    %446 = tpu.matmul %444, %445, %cst_207 {dimension_numbers = #tpu.dot_dimension_numbers<[2], [1], [1], [2], [0, 0, 0, 1, 1, 2], [0], [0]>} : vector<2x1x8xf32>, vector<2x8x64xf32>, vector<2x1x64xf32> -> vector<2x1x64xf32>
    "tpu.trace_stop"() : () -> ()
    %447 = vector.shape_cast %446 : vector<2x1x64xf32> to vector<2x64xf32>
    %c0_208 = arith.constant 0 : index
    %c0_209 = arith.constant 0 : index
    %448 = vector.load %arg10[%c0_208, %c0_209] : memref<32x128xf32, #tpu.memory_space<vmem>>, vector<32x128xf32>
    %cst_210 = arith.constant dense<0.000000e+00> : vector<2x128xf32>
    %449 = tpu.matmul %423, %448, %cst_210 {dimension_numbers = #tpu.dot_dimension_numbers<[1], [0], [0], [1], [0, 0, 1, 1], [], []>} : vector<2x32xf32>, vector<32x128xf32>, vector<2x128xf32> -> vector<2x128xf32>
    %c0_211 = arith.constant 0 : index
    %c0_212 = arith.constant 0 : index
    %450 = vector.load %arg11[%c0_211, %c0_212] : memref<64x128xf32, #tpu.memory_space<vmem>>, vector<64x128xf32>
    %cst_213 = arith.constant dense<0.000000e+00> : vector<2x128xf32>
    %451 = tpu.matmul %447, %450, %cst_213 {dimension_numbers = #tpu.dot_dimension_numbers<[1], [0], [0], [1], [0, 0, 1, 1], [], []>} : vector<2x64xf32>, vector<64x128xf32>, vector<2x128xf32> -> vector<2x128xf32>
    %452 = arith.addf %449, %451 : vector<2x128xf32>
    %c0_214 = arith.constant 0 : index
    %c0_215 = arith.constant 0 : index
    %453 = vector.load %arg12[%c0_214, %c0_215] : memref<32x128xf32, #tpu.memory_space<vmem>>, vector<32x128xf32>
    %cst_216 = arith.constant dense<0.000000e+00> : vector<2x128xf32>
    %454 = tpu.matmul %383, %453, %cst_216 {dimension_numbers = #tpu.dot_dimension_numbers<[1], [0], [0], [1], [0, 0, 1, 1], [], []>} : vector<2x32xf32>, vector<32x128xf32>, vector<2x128xf32> -> vector<2x128xf32>
    %455 = arith.addf %452, %454 : vector<2x128xf32>
    %456 = arith.addf %455, %19 : vector<2x128xf32>
    %457 = vector.extract_strided_slice %456 {offsets = [0, 0], sizes = [2, 32], strides = [1, 1]} : vector<2x128xf32> to vector<2x32xf32>
    %458 = arith.negf %457 : vector<2x32xf32>
    %459 = math.exp %458 : vector<2x32xf32>
    %cst_217 = arith.constant 1.000000e+00 : f32
    %460 = vector.broadcast %cst_217 : f32 to vector<2x32xf32>
    %461 = arith.addf %460, %459 : vector<2x32xf32>
    %462 = arith.divf %460, %461 : vector<2x32xf32>
    %463 = vector.extract_strided_slice %456 {offsets = [0, 32], sizes = [2, 32], strides = [1, 1]} : vector<2x128xf32> to vector<2x32xf32>
    %464 = arith.negf %463 : vector<2x32xf32>
    %465 = math.exp %464 : vector<2x32xf32>
    %cst_218 = arith.constant 1.000000e+00 : f32
    %466 = vector.broadcast %cst_218 : f32 to vector<2x32xf32>
    %467 = arith.addf %466, %465 : vector<2x32xf32>
    %468 = arith.divf %466, %467 : vector<2x32xf32>
    %469 = vector.extract_strided_slice %456 {offsets = [0, 64], sizes = [2, 32], strides = [1, 1]} : vector<2x128xf32> to vector<2x32xf32>
    %470 = math.tanh %469 : vector<2x32xf32>
    %471 = vector.extract_strided_slice %456 {offsets = [0, 96], sizes = [2, 32], strides = [1, 1]} : vector<2x128xf32> to vector<2x32xf32>
    %472 = arith.negf %471 : vector<2x32xf32>
    %473 = math.exp %472 : vector<2x32xf32>
    %cst_219 = arith.constant 1.000000e+00 : f32
    %474 = vector.broadcast %cst_219 : f32 to vector<2x32xf32>
    %475 = arith.addf %474, %473 : vector<2x32xf32>
    %476 = arith.divf %474, %475 : vector<2x32xf32>
    %477 = arith.mulf %468, %381 : vector<2x32xf32>
    %478 = arith.mulf %462, %470 : vector<2x32xf32>
    %479 = arith.addf %477, %478 : vector<2x32xf32>
    %480 = math.tanh %479 : vector<2x32xf32>
    %481 = arith.mulf %476, %480 : vector<2x32xf32>
    %c0_220 = arith.constant 0 : index
    %c0_221 = arith.constant 0 : index
    %482 = vector.load %arg14[%c0_220, %c0_221] : memref<32x48xf32, #tpu.memory_space<vmem>>, vector<32x48xf32>
    %cst_222 = arith.constant dense<0.000000e+00> : vector<2x48xf32>
    %483 = tpu.matmul %481, %482, %cst_222 {dimension_numbers = #tpu.dot_dimension_numbers<[1], [0], [0], [1], [0, 0, 1, 1], [], []>} : vector<2x32xf32>, vector<32x48xf32>, vector<2x48xf32> -> vector<2x48xf32>
    %c0_223 = arith.constant 0 : index
    %c0_224 = arith.constant 0 : index
    %484 = vector.load %arg15[%c0_223, %c0_224] : memref<64x48xf32, #tpu.memory_space<vmem>>, vector<64x48xf32>
    %cst_225 = arith.constant dense<0.000000e+00> : vector<2x48xf32>
    %485 = tpu.matmul %447, %484, %cst_225 {dimension_numbers = #tpu.dot_dimension_numbers<[1], [0], [0], [1], [0, 0, 1, 1], [], []>} : vector<2x64xf32>, vector<64x48xf32>, vector<2x48xf32> -> vector<2x48xf32>
    %486 = arith.addf %483, %485 : vector<2x48xf32>
    %c0_226 = arith.constant 0 : index
    %c0_227 = arith.constant 0 : index
    %487 = vector.load %arg16[%c0_226, %c0_227] : memref<32x48xf32, #tpu.memory_space<vmem>>, vector<32x48xf32>
    %cst_228 = arith.constant dense<0.000000e+00> : vector<2x48xf32>
    %488 = tpu.matmul %423, %487, %cst_228 {dimension_numbers = #tpu.dot_dimension_numbers<[1], [0], [0], [1], [0, 0, 1, 1], [], []>} : vector<2x32xf32>, vector<32x48xf32>, vector<2x48xf32> -> vector<2x48xf32>
    %489 = arith.addf %486, %488 : vector<2x48xf32>
    %490 = arith.addf %489, %22 : vector<2x48xf32>
    %491 = arith.index_cast %c4_i32 : i32 to index
    %c0_229 = arith.constant 0 : index
    %c0_230 = arith.constant 0 : index
    %492 = vector.load %arg18[%491, %c0_229, %c0_230] : memref<6x2x48xf32, #tpu.memory_space<vmem>>, vector<1x2x48xf32>
    %493 = vector.shape_cast %492 : vector<1x2x48xf32> to vector<2x48xf32>
    %494 = vector.shape_cast %490 : vector<2x48xf32> to vector<1x2x48xf32>
    tpu.vector_store %arg18[%491, %c0_229, %c0_230], %494 {strides = array<i32>} : memref<6x2x48xf32, #tpu.memory_space<vmem>>, vector<1x2x48xf32>,
    %cst_231 = arith.constant dense<0xFF800000> : vector<2xf32>
    %495 = vector.multi_reduction <maximumf>, %490, %cst_231 [1] : vector<2x48xf32> to vector<2xf32>
    %496 = vector.shape_cast %495 : vector<2xf32> to vector<2x1xf32>
    %497 = vector.broadcast %496 : vector<2x1xf32> to vector<2x48xf32>
    %498 = arith.cmpf oge, %490, %497 : vector<2x48xf32>
    %c48_i32_232 = arith.constant 48 : i32
    %499 = vector.broadcast %c48_i32_232 : i32 to vector<2x48xi32>
    %500 = arith.select %498, %16, %499 : vector<2x48xi1>, vector<2x48xi32>
    %cst_233 = arith.constant dense<2147483647> : vector<2xi32>
    %501 = vector.multi_reduction <minsi>, %500, %cst_233 [1] : vector<2x48xi32> to vector<2xi32>
    %502 = vector.shape_cast %501 : vector<2xi32> to vector<2x1xi32>
    %503 = arith.index_cast %c4_i32 : i32 to index
    %504 = memref.load %arg0[%503] : memref<6xi32, #tpu.memory_space<smem>>
    %c0_i32_234 = arith.constant 0 : i32
    %505 = arith.cmpi sgt, %504, %c0_i32_234 : i32
    %506 = arith.extui %505 : i1 to i32
    %507 = arith.index_cast %c4_i32 : i32 to index
    %c0_235 = arith.constant 0 : index
    %c0_236 = arith.constant 0 : index
    %508 = vector.load %arg1[%507, %c0_235, %c0_236] : memref<6x2x1xi32, #tpu.memory_space<vmem>>, vector<1x2x1xi32>
    %509 = vector.shape_cast %508 : vector<1x2x1xi32> to vector<2x1xi32>
    %510 = vector.broadcast %506 : i32 to vector<2x1xi32>
    %511 = arith.muli %510, %509 : vector<2x1xi32>
    %c1_i32_237 = arith.constant 1 : i32
    %512 = arith.subi %c1_i32_237, %506 : i32
    %513 = vector.broadcast %512 : i32 to vector<2x1xi32>
    %514 = arith.muli %513, %502 : vector<2x1xi32>
    %515 = arith.addi %511, %514 : vector<2x1xi32>
    %c5_i32 = arith.constant 5 : i32
    %516 = vector.broadcast %515 : vector<2x1xi32> to vector<2x48xi32>
    %517 = arith.cmpi eq, %516, %16 : vector<2x48xi32>
    %518 = arith.extui %517 : vector<2x48xi1> to vector<2x48xi32>
    %519 = arith.sitofp %518 : vector<2x48xi32> to vector<2x48xf32>
    %c0_238 = arith.constant 0 : index
    %c0_239 = arith.constant 0 : index
    %520 = vector.load %arg5[%c0_238, %c0_239] : memref<48x32xf32, #tpu.memory_space<vmem>>, vector<48x32xf32>
    %cst_240 = arith.constant dense<0.000000e+00> : vector<2x32xf32>
    %521 = tpu.matmul %519, %520, %cst_240 {dimension_numbers = #tpu.dot_dimension_numbers<[1], [0], [0], [1], [0, 0, 1, 1], [], []>} : vector<2x48xf32>, vector<48x32xf32>, vector<2x32xf32> -> vector<2x32xf32>
    %c0_241 = arith.constant 0 : index
    %c0_242 = arith.constant 0 : index
    %522 = vector.load %arg6[%c0_241, %c0_242] : memref<32x32xf32, #tpu.memory_space<vmem>>, vector<32x32xf32>
    %cst_243 = arith.constant dense<0.000000e+00> : vector<2x32xf32>
    %523 = tpu.matmul %481, %522, %cst_243 {dimension_numbers = #tpu.dot_dimension_numbers<[1], [0], [0], [1], [0, 0, 1, 1], [], []>} : vector<2x32xf32>, vector<32x32xf32>, vector<2x32xf32> -> vector<2x32xf32>
    %524 = vector.shape_cast %523 : vector<2x32xf32> to vector<2x1x32xf32>
    %525 = vector.broadcast %524 : vector<2x1x32xf32> to vector<2x8x32xf32>
    %526 = arith.addf %8, %525 : vector<2x8x32xf32>
    %527 = math.tanh %526 : vector<2x8x32xf32>
    %528 = arith.mulf %527, %12 : vector<2x8x32xf32>
    %cst_244 = arith.constant dense<0.000000e+00> : vector<2x8xf32>
    %529 = vector.multi_reduction <add>, %528, %cst_244 [2] : vector<2x8x32xf32> to vector<2x8xf32>
    %cst_245 = arith.constant -1.000000e+10 : f32
    %530 = vector.broadcast %cst_245 : f32 to vector<2x8xf32>
    %531 = arith.select %15, %530, %529 : vector<2x8xi1>, vector<2x8xf32>
    %cst_246 = arith.constant dense<0xFF800000> : vector<2xf32>
    %532 = vector.multi_reduction <maximumf>, %531, %cst_246 [1] : vector<2x8xf32> to vector<2xf32>
    %533 = vector.shape_cast %532 : vector<2xf32> to vector<2x1xf32>
    %534 = vector.broadcast %533 : vector<2x1xf32> to vector<2x8xf32>
    %535 = arith.subf %531, %534 : vector<2x8xf32>
    %536 = math.exp %535 : vector<2x8xf32>
    %cst_247 = arith.constant dense<0.000000e+00> : vector<2xf32>
    %537 = vector.multi_reduction <add>, %536, %cst_247 [1] : vector<2x8xf32> to vector<2xf32>
    %538 = vector.shape_cast %537 : vector<2xf32> to vector<2x1xf32>
    %539 = tpu.reciprocal %538 {approx = true} : vector<2x1xf32> -> vector<2x1xf32>
    %540 = vector.broadcast %539 : vector<2x1xf32> to vector<2x8xf32>
    %541 = arith.mulf %536, %540 : vector<2x8xf32>
    %542 = vector.shape_cast %541 : vector<2x8xf32> to vector<2x1x8xf32>
    %c0_248 = arith.constant 0 : index
    %c0_249 = arith.constant 0 : index
    %c0_250 = arith.constant 0 : index
    %543 = vector.load %arg3[%c0_248, %c0_249, %c0_250] : memref<2x8x64xf32, #tpu.memory_space<vmem>>, vector<2x8x64xf32>
    "tpu.trace_start"() <{level = 10 : i32, message = "bqs,bsh->bqh"}> : () -> ()
    %cst_251 = arith.constant dense<0.000000e+00> : vector<2x1x64xf32>
    %544 = tpu.matmul %542, %543, %cst_251 {dimension_numbers = #tpu.dot_dimension_numbers<[2], [1], [1], [2], [0, 0, 0, 1, 1, 2], [0], [0]>} : vector<2x1x8xf32>, vector<2x8x64xf32>, vector<2x1x64xf32> -> vector<2x1x64xf32>
    "tpu.trace_stop"() : () -> ()
    %545 = vector.shape_cast %544 : vector<2x1x64xf32> to vector<2x64xf32>
    %c0_252 = arith.constant 0 : index
    %c0_253 = arith.constant 0 : index
    %546 = vector.load %arg10[%c0_252, %c0_253] : memref<32x128xf32, #tpu.memory_space<vmem>>, vector<32x128xf32>
    %cst_254 = arith.constant dense<0.000000e+00> : vector<2x128xf32>
    %547 = tpu.matmul %521, %546, %cst_254 {dimension_numbers = #tpu.dot_dimension_numbers<[1], [0], [0], [1], [0, 0, 1, 1], [], []>} : vector<2x32xf32>, vector<32x128xf32>, vector<2x128xf32> -> vector<2x128xf32>
    %c0_255 = arith.constant 0 : index
    %c0_256 = arith.constant 0 : index
    %548 = vector.load %arg11[%c0_255, %c0_256] : memref<64x128xf32, #tpu.memory_space<vmem>>, vector<64x128xf32>
    %cst_257 = arith.constant dense<0.000000e+00> : vector<2x128xf32>
    %549 = tpu.matmul %545, %548, %cst_257 {dimension_numbers = #tpu.dot_dimension_numbers<[1], [0], [0], [1], [0, 0, 1, 1], [], []>} : vector<2x64xf32>, vector<64x128xf32>, vector<2x128xf32> -> vector<2x128xf32>
    %550 = arith.addf %547, %549 : vector<2x128xf32>
    %c0_258 = arith.constant 0 : index
    %c0_259 = arith.constant 0 : index
    %551 = vector.load %arg12[%c0_258, %c0_259] : memref<32x128xf32, #tpu.memory_space<vmem>>, vector<32x128xf32>
    %cst_260 = arith.constant dense<0.000000e+00> : vector<2x128xf32>
    %552 = tpu.matmul %481, %551, %cst_260 {dimension_numbers = #tpu.dot_dimension_numbers<[1], [0], [0], [1], [0, 0, 1, 1], [], []>} : vector<2x32xf32>, vector<32x128xf32>, vector<2x128xf32> -> vector<2x128xf32>
    %553 = arith.addf %550, %552 : vector<2x128xf32>
    %554 = arith.addf %553, %19 : vector<2x128xf32>
    %555 = vector.extract_strided_slice %554 {offsets = [0, 0], sizes = [2, 32], strides = [1, 1]} : vector<2x128xf32> to vector<2x32xf32>
    %556 = arith.negf %555 : vector<2x32xf32>
    %557 = math.exp %556 : vector<2x32xf32>
    %cst_261 = arith.constant 1.000000e+00 : f32
    %558 = vector.broadcast %cst_261 : f32 to vector<2x32xf32>
    %559 = arith.addf %558, %557 : vector<2x32xf32>
    %560 = arith.divf %558, %559 : vector<2x32xf32>
    %561 = vector.extract_strided_slice %554 {offsets = [0, 32], sizes = [2, 32], strides = [1, 1]} : vector<2x128xf32> to vector<2x32xf32>
    %562 = arith.negf %561 : vector<2x32xf32>
    %563 = math.exp %562 : vector<2x32xf32>
    %cst_262 = arith.constant 1.000000e+00 : f32
    %564 = vector.broadcast %cst_262 : f32 to vector<2x32xf32>
    %565 = arith.addf %564, %563 : vector<2x32xf32>
    %566 = arith.divf %564, %565 : vector<2x32xf32>
    %567 = vector.extract_strided_slice %554 {offsets = [0, 64], sizes = [2, 32], strides = [1, 1]} : vector<2x128xf32> to vector<2x32xf32>
    %568 = math.tanh %567 : vector<2x32xf32>
    %569 = vector.extract_strided_slice %554 {offsets = [0, 96], sizes = [2, 32], strides = [1, 1]} : vector<2x128xf32> to vector<2x32xf32>
    %570 = arith.negf %569 : vector<2x32xf32>
    %571 = math.exp %570 : vector<2x32xf32>
    %cst_263 = arith.constant 1.000000e+00 : f32
    %572 = vector.broadcast %cst_263 : f32 to vector<2x32xf32>
    %573 = arith.addf %572, %571 : vector<2x32xf32>
    %574 = arith.divf %572, %573 : vector<2x32xf32>
    %575 = arith.mulf %566, %479 : vector<2x32xf32>
    %576 = arith.mulf %560, %568 : vector<2x32xf32>
    %577 = arith.addf %575, %576 : vector<2x32xf32>
    %578 = math.tanh %577 : vector<2x32xf32>
    %579 = arith.mulf %574, %578 : vector<2x32xf32>
    %c0_264 = arith.constant 0 : index
    %c0_265 = arith.constant 0 : index
    %580 = vector.load %arg14[%c0_264, %c0_265] : memref<32x48xf32, #tpu.memory_space<vmem>>, vector<32x48xf32>
    %cst_266 = arith.constant dense<0.000000e+00> : vector<2x48xf32>
    %581 = tpu.matmul %579, %580, %cst_266 {dimension_numbers = #tpu.dot_dimension_numbers<[1], [0], [0], [1], [0, 0, 1, 1], [], []>} : vector<2x32xf32>, vector<32x48xf32>, vector<2x48xf32> -> vector<2x48xf32>
    %c0_267 = arith.constant 0 : index
    %c0_268 = arith.constant 0 : index
    %582 = vector.load %arg15[%c0_267, %c0_268] : memref<64x48xf32, #tpu.memory_space<vmem>>, vector<64x48xf32>
    %cst_269 = arith.constant dense<0.000000e+00> : vector<2x48xf32>
    %583 = tpu.matmul %545, %582, %cst_269 {dimension_numbers = #tpu.dot_dimension_numbers<[1], [0], [0], [1], [0, 0, 1, 1], [], []>} : vector<2x64xf32>, vector<64x48xf32>, vector<2x48xf32> -> vector<2x48xf32>
    %584 = arith.addf %581, %583 : vector<2x48xf32>
    %c0_270 = arith.constant 0 : index
    %c0_271 = arith.constant 0 : index
    %585 = vector.load %arg16[%c0_270, %c0_271] : memref<32x48xf32, #tpu.memory_space<vmem>>, vector<32x48xf32>
    %cst_272 = arith.constant dense<0.000000e+00> : vector<2x48xf32>
    %586 = tpu.matmul %521, %585, %cst_272 {dimension_numbers = #tpu.dot_dimension_numbers<[1], [0], [0], [1], [0, 0, 1, 1], [], []>} : vector<2x32xf32>, vector<32x48xf32>, vector<2x48xf32> -> vector<2x48xf32>
    %587 = arith.addf %584, %586 : vector<2x48xf32>
    %588 = arith.addf %587, %22 : vector<2x48xf32>
    %589 = arith.index_cast %c5_i32 : i32 to index
    %c0_273 = arith.constant 0 : index
    %c0_274 = arith.constant 0 : index
    %590 = vector.load %arg18[%589, %c0_273, %c0_274] : memref<6x2x48xf32, #tpu.memory_space<vmem>>, vector<1x2x48xf32>
    %591 = vector.shape_cast %590 : vector<1x2x48xf32> to vector<2x48xf32>
    %592 = vector.shape_cast %588 : vector<2x48xf32> to vector<1x2x48xf32>
    tpu.vector_store %arg18[%589, %c0_273, %c0_274], %592 {strides = array<i32>} : memref<6x2x48xf32, #tpu.memory_space<vmem>>, vector<1x2x48xf32>,
    %cst_275 = arith.constant dense<0xFF800000> : vector<2xf32>
    %593 = vector.multi_reduction <maximumf>, %588, %cst_275 [1] : vector<2x48xf32> to vector<2xf32>
    %594 = vector.shape_cast %593 : vector<2xf32> to vector<2x1xf32>
    %595 = vector.broadcast %594 : vector<2x1xf32> to vector<2x48xf32>
    %596 = arith.cmpf oge, %588, %595 : vector<2x48xf32>
    %c48_i32_276 = arith.constant 48 : i32
    %597 = vector.broadcast %c48_i32_276 : i32 to vector<2x48xi32>
    %598 = arith.select %596, %16, %597 : vector<2x48xi1>, vector<2x48xi32>
    %cst_277 = arith.constant dense<2147483647> : vector<2xi32>
    %599 = vector.multi_reduction <minsi>, %598, %cst_277 [1] : vector<2x48xi32> to vector<2xi32>
    %600 = vector.shape_cast %599 : vector<2xi32> to vector<2x1xi32>
    %601 = arith.index_cast %c5_i32 : i32 to index
    %602 = memref.load %arg0[%601] : memref<6xi32, #tpu.memory_space<smem>>
    %c0_i32_278 = arith.constant 0 : i32
    %603 = arith.cmpi sgt, %602, %c0_i32_278 : i32
    %604 = arith.extui %603 : i1 to i32
    %605 = arith.index_cast %c5_i32 : i32 to index
    %c0_279 = arith.constant 0 : index
    %c0_280 = arith.constant 0 : index
    %606 = vector.load %arg1[%605, %c0_279, %c0_280] : memref<6x2x1xi32, #tpu.memory_space<vmem>>, vector<1x2x1xi32>
    %607 = vector.shape_cast %606 : vector<1x2x1xi32> to vector<2x1xi32>
    %608 = vector.broadcast %604 : i32 to vector<2x1xi32>
    %609 = arith.muli %608, %607 : vector<2x1xi32>
    %c1_i32_281 = arith.constant 1 : i32
    %610 = arith.subi %c1_i32_281, %604 : i32
    %611 = vector.broadcast %610 : i32 to vector<2x1xi32>
    %612 = arith.muli %611, %600 : vector<2x1xi32>
    %613 = arith.addi %609, %612 : vector<2x1xi32>
    %c6_i32 = arith.constant 6 : i32
    return
  }
}

</mosaic_0001>

<llo_original>
// kernel: seq2seq_forward.2
$region0: #{seq2seq_forward.2}
  #allocation0 [shape = 'u32[]', space=smem, size = 0x4, offset = 0x4, fixed_abs, tag = 'smem constant byte address 0x4 - core index']
  #allocation1 [shape = 'u32[72,128]{1,0:T(1,128)}', space=vmem, size = 0x9000, scoped, tag = 'internal scratch']
  #allocation2 [shape = 'f32[8,2,128]{2,1,0:T(2,128)}', space=vmem, size = 0x2000, scoped, tag = 'scratch operand']
  #allocation3 [shape = 'f32[8,2,128]{2,1,0:T(2,128)}', space=vmem, size = 0x2000, scoped, tag = 'scratch operand']
  %s0 = inlined_call_operand.vmem [shape: f32[8,2,32], index: 0, kind: input, shape index: {}]
  %s1 = inlined_call_operand.vmem [shape: f32[32,128], index: 1, kind: input, shape index: {}]
  %s2 = inlined_call_operand.vmem [shape: f32[32,128], index: 2, kind: input, shape index: {}]
  %s3 = inlined_call_operand.vmem [shape: f32[1,128], index: 3, kind: input, shape index: {}]
  %s4 = inlined_call_operand.vmem [shape: f32[32,128], index: 4, kind: input, shape index: {}]
  %s5 = inlined_call_operand.vmem [shape: f32[32,128], index: 5, kind: input, shape index: {}]
  %s6 = inlined_call_operand.vmem [shape: f32[1,128], index: 6, kind: input, shape index: {}]
  %s7 = inlined_call_operand.vmem [shape: f32[32,32], index: 7, kind: input, shape index: {}]
  %s8 = inlined_call_operand.vmem [shape: f32[32,32], index: 8, kind: input, shape index: {}]
  %s9 = inlined_call_operand.vmem [shape: f32[1,32], index: 9, kind: input, shape index: {}]
  %s10 = inlined_call_operand.vmem [shape: f32[8,2,32], index: 10, kind: output, shape index: {0}]
  %s11 = inlined_call_operand.vmem [shape: f32[8,2,32], index: 11, kind: output, shape index: {1}]
  %s12 = inlined_call_operand.vmem [shape: f32[2,32], index: 12, kind: output, shape index: {2}]
  %13 = xla_tuple %s10, %s11, %s12
  %s14 = sld [smem:[#allocation0]]
  $region66: #{seq2seq_forward.2} parent=0
    _
  %s16 = ssub.s32 1, %s14
  %s17 = scalar_select 0, %s16, %s14
  // Predicated region
  $region2: #{seq2seq_forward.2} parent=0 // pred_check
    _
  $region3: #{seq2seq_forward.2} parent=0 // pred_check_branch
    %19 = sbr.rel (0) target = $region5
  $region4: #{seq2seq_forward.2} parent=0 // pred_region
    _
  $region5: #{seq2seq_forward.2} parent=0 // pred_fallthru
    _
  // Predicated region
  $region6: #{seq2seq_forward.2} parent=0 // pred_check
    _
  $region7: #{seq2seq_forward.2} parent=0 // pred_check_branch
    %21 = sbr.rel (0) target = $region9
  $region8: #{seq2seq_forward.2} parent=0 // pred_region
    _
  $region9: #{seq2seq_forward.2} parent=0 // pred_fallthru
    _
  // Predicated region
  $region10: #{seq2seq_forward.2} parent=0 // pred_check
    _
  $region11: #{seq2seq_forward.2} parent=0 // pred_check_branch
    %23 = sbr.rel (0) target = $region13
  $region12: #{seq2seq_forward.2} parent=0 // pred_region
    _
  $region13: #{seq2seq_forward.2} parent=0 // pred_fallthru
    _
  // Predicated region
  $region14: #{seq2seq_forward.2} parent=0 // pred_check
    _
  $region15: #{seq2seq_forward.2} parent=0 // pred_check_branch
    %25 = sbr.rel (0) target = $region17
  $region16: #{seq2seq_forward.2} parent=0 // pred_region
    _
  $region17: #{seq2seq_forward.2} parent=0 // pred_fallthru
    _
  // Predicated region
  $region18: #{seq2seq_forward.2} parent=0 // pred_check
    _
  $region19: #{seq2seq_forward.2} parent=0 // pred_check_branch
    %27 = sbr.rel (0) target = $region21
  $region20: #{seq2seq_forward.2} parent=0 // pred_region
    _
  $region21: #{seq2seq_forward.2} parent=0 // pred_fallthru
    _
  // Predicated region
  $region22: #{seq2seq_forward.2} parent=0 // pred_check
    _
  $region23: #{seq2seq_forward.2} parent=0 // pred_check_branch
    %29 = sbr.rel (0) target = $region25
  $region24: #{seq2seq_forward.2} parent=0 // pred_region
    _
  $region25: #{seq2seq_forward.2} parent=0 // pred_fallthru
    _
  // Predicated region
  $region26: #{seq2seq_forward.2} parent=0 // pred_check
    _
  $region27: #{seq2seq_forward.2} parent=0 // pred_check_branch
    %31 = sbr.rel (0) target = $region29
  $region28: #{seq2seq_forward.2} parent=0 // pred_region
    _
  $region29: #{seq2seq_forward.2} parent=0 // pred_fallthru
    _
  // Predicated region
  $region30: #{seq2seq_forward.2} parent=0 // pred_check
    _
  $region31: #{seq2seq_forward.2} parent=0 // pred_check_branch
    %33 = sbr.rel (0) target = $region33
  $region32: #{seq2seq_forward.2} parent=0 // pred_region
    _
  $region33: #{seq2seq_forward.2} parent=0 // pred_fallthru
    _
  // Predicated region
  $region34: #{seq2seq_forward.2} parent=0 // pred_check
    _
  $region35: #{seq2seq_forward.2} parent=0 // pred_check_branch
    %35 = sbr.rel (0) target = $region37
  $region36: #{seq2seq_forward.2} parent=0 // pred_region
    _
  $region37: #{seq2seq_forward.2} parent=0 // pred_fallthru
    _
  // Predicated region
  $region38: #{seq2seq_forward.2} parent=0 // pred_check
    _
  $region39: #{seq2seq_forward.2} parent=0 // pred_check_branch
    %37 = sbr.rel (0) target = $region41
  $region40: #{seq2seq_forward.2} parent=0 // pred_region
    _
  $region41: #{seq2seq_forward.2} parent=0 // pred_fallthru
    _
  %v38 = vld [vmem:[%s0] sm:$0x3]
  %v39 = vld [vmem:[%s0 + $0x2] sm:$0x3]
  %v40 = vld [vmem:[%s0 + $0x4] sm:$0x3]
  %v41 = vld [vmem:[%s0 + $0x6] sm:$0x3]
  %v42 = vld [vmem:[%s0 + $0x8] sm:$0x3]
  %v43 = vld [vmem:[%s0 + $0xa] sm:$0x3]
  %v44 = vld [vmem:[%s0 + $0xc] sm:$0x3]
  %v45 = vld [vmem:[%s0 + $0xe] sm:$0x3]
  %v46 = vld [vmem:[%s1] sm:$0xff]
  %v47 = vld [vmem:[%s1 + $0x8] sm:$0xff]
  %v48 = vld [vmem:[%s1 + $0x10] sm:$0xff]
  %v49 = vld [vmem:[%s1 + $0x18] sm:$0xff]
  %v50 = vld [vmem:[%s3] sm:$0x1]
  %v52 = vperm.slane %v50, 0
  %62 = vst [vmem:[#allocation1] ss:$4 sm:$0xff] %v38
  %s63 = scalar_lea.vmem [#allocation1], 1
  %64 = vst [vmem:[%s63] ss:$4 sm:$0xff] %v39
  %s65 = scalar_lea.vmem [#allocation1], 2
  %66 = vst [vmem:[%s65] ss:$4 sm:$0xff] %v40
  %s67 = scalar_lea.vmem [#allocation1], 3
  %68 = vst [vmem:[%s67] ss:$4 sm:$0xff] %v41
  %s69 = scalar_lea.vmem [#allocation1], 32
  %70 = vst [vmem:[%s69] ss:$4 sm:$0xff] %v42
  %s71 = scalar_lea.vmem [#allocation1], 33
  %72 = vst [vmem:[%s71] ss:$4 sm:$0xff] %v43
  %s73 = scalar_lea.vmem [#allocation1], 34
  %74 = vst [vmem:[%s73] ss:$4 sm:$0xff] %v44
  %s75 = scalar_lea.vmem [#allocation1], 35
  %76 = vst [vmem:[%s75] ss:$4 sm:$0xff] %v45
  %v77 = vld.sshfl [vmem:[#allocation1] sm:$0xff pattern:$0x73625140]
  %v78 = vld.sshfl [vmem:[#allocation1 + $0x20] sm:$0xff pattern:$0x73625140]
  %vm79 = vcmask 261120
  %v80 = vsel %vm79, %v77, 0
  %v82 = vsel %vm79, %v78, 0
  %84 = vmatpush.msra.mxu0 0.0
  %85 = vmatpush.msra.mxu0 0.0
  %86 = vmatpush.msra.mxu0 0.0
  %87 = vmatpush.msra.mxu0 0.0
  %88 = vmatpush.msra.mxu0 0.0
  %89 = vmatpush.msra.mxu0 0.0
  %90 = vmatpush.msra.mxu0 0.0
  %91 = vmatpush.msra.mxu0 0.0
  %92 = vmatpush.msra.mxu0 0.0
  %93 = vmatpush.msra.mxu0 0.0
  %94 = vmatpush.msra.mxu0 0.0
  %95 = vmatpush.msra.mxu0 0.0
  %96 = vmatpush.msra.mxu0 %v49
  %97 = vmatpush.msra.mxu0 %v48
  %98 = vmatpush.msra.mxu0 %v47
  %99 = vmatpush.msra.mxu0 %v46
  %100 = vmatmul.f32.gmra.mxu0 %v80
  %v101 = vpop.f32.mrf.mxu0
  %v102 = vadd.f32 %v52, %v101
  %103 = vmatmul.f32.gmra.mxu0 %v82
  %v104 = vpop.f32.mrf.mxu0
  %v105 = vadd.f32 %v52, %v104
  %106 = vdwg.mxu0
  %v109 = vrot.slane %v102, 2
  %v110 = vrot.slane %v102, 4
  %v111 = vrot.slane %v102, 6
  %v112 = vrot.slane %v105, 2
  %v113 = vrot.slane %v105, 4
  %v114 = vrot.slane %v105, 6
  %121 = vst [vmem:[#allocation2] sm:$0x3] %v102
  %122 = vst [vmem:[#allocation2 + $0x2] sm:$0x3] %v109
  %123 = vst [vmem:[#allocation2 + $0x4] sm:$0x3] %v110
  %124 = vst [vmem:[#allocation2 + $0x6] sm:$0x3] %v111
  %125 = vst [vmem:[#allocation2 + $0x8] sm:$0x3] %v105
  %126 = vst [vmem:[#allocation2 + $0xa] sm:$0x3] %v112
  %127 = vst [vmem:[#allocation2 + $0xc] sm:$0x3] %v113
  %128 = vst [vmem:[#allocation2 + $0xe] sm:$0x3] %v114
  %v129 = vld [vmem:[%s4] sm:$0xff]
  %v130 = vld [vmem:[%s4 + $0x8] sm:$0xff]
  %v131 = vld [vmem:[%s4 + $0x10] sm:$0xff]
  %v132 = vld [vmem:[%s4 + $0x18] sm:$0xff]
  %v133 = vld [vmem:[%s6] sm:$0x1]
  %v135 = vperm.slane %v133, 0
  %137 = vst [vmem:[#allocation1] ss:$4 sm:$0xff] %v38
  %s138 = scalar_lea.vmem [#allocation1], 1
  %139 = vst [vmem:[%s138] ss:$4 sm:$0xff] %v39
  %s140 = scalar_lea.vmem [#allocation1], 2
  %141 = vst [vmem:[%s140] ss:$4 sm:$0xff] %v40
  %s142 = scalar_lea.vmem [#allocation1], 3
  %143 = vst [vmem:[%s142] ss:$4 sm:$0xff] %v41
  %s144 = scalar_lea.vmem [#allocation1], 32
  %145 = vst [vmem:[%s144] ss:$4 sm:$0xff] %v42
  %s146 = scalar_lea.vmem [#allocation1], 33
  %147 = vst [vmem:[%s146] ss:$4 sm:$0xff] %v43
  %s148 = scalar_lea.vmem [#allocation1], 34
  %149 = vst [vmem:[%s148] ss:$4 sm:$0xff] %v44
  %s150 = scalar_lea.vmem [#allocation1], 35
  %151 = vst [vmem:[%s150] ss:$4 sm:$0xff] %v45
  %v152 = vld.sshfl [vmem:[#allocation1] sm:$0xff pattern:$0x73625140]
  %v153 = vld.sshfl [vmem:[#allocation1 + $0x20] sm:$0xff pattern:$0x73625140]
  %v154 = vsel %vm79, %v152, 0
  %v156 = vsel %vm79, %v153, 0
  %158 = vmatpush.msra.mxu0 0.0
  %159 = vmatpush.msra.mxu0 0.0
  %160 = vmatpush.msra.mxu0 0.0
  %161 = vmatpush.msra.mxu0 0.0
  %162 = vmatpush.msra.mxu0 0.0
  %163 = vmatpush.msra.mxu0 0.0
  %164 = vmatpush.msra.mxu0 0.0
  %165 = vmatpush.msra.mxu0 0.0
  %166 = vmatpush.msra.mxu0 0.0
  %167 = vmatpush.msra.mxu0 0.0
  %168 = vmatpush.msra.mxu0 0.0
  %169 = vmatpush.msra.mxu0 0.0
  %170 = vmatpush.msra.mxu0 %v132
  %171 = vmatpush.msra.mxu0 %v131
  %172 = vmatpush.msra.mxu0 %v130
  %173 = vmatpush.msra.mxu0 %v129
  %174 = vmatmul.f32.gmra.mxu0 %v154
  %v175 = vpop.f32.mrf.mxu0
  %v176 = vadd.f32 %v135, %v175
  %177 = vmatmul.f32.gmra.mxu0 %v156
  %v178 = vpop.f32.mrf.mxu0
  %v179 = vadd.f32 %v135, %v178
  %180 = vdwg.mxu0
  %v183 = vrot.slane %v176, 2
  %v184 = vrot.slane %v176, 4
  %v185 = vrot.slane %v176, 6
  %v186 = vrot.slane %v179, 2
  %v187 = vrot.slane %v179, 4
  %v188 = vrot.slane %v179, 6
  %195 = vst [vmem:[#allocation3] sm:$0x3] %v176
  %196 = vst [vmem:[#allocation3 + $0x2] sm:$0x3] %v183
  %197 = vst [vmem:[#allocation3 + $0x4] sm:$0x3] %v184
  %198 = vst [vmem:[#allocation3 + $0x6] sm:$0x3] %v185
  %199 = vst [vmem:[#allocation3 + $0x8] sm:$0x3] %v179
  %200 = vst [vmem:[#allocation3 + $0xa] sm:$0x3] %v186
  %201 = vst [vmem:[#allocation3 + $0xc] sm:$0x3] %v187
  %202 = vst [vmem:[#allocation3 + $0xe] sm:$0x3] %v188
  %v203 = vld [vmem:[#allocation2] sm:$0x3]
  %v204 = vld [vmem:[%s2] sm:$0xff]
  %v205 = vld [vmem:[%s2 + $0x8] sm:$0xff]
  %v206 = vld [vmem:[%s2 + $0x10] sm:$0xff]
  %v207 = vld [vmem:[%s2 + $0x18] sm:$0xff]
  %v209 = vsel %vm79, 0.0, 0
  %211 = vmatpush.msra.mxu0 0.0
  %212 = vmatpush.msra.mxu0 0.0
  %213 = vmatpush.msra.mxu0 0.0
  %214 = vmatpush.msra.mxu0 0.0
  %215 = vmatpush.msra.mxu0 0.0
  %216 = vmatpush.msra.mxu0 0.0
  %217 = vmatpush.msra.mxu0 0.0
  %218 = vmatpush.msra.mxu0 0.0
  %219 = vmatpush.msra.mxu0 0.0
  %220 = vmatpush.msra.mxu0 0.0
  %221 = vmatpush.msra.mxu0 0.0
  %222 = vmatpush.msra.mxu0 0.0
  %223 = vmatpush.msra.mxu0 %v207
  %224 = vmatpush.msra.mxu0 %v206
  %225 = vmatpush.msra.mxu0 %v205
  %226 = vmatpush.msra.mxu0 %v204
  %227 = vmatmul.f32.gmra.mxu0 %v209
  %v228 = vpop.f32.mrf.mxu0
  %v229 = vadd.f32 0.0, %v228
  %230 = vdwg.mxu0
  %v231 = vadd.f32 %v203, %v229
  %v232 = vxor.u32 %v231, 2147483648
  %v233 = vmul.f32 %v232, 1.442695
  %v234 = vpow.pop %v233
  %v235 = vadd.f32 %v234, 1.0
  %v236 = vrcp.pop %v235
  %v237 = vmul.f32 %v235, %v236
  %v238 = vsub.f32 1.0, %v237
  %v239 = vmul.f32 %v236, %v238
  %v240 = vadd.f32 %v236, %v239
  %vm241 = vweird.f32 %v235
  %vm242 = vweird.f32 %v236
  %vm243 = vmor %vm241, %vm242
  %v244 = vsel %vm243, %v236, %v240
  %v245 = vand.u32 2147483647, %v235
  %vm246 = vcmp.eq.f32.partialorder %v245, 8.507059e+37
  %v247 = vand.u32 %v235, 2147483648
  %v248 = vor.u32 1.1754944e-38, %v247
  %v249 = vsel %vm246, %v248, %v244
  %v250 = vmul.f32 1.0, %v249
  %v251 = vtanh.pop %v231
  %v252 = vmul.f32 %v250, 0.0
  %254 = vrot.lane.b32.xlu0 %v251, 64
  %v255 = vpop.permute.xlu0 %254
  %v257 = vmul.f32 %v250, %v255
  %259 = vrot.lane.b32.xlu0 %v257, 32
  %v260 = vpop.permute.xlu0 %259
  %v262 = vadd.f32 %v252, %v260
  %v263 = vtanh.pop %v262
  %265 = vrot.lane.b32.xlu0 %v263, 64
  %v266 = vpop.permute.xlu0 %265
  %v268 = vmul.f32 %v250, %v266
  %s269 = scalar_lea.vmem [#allocation3], 14
  %v270 = vld [vmem:[%s269] sm:$0x3]
  %v271 = vld [vmem:[%s5] sm:$0xff]
  %v272 = vld [vmem:[%s5 + $0x8] sm:$0xff]
  %v273 = vld [vmem:[%s5 + $0x10] sm:$0xff]
  %v274 = vld [vmem:[%s5 + $0x18] sm:$0xff]
  %275 = vmatpush.msra.mxu0 0.0
  %276 = vmatpush.msra.mxu0 0.0
  %277 = vmatpush.msra.mxu0 0.0
  %278 = vmatpush.msra.mxu0 0.0
  %279 = vmatpush.msra.mxu0 0.0
  %280 = vmatpush.msra.mxu0 0.0
  %281 = vmatpush.msra.mxu0 0.0
  %282 = vmatpush.msra.mxu0 0.0
  %283 = vmatpush.msra.mxu0 0.0
  %284 = vmatpush.msra.mxu0 0.0
  %285 = vmatpush.msra.mxu0 0.0
  %286 = vmatpush.msra.mxu0 0.0
  %287 = vmatpush.msra.mxu0 %v274
  %288 = vmatpush.msra.mxu0 %v273
  %289 = vmatpush.msra.mxu0 %v272
  %290 = vmatpush.msra.mxu0 %v271
  %291 = vmatmul.f32.gmra.mxu0 %v209
  %v292 = vpop.f32.mrf.mxu0
  %v293 = vadd.f32 0.0, %v292
  %294 = vdwg.mxu0
  %v295 = vadd.f32 %v270, %v293
  %v296 = vxor.u32 %v295, 2147483648
  %v297 = vmul.f32 %v296, 1.442695
  %v298 = vpow.pop %v297
  %v299 = vadd.f32 %v298, 1.0
  %v300 = vrcp.pop %v299
  %v301 = vmul.f32 %v299, %v300
  %v302 = vsub.f32 1.0, %v301
  %v303 = vmul.f32 %v300, %v302
  %v304 = vadd.f32 %v300, %v303
  %vm305 = vweird.f32 %v299
  %vm306 = vweird.f32 %v300
  %vm307 = vmor %vm305, %vm306
  %v308 = vsel %vm307, %v300, %v304
  %v309 = vand.u32 2147483647, %v299
  %vm310 = vcmp.eq.f32.partialorder %v309, 8.507059e+37
  %v311 = vand.u32 %v299, 2147483648
  %v312 = vor.u32 1.1754944e-38, %v311
  %v313 = vsel %vm310, %v312, %v308
  %v314 = vmul.f32 1.0, %v313
  %v315 = vtanh.pop %v295
  %v316 = vmul.f32 %v314, 0.0
  %318 = vrot.lane.b32.xlu0 %v315, 64
  %v319 = vpop.permute.xlu0 %318
  %v321 = vmul.f32 %v314, %v319
  %323 = vrot.lane.b32.xlu0 %v321, 32
  %v324 = vpop.permute.xlu0 %323
  %v326 = vadd.f32 %v316, %v324
  %v327 = vtanh.pop %v326
  %329 = vrot.lane.b32.xlu0 %v327, 64
  %v330 = vpop.permute.xlu0 %329
  %v332 = vmul.f32 %v314, %v330
  %334 = vrot.lane.b32.xlu0 %v268, 32
  %v335 = vpop.permute.xlu0 %334
  %vm337 = vcmask 254976
  %338 = vst.msk [vmem:[%s10] sm:$0x3] %vm337, %v335
  %340 = vrot.lane.b32.xlu0 %v332, 32
  %v341 = vpop.permute.xlu0 %340
  %s343 = scalar_lea.vmem %s11, 14
  %344 = vst.msk [vmem:[%s343] sm:$0x3] %vm337, %v341
  %s345 = scalar_lea.vmem [#allocation2], 2
  %v346 = vld [vmem:[%s345] sm:$0x3]
  %v347 = vld [vmem:[%s2] sm:$0xff]
  %v348 = vld [vmem:[%s2 + $0x8] sm:$0xff]
  %v349 = vld [vmem:[%s2 + $0x10] sm:$0xff]
  %v350 = vld [vmem:[%s2 + $0x18] sm:$0xff]
  %v351 = vsel %vm79, %v335, 0
  %353 = vmatpush.msra.mxu0 0.0
  %354 = vmatpush.msra.mxu0 0.0
  %355 = vmatpush.msra.mxu0 0.0
  %356 = vmatpush.msra.mxu0 0.0
  %357 = vmatpush.msra.mxu0 0.0
  %358 = vmatpush.msra.mxu0 0.0
  %359 = vmatpush.msra.mxu0 0.0
  %360 = vmatpush.msra.mxu0 0.0
  %361 = vmatpush.msra.mxu0 0.0
  %362 = vmatpush.msra.mxu0 0.0
  %363 = vmatpush.msra.mxu0 0.0
  %364 = vmatpush.msra.mxu0 0.0
  %365 = vmatpush.msra.mxu0 %v350
  %366 = vmatpush.msra.mxu0 %v349
  %367 = vmatpush.msra.mxu0 %v348
  %368 = vmatpush.msra.mxu0 %v347
  %369 = vmatmul.f32.gmra.mxu0 %v351
  %v370 = vpop.f32.mrf.mxu0
  %v371 = vadd.f32 0.0, %v370
  %372 = vdwg.mxu0
  %v373 = vadd.f32 %v346, %v371
  %v374 = vxor.u32 %v373, 2147483648
  %v375 = vmul.f32 %v374, 1.442695
  %v376 = vpow.pop %v375
  %v377 = vadd.f32 %v376, 1.0
  %v378 = vrcp.pop %v377
  %v379 = vmul.f32 %v377, %v378
  %v380 = vsub.f32 1.0, %v379
  %v381 = vmul.f32 %v378, %v380
  %v382 = vadd.f32 %v378, %v381
  %vm383 = vweird.f32 %v377
  %vm384 = vweird.f32 %v378
  %vm385 = vmor %vm383, %vm384
  %v386 = vsel %vm385, %v378, %v382
  %v387 = vand.u32 2147483647, %v377
  %vm388 = vcmp.eq.f32.partialorder %v387, 8.507059e+37
  %v389 = vand.u32 %v377, 2147483648
  %v390 = vor.u32 1.1754944e-38, %v389
  %v391 = vsel %vm388, %v390, %v386
  %v392 = vmul.f32 1.0, %v391
  %v393 = vtanh.pop %v373
  %v394 = vmul.f32 %v392, %v262
  %396 = vrot.lane.b32.xlu0 %v393, 64
  %v397 = vpop.permute.xlu0 %396
  %v399 = vmul.f32 %v392, %v397
  %401 = vrot.lane.b32.xlu0 %v399, 32
  %v402 = vpop.permute.xlu0 %401
  %v404 = vadd.f32 %v394, %v402
  %v405 = vtanh.pop %v404
  %407 = vrot.lane.b32.xlu0 %v405, 64
  %v408 = vpop.permute.xlu0 %407
  %v410 = vmul.f32 %v392, %v408
  %s411 = scalar_lea.vmem [#allocation3], 12
  %v412 = vld [vmem:[%s411] sm:$0x3]
  %v413 = vld [vmem:[%s5] sm:$0xff]
  %v414 = vld [vmem:[%s5 + $0x8] sm:$0xff]
  %v415 = vld [vmem:[%s5 + $0x10] sm:$0xff]
  %v416 = vld [vmem:[%s5 + $0x18] sm:$0xff]
  %v417 = vsel %vm79, %v341, 0
  %419 = vmatpush.msra.mxu0 0.0
  %420 = vmatpush.msra.mxu0 0.0
  %421 = vmatpush.msra.mxu0 0.0
  %422 = vmatpush.msra.mxu0 0.0
  %423 = vmatpush.msra.mxu0 0.0
  %424 = vmatpush.msra.mxu0 0.0
  %425 = vmatpush.msra.mxu0 0.0
  %426 = vmatpush.msra.mxu0 0.0
  %427 = vmatpush.msra.mxu0 0.0
  %428 = vmatpush.msra.mxu0 0.0
  %429 = vmatpush.msra.mxu0 0.0
  %430 = vmatpush.msra.mxu0 0.0
  %431 = vmatpush.msra.mxu0 %v416
  %432 = vmatpush.msra.mxu0 %v415
  %433 = vmatpush.msra.mxu0 %v414
  %434 = vmatpush.msra.mxu0 %v413
  %435 = vmatmul.f32.gmra.mxu0 %v417
  %v436 = vpop.f32.mrf.mxu0
  %v437 = vadd.f32 0.0, %v436
  %438 = vdwg.mxu0
  %v439 = vadd.f32 %v412, %v437
  %v440 = vxor.u32 %v439, 2147483648
  %v441 = vmul.f32 %v440, 1.442695
  %v442 = vpow.pop %v441
  %v443 = vadd.f32 %v442, 1.0
  %v444 = vrcp.pop %v443
  %v445 = vmul.f32 %v443, %v444
  %v446 = vsub.f32 1.0, %v445
  %v447 = vmul.f32 %v444, %v446
  %v448 = vadd.f32 %v444, %v447
  %vm449 = vweird.f32 %v443
  %vm450 = vweird.f32 %v444
  %vm451 = vmor %vm449, %vm450
  %v452 = vsel %vm451, %v444, %v448
  %v453 = vand.u32 2147483647, %v443
  %vm454 = vcmp.eq.f32.partialorder %v453, 8.507059e+37
  %v455 = vand.u32 %v443, 2147483648
  %v456 = vor.u32 1.1754944e-38, %v455
  %v457 = vsel %vm454, %v456, %v452
  %v458 = vmul.f32 1.0, %v457
  %v459 = vtanh.pop %v439
  %v460 = vmul.f32 %v458, %v326
  %462 = vrot.lane.b32.xlu0 %v459, 64
  %v463 = vpop.permute.xlu0 %462
  %v465 = vmul.f32 %v458, %v463
  %467 = vrot.lane.b32.xlu0 %v465, 32
  %v468 = vpop.permute.xlu0 %467
  %v470 = vadd.f32 %v460, %v468
  %v471 = vtanh.pop %v470
  %473 = vrot.lane.b32.xlu0 %v471, 64
  %v474 = vpop.permute.xlu0 %473
  %v476 = vmul.f32 %v458, %v474
  %478 = vrot.lane.b32.xlu0 %v410, 32
  %v479 = vpop.permute.xlu0 %478
  %s481 = scalar_lea.vmem %s10, 2
  %482 = vst.msk [vmem:[%s481] sm:$0x3] %vm337, %v479
  %484 = vrot.lane.b32.xlu0 %v476, 32
  %v485 = vpop.permute.xlu0 %484
  %s487 = scalar_lea.vmem %s11, 12
  %488 = vst.msk [vmem:[%s487] sm:$0x3] %vm337, %v485
  %s489 = scalar_lea.vmem [#allocation2], 4
  %v490 = vld [vmem:[%s489] sm:$0x3]
  %v491 = vld [vmem:[%s2] sm:$0xff]
  %v492 = vld [vmem:[%s2 + $0x8] sm:$0xff]
  %v493 = vld [vmem:[%s2 + $0x10] sm:$0xff]
  %v494 = vld [vmem:[%s2 + $0x18] sm:$0xff]
  %v495 = vsel %vm79, %v479, 0
  %497 = vmatpush.msra.mxu0 0.0
  %498 = vmatpush.msra.mxu0 0.0
  %499 = vmatpush.msra.mxu0 0.0
  %500 = vmatpush.msra.mxu0 0.0
  %501 = vmatpush.msra.mxu0 0.0
  %502 = vmatpush.msra.mxu0 0.0
  %503 = vmatpush.msra.mxu0 0.0
  %504 = vmatpush.msra.mxu0 0.0
  %505 = vmatpush.msra.mxu0 0.0
  %506 = vmatpush.msra.mxu0 0.0
  %507 = vmatpush.msra.mxu0 0.0
  %508 = vmatpush.msra.mxu0 0.0
  %509 = vmatpush.msra.mxu0 %v494
  %510 = vmatpush.msra.mxu0 %v493
  %511 = vmatpush.msra.mxu0 %v492
  %512 = vmatpush.msra.mxu0 %v491
  %513 = vmatmul.f32.gmra.mxu0 %v495
  %v514 = vpop.f32.mrf.mxu0
  %v515 = vadd.f32 0.0, %v514
  %516 = vdwg.mxu0
  %v517 = vadd.f32 %v490, %v515
  %v518 = vxor.u32 %v517, 2147483648
  %v519 = vmul.f32 %v518, 1.442695
  %v520 = vpow.pop %v519
  %v521 = vadd.f32 %v520, 1.0
  %v522 = vrcp.pop %v521
  %v523 = vmul.f32 %v521, %v522
  %v524 = vsub.f32 1.0, %v523
  %v525 = vmul.f32 %v522, %v524
  %v526 = vadd.f32 %v522, %v525
  %vm527 = vweird.f32 %v521
  %vm528 = vweird.f32 %v522
  %vm529 = vmor %vm527, %vm528
  %v530 = vsel %vm529, %v522, %v526
  %v531 = vand.u32 2147483647, %v521
  %vm532 = vcmp.eq.f32.partialorder %v531, 8.507059e+37
  %v533 = vand.u32 %v521, 2147483648
  %v534 = vor.u32 1.1754944e-38, %v533
  %v535 = vsel %vm532, %v534, %v530
  %v536 = vmul.f32 1.0, %v535
  %v537 = vtanh.pop %v517
  %v538 = vmul.f32 %v536, %v404
  %540 = vrot.lane.b32.xlu0 %v537, 64
  %v541 = vpop.permute.xlu0 %540
  %v543 = vmul.f32 %v536, %v541
  %545 = vrot.lane.b32.xlu0 %v543, 32
  %v546 = vpop.permute.xlu0 %545
  %v548 = vadd.f32 %v538, %v546
  %v549 = vtanh.pop %v548
  %551 = vrot.lane.b32.xlu0 %v549, 64
  %v552 = vpop.permute.xlu0 %551
  %v554 = vmul.f32 %v536, %v552
  %s555 = scalar_lea.vmem [#allocation3], 10
  %v556 = vld [vmem:[%s555] sm:$0x3]
  %v557 = vld [vmem:[%s5] sm:$0xff]
  %v558 = vld [vmem:[%s5 + $0x8] sm:$0xff]
  %v559 = vld [vmem:[%s5 + $0x10] sm:$0xff]
  %v560 = vld [vmem:[%s5 + $0x18] sm:$0xff]
  %v561 = vsel %vm79, %v485, 0
  %563 = vmatpush.msra.mxu0 0.0
  %564 = vmatpush.msra.mxu0 0.0
  %565 = vmatpush.msra.mxu0 0.0
  %566 = vmatpush.msra.mxu0 0.0
  %567 = vmatpush.msra.mxu0 0.0
  %568 = vmatpush.msra.mxu0 0.0
  %569 = vmatpush.msra.mxu0 0.0
  %570 = vmatpush.msra.mxu0 0.0
  %571 = vmatpush.msra.mxu0 0.0
  %572 = vmatpush.msra.mxu0 0.0
  %573 = vmatpush.msra.mxu0 0.0
  %574 = vmatpush.msra.mxu0 0.0
  %575 = vmatpush.msra.mxu0 %v560
  %576 = vmatpush.msra.mxu0 %v559
  %577 = vmatpush.msra.mxu0 %v558
  %578 = vmatpush.msra.mxu0 %v557
  %579 = vmatmul.f32.gmra.mxu0 %v561
  %v580 = vpop.f32.mrf.mxu0
  %v581 = vadd.f32 0.0, %v580
  %582 = vdwg.mxu0
  %v583 = vadd.f32 %v556, %v581
  %v584 = vxor.u32 %v583, 2147483648
  %v585 = vmul.f32 %v584, 1.442695
  %v586 = vpow.pop %v585
  %v587 = vadd.f32 %v586, 1.0
  %v588 = vrcp.pop %v587
  %v589 = vmul.f32 %v587, %v588
  %v590 = vsub.f32 1.0, %v589
  %v591 = vmul.f32 %v588, %v590
  %v592 = vadd.f32 %v588, %v591
  %vm593 = vweird.f32 %v587
  %vm594 = vweird.f32 %v588
  %vm595 = vmor %vm593, %vm594
  %v596 = vsel %vm595, %v588, %v592
  %v597 = vand.u32 2147483647, %v587
  %vm598 = vcmp.eq.f32.partialorder %v597, 8.507059e+37
  %v599 = vand.u32 %v587, 2147483648
  %v600 = vor.u32 1.1754944e-38, %v599
  %v601 = vsel %vm598, %v600, %v596
  %v602 = vmul.f32 1.0, %v601
  %v603 = vtanh.pop %v583
  %v604 = vmul.f32 %v602, %v470
  %606 = vrot.lane.b32.xlu0 %v603, 64
  %v607 = vpop.permute.xlu0 %606
  %v609 = vmul.f32 %v602, %v607
  %611 = vrot.lane.b32.xlu0 %v609, 32
  %v612 = vpop.permute.xlu0 %611
  %v614 = vadd.f32 %v604, %v612
  %v615 = vtanh.pop %v614
  %617 = vrot.lane.b32.xlu0 %v615, 64
  %v618 = vpop.permute.xlu0 %617
  %v620 = vmul.f32 %v602, %v618
  %622 = vrot.lane.b32.xlu0 %v554, 32
  %v623 = vpop.permute.xlu0 %622
  %s625 = scalar_lea.vmem %s10, 4
  %626 = vst.msk [vmem:[%s625] sm:$0x3] %vm337, %v623
  %628 = vrot.lane.b32.xlu0 %v620, 32
  %v629 = vpop.permute.xlu0 %628
  %s631 = scalar_lea.vmem %s11, 10
  %632 = vst.msk [vmem:[%s631] sm:$0x3] %vm337, %v629
  %s633 = scalar_lea.vmem [#allocation2], 6
  %v634 = vld [vmem:[%s633] sm:$0x3]
  %v635 = vld [vmem:[%s2] sm:$0xff]
  %v636 = vld [vmem:[%s2 + $0x8] sm:$0xff]
  %v637 = vld [vmem:[%s2 + $0x10] sm:$0xff]
  %v638 = vld [vmem:[%s2 + $0x18] sm:$0xff]
  %v639 = vsel %vm79, %v623, 0
  %641 = vmatpush.msra.mxu0 0.0
  %642 = vmatpush.msra.mxu0 0.0
  %643 = vmatpush.msra.mxu0 0.0
  %644 = vmatpush.msra.mxu0 0.0
  %645 = vmatpush.msra.mxu0 0.0
  %646 = vmatpush.msra.mxu0 0.0
  %647 = vmatpush.msra.mxu0 0.0
  %648 = vmatpush.msra.mxu0 0.0
  %649 = vmatpush.msra.mxu0 0.0
  %650 = vmatpush.msra.mxu0 0.0
  %651 = vmatpush.msra.mxu0 0.0
  %652 = vmatpush.msra.mxu0 0.0
  %653 = vmatpush.msra.mxu0 %v638
  %654 = vmatpush.msra.mxu0 %v637
  %655 = vmatpush.msra.mxu0 %v636
  %656 = vmatpush.msra.mxu0 %v635
  %657 = vmatmul.f32.gmra.mxu0 %v639
  %v658 = vpop.f32.mrf.mxu0
  %v659 = vadd.f32 0.0, %v658
  %660 = vdwg.mxu0
  %v661 = vadd.f32 %v634, %v659
  %v662 = vxor.u32 %v661, 2147483648
  %v663 = vmul.f32 %v662, 1.442695
  %v664 = vpow.pop %v663
  %v665 = vadd.f32 %v664, 1.0
  %v666 = vrcp.pop %v665
  %v667 = vmul.f32 %v665, %v666
  %v668 = vsub.f32 1.0, %v667
  %v669 = vmul.f32 %v666, %v668
  %v670 = vadd.f32 %v666, %v669
  %vm671 = vweird.f32 %v665
  %vm672 = vweird.f32 %v666
  %vm673 = vmor %vm671, %vm672
  %v674 = vsel %vm673, %v666, %v670
  %v675 = vand.u32 2147483647, %v665
  %vm676 = vcmp.eq.f32.partialorder %v675, 8.507059e+37
  %v677 = vand.u32 %v665, 2147483648
  %v678 = vor.u32 1.1754944e-38, %v677
  %v679 = vsel %vm676, %v678, %v674
  %v680 = vmul.f32 1.0, %v679
  %v681 = vtanh.pop %v661
  %v682 = vmul.f32 %v680, %v548
  %684 = vrot.lane.b32.xlu0 %v681, 64
  %v685 = vpop.permute.xlu0 %684
  %v687 = vmul.f32 %v680, %v685
  %689 = vrot.lane.b32.xlu0 %v687, 32
  %v690 = vpop.permute.xlu0 %689
  %v692 = vadd.f32 %v682, %v690
  %v693 = vtanh.pop %v692
  %695 = vrot.lane.b32.xlu0 %v693, 64
  %v696 = vpop.permute.xlu0 %695
  %v698 = vmul.f32 %v680, %v696
  %s699 = scalar_lea.vmem [#allocation3], 8
  %v700 = vld [vmem:[%s699] sm:$0x3]
  %v701 = vld [vmem:[%s5] sm:$0xff]
  %v702 = vld [vmem:[%s5 + $0x8] sm:$0xff]
  %v703 = vld [vmem:[%s5 + $0x10] sm:$0xff]
  %v704 = vld [vmem:[%s5 + $0x18] sm:$0xff]
  %v705 = vsel %vm79, %v629, 0
  %707 = vmatpush.msra.mxu0 0.0
  %708 = vmatpush.msra.mxu0 0.0
  %709 = vmatpush.msra.mxu0 0.0
  %710 = vmatpush.msra.mxu0 0.0
  %711 = vmatpush.msra.mxu0 0.0
  %712 = vmatpush.msra.mxu0 0.0
  %713 = vmatpush.msra.mxu0 0.0
  %714 = vmatpush.msra.mxu0 0.0
  %715 = vmatpush.msra.mxu0 0.0
  %716 = vmatpush.msra.mxu0 0.0
  %717 = vmatpush.msra.mxu0 0.0
  %718 = vmatpush.msra.mxu0 0.0
  %719 = vmatpush.msra.mxu0 %v704
  %720 = vmatpush.msra.mxu0 %v703
  %721 = vmatpush.msra.mxu0 %v702
  %722 = vmatpush.msra.mxu0 %v701
  %723 = vmatmul.f32.gmra.mxu0 %v705
  %v724 = vpop.f32.mrf.mxu0
  %v725 = vadd.f32 0.0, %v724
  %726 = vdwg.mxu0
  %v727 = vadd.f32 %v700, %v725
  %v728 = vxor.u32 %v727, 2147483648
  %v729 = vmul.f32 %v728, 1.442695
  %v730 = vpow.pop %v729
  %v731 = vadd.f32 %v730, 1.0
  %v732 = vrcp.pop %v731
  %v733 = vmul.f32 %v731, %v732
  %v734 = vsub.f32 1.0, %v733
  %v735 = vmul.f32 %v732, %v734
  %v736 = vadd.f32 %v732, %v735
  %vm737 = vweird.f32 %v731
  %vm738 = vweird.f32 %v732
  %vm739 = vmor %vm737, %vm738
  %v740 = vsel %vm739, %v732, %v736
  %v741 = vand.u32 2147483647, %v731
  %vm742 = vcmp.eq.f32.partialorder %v741, 8.507059e+37
  %v743 = vand.u32 %v731, 2147483648
  %v744 = vor.u32 1.1754944e-38, %v743
  %v745 = vsel %vm742, %v744, %v740
  %v746 = vmul.f32 1.0, %v745
  %v747 = vtanh.pop %v727
  %v748 = vmul.f32 %v746, %v614
  %750 = vrot.lane.b32.xlu0 %v747, 64
  %v751 = vpop.permute.xlu0 %750
  %v753 = vmul.f32 %v746, %v751
  %755 = vrot.lane.b32.xlu0 %v753, 32
  %v756 = vpop.permute.xlu0 %755
  %v758 = vadd.f32 %v748, %v756
  %v759 = vtanh.pop %v758
  %761 = vrot.lane.b32.xlu0 %v759, 64
  %v762 = vpop.permute.xlu0 %761
  %v764 = vmul.f32 %v746, %v762
  %766 = vrot.lane.b32.xlu0 %v698, 32
  %v767 = vpop.permute.xlu0 %766
  %s769 = scalar_lea.vmem %s10, 6
  %770 = vst.msk [vmem:[%s769] sm:$0x3] %vm337, %v767
  %772 = vrot.lane.b32.xlu0 %v764, 32
  %v773 = vpop.permute.xlu0 %772
  %s775 = scalar_lea.vmem %s11, 8
  %776 = vst.msk [vmem:[%s775] sm:$0x3] %vm337, %v773
  %s777 = scalar_lea.vmem [#allocation2], 8
  %v778 = vld [vmem:[%s777] sm:$0x3]
  %v779 = vld [vmem:[%s2] sm:$0xff]
  %v780 = vld [vmem:[%s2 + $0x8] sm:$0xff]
  %v781 = vld [vmem:[%s2 + $0x10] sm:$0xff]
  %v782 = vld [vmem:[%s2 + $0x18] sm:$0xff]
  %v783 = vsel %vm79, %v767, 0
  %785 = vmatpush.msra.mxu0 0.0
  %786 = vmatpush.msra.mxu0 0.0
  %787 = vmatpush.msra.mxu0 0.0
  %788 = vmatpush.msra.mxu0 0.0
  %789 = vmatpush.msra.mxu0 0.0
  %790 = vmatpush.msra.mxu0 0.0
  %791 = vmatpush.msra.mxu0 0.0
  %792 = vmatpush.msra.mxu0 0.0
  %793 = vmatpush.msra.mxu0 0.0
  %794 = vmatpush.msra.mxu0 0.0
  %795 = vmatpush.msra.mxu0 0.0
  %796 = vmatpush.msra.mxu0 0.0
  %797 = vmatpush.msra.mxu0 %v782
  %798 = vmatpush.msra.mxu0 %v781
  %799 = vmatpush.msra.mxu0 %v780
  %800 = vmatpush.msra.mxu0 %v779
  %801 = vmatmul.f32.gmra.mxu0 %v783
  %v802 = vpop.f32.mrf.mxu0
  %v803 = vadd.f32 0.0, %v802
  %804 = vdwg.mxu0
  %v805 = vadd.f32 %v778, %v803
  %v806 = vxor.u32 %v805, 2147483648
  %v807 = vmul.f32 %v806, 1.442695
  %v808 = vpow.pop %v807
  %v809 = vadd.f32 %v808, 1.0
  %v810 = vrcp.pop %v809
  %v811 = vmul.f32 %v809, %v810
  %v812 = vsub.f32 1.0, %v811
  %v813 = vmul.f32 %v810, %v812
  %v814 = vadd.f32 %v810, %v813
  %vm815 = vweird.f32 %v809
  %vm816 = vweird.f32 %v810
  %vm817 = vmor %vm815, %vm816
  %v818 = vsel %vm817, %v810, %v814
  %v819 = vand.u32 2147483647, %v809
  %vm820 = vcmp.eq.f32.partialorder %v819, 8.507059e+37
  %v821 = vand.u32 %v809, 2147483648
  %v822 = vor.u32 1.1754944e-38, %v821
  %v823 = vsel %vm820, %v822, %v818
  %v824 = vmul.f32 1.0, %v823
  %v825 = vtanh.pop %v805
  %v826 = vmul.f32 %v824, %v692
  %828 = vrot.lane.b32.xlu0 %v825, 64
  %v829 = vpop.permute.xlu0 %828
  %v831 = vmul.f32 %v824, %v829
  %833 = vrot.lane.b32.xlu0 %v831, 32
  %v834 = vpop.permute.xlu0 %833
  %v836 = vadd.f32 %v826, %v834
  %v837 = vtanh.pop %v836
  %839 = vrot.lane.b32.xlu0 %v837, 64
  %v840 = vpop.permute.xlu0 %839
  %v842 = vmul.f32 %v824, %v840
  %s843 = scalar_lea.vmem [#allocation3], 6
  %v844 = vld [vmem:[%s843] sm:$0x3]
  %v845 = vld [vmem:[%s5] sm:$0xff]
  %v846 = vld [vmem:[%s5 + $0x8] sm:$0xff]
  %v847 = vld [vmem:[%s5 + $0x10] sm:$0xff]
  %v848 = vld [vmem:[%s5 + $0x18] sm:$0xff]
  %v849 = vsel %vm79, %v773, 0
  %851 = vmatpush.msra.mxu0 0.0
  %852 = vmatpush.msra.mxu0 0.0
  %853 = vmatpush.msra.mxu0 0.0
  %854 = vmatpush.msra.mxu0 0.0
  %855 = vmatpush.msra.mxu0 0.0
  %856 = vmatpush.msra.mxu0 0.0
  %857 = vmatpush.msra.mxu0 0.0
  %858 = vmatpush.msra.mxu0 0.0
  %859 = vmatpush.msra.mxu0 0.0
  %860 = vmatpush.msra.mxu0 0.0
  %861 = vmatpush.msra.mxu0 0.0
  %862 = vmatpush.msra.mxu0 0.0
  %863 = vmatpush.msra.mxu0 %v848
  %864 = vmatpush.msra.mxu0 %v847
  %865 = vmatpush.msra.mxu0 %v846
  %866 = vmatpush.msra.mxu0 %v845
  %867 = vmatmul.f32.gmra.mxu0 %v849
  %v868 = vpop.f32.mrf.mxu0
  %v869 = vadd.f32 0.0, %v868
  %870 = vdwg.mxu0
  %v871 = vadd.f32 %v844, %v869
  %v872 = vxor.u32 %v871, 2147483648
  %v873 = vmul.f32 %v872, 1.442695
  %v874 = vpow.pop %v873
  %v875 = vadd.f32 %v874, 1.0
  %v876 = vrcp.pop %v875
  %v877 = vmul.f32 %v875, %v876
  %v878 = vsub.f32 1.0, %v877
  %v879 = vmul.f32 %v876, %v878
  %v880 = vadd.f32 %v876, %v879
  %vm881 = vweird.f32 %v875
  %vm882 = vweird.f32 %v876
  %vm883 = vmor %vm881, %vm882
  %v884 = vsel %vm883, %v876, %v880
  %v885 = vand.u32 2147483647, %v875
  %vm886 = vcmp.eq.f32.partialorder %v885, 8.507059e+37
  %v887 = vand.u32 %v875, 2147483648
  %v888 = vor.u32 1.1754944e-38, %v887
  %v889 = vsel %vm886, %v888, %v884
  %v890 = vmul.f32 1.0, %v889
  %v891 = vtanh.pop %v871
  %v892 = vmul.f32 %v890, %v758
  %894 = vrot.lane.b32.xlu0 %v891, 64
  %v895 = vpop.permute.xlu0 %894
  %v897 = vmul.f32 %v890, %v895
  %899 = vrot.lane.b32.xlu0 %v897, 32
  %v900 = vpop.permute.xlu0 %899
  %v902 = vadd.f32 %v892, %v900
  %v903 = vtanh.pop %v902
  %905 = vrot.lane.b32.xlu0 %v903, 64
  %v906 = vpop.permute.xlu0 %905
  %v908 = vmul.f32 %v890, %v906
  %910 = vrot.lane.b32.xlu0 %v842, 32
  %v911 = vpop.permute.xlu0 %910
  %s913 = scalar_lea.vmem %s10, 8
  %914 = vst.msk [vmem:[%s913] sm:$0x3] %vm337, %v911
  %916 = vrot.lane.b32.xlu0 %v908, 32
  %v917 = vpop.permute.xlu0 %916
  %s919 = scalar_lea.vmem %s11, 6
  %920 = vst.msk [vmem:[%s919] sm:$0x3] %vm337, %v917
  %s921 = scalar_lea.vmem [#allocation2], 10
  %v922 = vld [vmem:[%s921] sm:$0x3]
  %v923 = vld [vmem:[%s2] sm:$0xff]
  %v924 = vld [vmem:[%s2 + $0x8] sm:$0xff]
  %v925 = vld [vmem:[%s2 + $0x10] sm:$0xff]
  %v926 = vld [vmem:[%s2 + $0x18] sm:$0xff]
  %v927 = vsel %vm79, %v911, 0
  %929 = vmatpush.msra.mxu0 0.0
  %930 = vmatpush.msra.mxu0 0.0
  %931 = vmatpush.msra.mxu0 0.0
  %932 = vmatpush.msra.mxu0 0.0
  %933 = vmatpush.msra.mxu0 0.0
  %934 = vmatpush.msra.mxu0 0.0
  %935 = vmatpush.msra.mxu0 0.0
  %936 = vmatpush.msra.mxu0 0.0
  %937 = vmatpush.msra.mxu0 0.0
  %938 = vmatpush.msra.mxu0 0.0
  %939 = vmatpush.msra.mxu0 0.0
  %940 = vmatpush.msra.mxu0 0.0
  %941 = vmatpush.msra.mxu0 %v926
  %942 = vmatpush.msra.mxu0 %v925
  %943 = vmatpush.msra.mxu0 %v924
  %944 = vmatpush.msra.mxu0 %v923
  %945 = vmatmul.f32.gmra.mxu0 %v927
  %v946 = vpop.f32.mrf.mxu0
  %v947 = vadd.f32 0.0, %v946
  %948 = vdwg.mxu0
  %v949 = vadd.f32 %v922, %v947
  %v950 = vxor.u32 %v949, 2147483648
  %v951 = vmul.f32 %v950, 1.442695
  %v952 = vpow.pop %v951
  %v953 = vadd.f32 %v952, 1.0
  %v954 = vrcp.pop %v953
  %v955 = vmul.f32 %v953, %v954
  %v956 = vsub.f32 1.0, %v955
  %v957 = vmul.f32 %v954, %v956
  %v958 = vadd.f32 %v954, %v957
  %vm959 = vweird.f32 %v953
  %vm960 = vweird.f32 %v954
  %vm961 = vmor %vm959, %vm960
  %v962 = vsel %vm961, %v954, %v958
  %v963 = vand.u32 2147483647, %v953
  %vm964 = vcmp.eq.f32.partialorder %v963, 8.507059e+37
  %v965 = vand.u32 %v953, 2147483648
  %v966 = vor.u32 1.1754944e-38, %v965
  %v967 = vsel %vm964, %v966, %v962
  %v968 = vmul.f32 1.0, %v967
  %v969 = vtanh.pop %v949
  %v970 = vmul.f32 %v968, %v836
  %972 = vrot.lane.b32.xlu0 %v969, 64
  %v973 = vpop.permute.xlu0 %972
  %v975 = vmul.f32 %v968, %v973
  %977 = vrot.lane.b32.xlu0 %v975, 32
  %v978 = vpop.permute.xlu0 %977
  %v980 = vadd.f32 %v970, %v978
  %v981 = vtanh.pop %v980
  %983 = vrot.lane.b32.xlu0 %v981, 64
  %v984 = vpop.permute.xlu0 %983
  %v986 = vmul.f32 %v968, %v984
  %s987 = scalar_lea.vmem [#allocation3], 4
  %v988 = vld [vmem:[%s987] sm:$0x3]
  %v989 = vld [vmem:[%s5] sm:$0xff]
  %v990 = vld [vmem:[%s5 + $0x8] sm:$0xff]
  %v991 = vld [vmem:[%s5 + $0x10] sm:$0xff]
  %v992 = vld [vmem:[%s5 + $0x18] sm:$0xff]
  %v993 = vsel %vm79, %v917, 0
  %995 = vmatpush.msra.mxu0 0.0
  %996 = vmatpush.msra.mxu0 0.0
  %997 = vmatpush.msra.mxu0 0.0
  %998 = vmatpush.msra.mxu0 0.0
  %999 = vmatpush.msra.mxu0 0.0
  %1000 = vmatpush.msra.mxu0 0.0
  %1001 = vmatpush.msra.mxu0 0.0
  %1002 = vmatpush.msra.mxu0 0.0
  %1003 = vmatpush.msra.mxu0 0.0
  %1004 = vmatpush.msra.mxu0 0.0
  %1005 = vmatpush.msra.mxu0 0.0
  %1006 = vmatpush.msra.mxu0 0.0
  %1007 = vmatpush.msra.mxu0 %v992
  %1008 = vmatpush.msra.mxu0 %v991
  %1009 = vmatpush.msra.mxu0 %v990
  %1010 = vmatpush.msra.mxu0 %v989
  %1011 = vmatmul.f32.gmra.mxu0 %v993
  %v1012 = vpop.f32.mrf.mxu0
  %v1013 = vadd.f32 0.0, %v1012
  %1014 = vdwg.mxu0
  %v1015 = vadd.f32 %v988, %v1013
  %v1016 = vxor.u32 %v1015, 2147483648
  %v1017 = vmul.f32 %v1016, 1.442695
  %v1018 = vpow.pop %v1017
  %v1019 = vadd.f32 %v1018, 1.0
  %v1020 = vrcp.pop %v1019
  %v1021 = vmul.f32 %v1019, %v1020
  %v1022 = vsub.f32 1.0, %v1021
  %v1023 = vmul.f32 %v1020, %v1022
  %v1024 = vadd.f32 %v1020, %v1023
  %vm1025 = vweird.f32 %v1019
  %vm1026 = vweird.f32 %v1020
  %vm1027 = vmor %vm1025, %vm1026
  %v1028 = vsel %vm1027, %v1020, %v1024
  %v1029 = vand.u32 2147483647, %v1019
  %vm1030 = vcmp.eq.f32.partialorder %v1029, 8.507059e+37
  %v1031 = vand.u32 %v1019, 2147483648
  %v1032 = vor.u32 1.1754944e-38, %v1031
  %v1033 = vsel %vm1030, %v1032, %v1028
  %v1034 = vmul.f32 1.0, %v1033
  %v1035 = vtanh.pop %v1015
  %v1036 = vmul.f32 %v1034, %v902
  %1038 = vrot.lane.b32.xlu0 %v1035, 64
  %v1039 = vpop.permute.xlu0 %1038
  %v1041 = vmul.f32 %v1034, %v1039
  %1043 = vrot.lane.b32.xlu0 %v1041, 32
  %v1044 = vpop.permute.xlu0 %1043
  %v1046 = vadd.f32 %v1036, %v1044
  %v1047 = vtanh.pop %v1046
  %1049 = vrot.lane.b32.xlu0 %v1047, 64
  %v1050 = vpop.permute.xlu0 %1049
  %v1052 = vmul.f32 %v1034, %v1050
  %1054 = vrot.lane.b32.xlu0 %v986, 32
  %v1055 = vpop.permute.xlu0 %1054
  %s1057 = scalar_lea.vmem %s10, 10
  %1058 = vst.msk [vmem:[%s1057] sm:$0x3] %vm337, %v1055
  %1060 = vrot.lane.b32.xlu0 %v1052, 32
  %v1061 = vpop.permute.xlu0 %1060
  %s1063 = scalar_lea.vmem %s11, 4
  %1064 = vst.msk [vmem:[%s1063] sm:$0x3] %vm337, %v1061
  %s1065 = scalar_lea.vmem [#allocation2], 12
  %v1066 = vld [vmem:[%s1065] sm:$0x3]
  %v1067 = vld [vmem:[%s2] sm:$0xff]
  %v1068 = vld [vmem:[%s2 + $0x8] sm:$0xff]
  %v1069 = vld [vmem:[%s2 + $0x10] sm:$0xff]
  %v1070 = vld [vmem:[%s2 + $0x18] sm:$0xff]
  %v1071 = vsel %vm79, %v1055, 0
  %1073 = vmatpush.msra.mxu0 0.0
  %1074 = vmatpush.msra.mxu0 0.0
  %1075 = vmatpush.msra.mxu0 0.0
  %1076 = vmatpush.msra.mxu0 0.0
  %1077 = vmatpush.msra.mxu0 0.0
  %1078 = vmatpush.msra.mxu0 0.0
  %1079 = vmatpush.msra.mxu0 0.0
  %1080 = vmatpush.msra.mxu0 0.0
  %1081 = vmatpush.msra.mxu0 0.0
  %1082 = vmatpush.msra.mxu0 0.0
  %1083 = vmatpush.msra.mxu0 0.0
  %1084 = vmatpush.msra.mxu0 0.0
  %1085 = vmatpush.msra.mxu0 %v1070
  %1086 = vmatpush.msra.mxu0 %v1069
  %1087 = vmatpush.msra.mxu0 %v1068
  %1088 = vmatpush.msra.mxu0 %v1067
  %1089 = vmatmul.f32.gmra.mxu0 %v1071
  %v1090 = vpop.f32.mrf.mxu0
  %v1091 = vadd.f32 0.0, %v1090
  %1092 = vdwg.mxu0
  %v1093 = vadd.f32 %v1066, %v1091
  %v1094 = vxor.u32 %v1093, 2147483648
  %v1095 = vmul.f32 %v1094, 1.442695
  %v1096 = vpow.pop %v1095
  %v1097 = vadd.f32 %v1096, 1.0
  %v1098 = vrcp.pop %v1097
  %v1099 = vmul.f32 %v1097, %v1098
  %v1100 = vsub.f32 1.0, %v1099
  %v1101 = vmul.f32 %v1098, %v1100
  %v1102 = vadd.f32 %v1098, %v1101
  %vm1103 = vweird.f32 %v1097
  %vm1104 = vweird.f32 %v1098
  %vm1105 = vmor %vm1103, %vm1104
  %v1106 = vsel %vm1105, %v1098, %v1102
  %v1107 = vand.u32 2147483647, %v1097
  %vm1108 = vcmp.eq.f32.partialorder %v1107, 8.507059e+37
  %v1109 = vand.u32 %v1097, 2147483648
  %v1110 = vor.u32 1.1754944e-38, %v1109
  %v1111 = vsel %vm1108, %v1110, %v1106
  %v1112 = vmul.f32 1.0, %v1111
  %v1113 = vtanh.pop %v1093
  %v1114 = vmul.f32 %v1112, %v980
  %1116 = vrot.lane.b32.xlu0 %v1113, 64
  %v1117 = vpop.permute.xlu0 %1116
  %v1119 = vmul.f32 %v1112, %v1117
  %1121 = vrot.lane.b32.xlu0 %v1119, 32
  %v1122 = vpop.permute.xlu0 %1121
  %v1124 = vadd.f32 %v1114, %v1122
  %v1125 = vtanh.pop %v1124
  %1127 = vrot.lane.b32.xlu0 %v1125, 64
  %v1128 = vpop.permute.xlu0 %1127
  %v1130 = vmul.f32 %v1112, %v1128
  %s1131 = scalar_lea.vmem [#allocation3], 2
  %v1132 = vld [vmem:[%s1131] sm:$0x3]
  %v1133 = vld [vmem:[%s5] sm:$0xff]
  %v1134 = vld [vmem:[%s5 + $0x8] sm:$0xff]
  %v1135 = vld [vmem:[%s5 + $0x10] sm:$0xff]
  %v1136 = vld [vmem:[%s5 + $0x18] sm:$0xff]
  %v1137 = vsel %vm79, %v1061, 0
  %1139 = vmatpush.msra.mxu0 0.0
  %1140 = vmatpush.msra.mxu0 0.0
  %1141 = vmatpush.msra.mxu0 0.0
  %1142 = vmatpush.msra.mxu0 0.0
  %1143 = vmatpush.msra.mxu0 0.0
  %1144 = vmatpush.msra.mxu0 0.0
  %1145 = vmatpush.msra.mxu0 0.0
  %1146 = vmatpush.msra.mxu0 0.0
  %1147 = vmatpush.msra.mxu0 0.0
  %1148 = vmatpush.msra.mxu0 0.0
  %1149 = vmatpush.msra.mxu0 0.0
  %1150 = vmatpush.msra.mxu0 0.0
  %1151 = vmatpush.msra.mxu0 %v1136
  %1152 = vmatpush.msra.mxu0 %v1135
  %1153 = vmatpush.msra.mxu0 %v1134
  %1154 = vmatpush.msra.mxu0 %v1133
  %1155 = vmatmul.f32.gmra.mxu0 %v1137
  %v1156 = vpop.f32.mrf.mxu0
  %v1157 = vadd.f32 0.0, %v1156
  %1158 = vdwg.mxu0
  %v1159 = vadd.f32 %v1132, %v1157
  %v1160 = vxor.u32 %v1159, 2147483648
  %v1161 = vmul.f32 %v1160, 1.442695
  %v1162 = vpow.pop %v1161
  %v1163 = vadd.f32 %v1162, 1.0
  %v1164 = vrcp.pop %v1163
  %v1165 = vmul.f32 %v1163, %v1164
  %v1166 = vsub.f32 1.0, %v1165
  %v1167 = vmul.f32 %v1164, %v1166
  %v1168 = vadd.f32 %v1164, %v1167
  %vm1169 = vweird.f32 %v1163
  %vm1170 = vweird.f32 %v1164
  %vm1171 = vmor %vm1169, %vm1170
  %v1172 = vsel %vm1171, %v1164, %v1168
  %v1173 = vand.u32 2147483647, %v1163
  %vm1174 = vcmp.eq.f32.partialorder %v1173, 8.507059e+37
  %v1175 = vand.u32 %v1163, 2147483648
  %v1176 = vor.u32 1.1754944e-38, %v1175
  %v1177 = vsel %vm1174, %v1176, %v1172
  %v1178 = vmul.f32 1.0, %v1177
  %v1179 = vtanh.pop %v1159
  %v1180 = vmul.f32 %v1178, %v1046
  %1182 = vrot.lane.b32.xlu0 %v1179, 64
  %v1183 = vpop.permute.xlu0 %1182
  %v1185 = vmul.f32 %v1178, %v1183
  %1187 = vrot.lane.b32.xlu0 %v1185, 32
  %v1188 = vpop.permute.xlu0 %1187
  %v1190 = vadd.f32 %v1180, %v1188
  %v1191 = vtanh.pop %v1190
  %1193 = vrot.lane.b32.xlu0 %v1191, 64
  %v1194 = vpop.permute.xlu0 %1193
  %v1196 = vmul.f32 %v1178, %v1194
  %1198 = vrot.lane.b32.xlu0 %v1130, 32
  %v1199 = vpop.permute.xlu0 %1198
  %s1201 = scalar_lea.vmem %s10, 12
  %1202 = vst.msk [vmem:[%s1201] sm:$0x3] %vm337, %v1199
  %1204 = vrot.lane.b32.xlu0 %v1196, 32
  %v1205 = vpop.permute.xlu0 %1204
  %s1207 = scalar_lea.vmem %s11, 2
  %1208 = vst.msk [vmem:[%s1207] sm:$0x3] %vm337, %v1205
  %s1209 = scalar_lea.vmem [#allocation2], 14
  %v1210 = vld [vmem:[%s1209] sm:$0x3]
  %v1211 = vld [vmem:[%s2] sm:$0xff]
  %v1212 = vld [vmem:[%s2 + $0x8] sm:$0xff]
  %v1213 = vld [vmem:[%s2 + $0x10] sm:$0xff]
  %v1214 = vld [vmem:[%s2 + $0x18] sm:$0xff]
  %v1215 = vsel %vm79, %v1199, 0
  %1217 = vmatpush.msra.mxu0 0.0
  %1218 = vmatpush.msra.mxu0 0.0
  %1219 = vmatpush.msra.mxu0 0.0
  %1220 = vmatpush.msra.mxu0 0.0
  %1221 = vmatpush.msra.mxu0 0.0
  %1222 = vmatpush.msra.mxu0 0.0
  %1223 = vmatpush.msra.mxu0 0.0
  %1224 = vmatpush.msra.mxu0 0.0
  %1225 = vmatpush.msra.mxu0 0.0
  %1226 = vmatpush.msra.mxu0 0.0
  %1227 = vmatpush.msra.mxu0 0.0
  %1228 = vmatpush.msra.mxu0 0.0
  %1229 = vmatpush.msra.mxu0 %v1214
  %1230 = vmatpush.msra.mxu0 %v1213
  %1231 = vmatpush.msra.mxu0 %v1212
  %1232 = vmatpush.msra.mxu0 %v1211
  %1233 = vmatmul.f32.gmra.mxu0 %v1215
  %v1234 = vpop.f32.mrf.mxu0
  %v1235 = vadd.f32 0.0, %v1234
  %1236 = vdwg.mxu0
  %v1237 = vadd.f32 %v1210, %v1235
  %v1238 = vxor.u32 %v1237, 2147483648
  %v1239 = vmul.f32 %v1238, 1.442695
  %v1240 = vpow.pop %v1239
  %v1241 = vadd.f32 %v1240, 1.0
  %v1242 = vrcp.pop %v1241
  %v1243 = vmul.f32 %v1241, %v1242
  %v1244 = vsub.f32 1.0, %v1243
  %v1245 = vmul.f32 %v1242, %v1244
  %v1246 = vadd.f32 %v1242, %v1245
  %vm1247 = vweird.f32 %v1241
  %vm1248 = vweird.f32 %v1242
  %vm1249 = vmor %vm1247, %vm1248
  %v1250 = vsel %vm1249, %v1242, %v1246
  %v1251 = vand.u32 2147483647, %v1241
  %vm1252 = vcmp.eq.f32.partialorder %v1251, 8.507059e+37
  %v1253 = vand.u32 %v1241, 2147483648
  %v1254 = vor.u32 1.1754944e-38, %v1253
  %v1255 = vsel %vm1252, %v1254, %v1250
  %v1256 = vmul.f32 1.0, %v1255
  %v1257 = vtanh.pop %v1237
  %v1258 = vmul.f32 %v1256, %v1124
  %1260 = vrot.lane.b32.xlu0 %v1257, 64
  %v1261 = vpop.permute.xlu0 %1260
  %v1263 = vmul.f32 %v1256, %v1261
  %1265 = vrot.lane.b32.xlu0 %v1263, 32
  %v1266 = vpop.permute.xlu0 %1265
  %v1268 = vadd.f32 %v1258, %v1266
  %v1269 = vtanh.pop %v1268
  %1271 = vrot.lane.b32.xlu0 %v1269, 64
  %v1272 = vpop.permute.xlu0 %1271
  %v1274 = vmul.f32 %v1256, %v1272
  %v1275 = vld [vmem:[#allocation3] sm:$0x3]
  %v1276 = vld [vmem:[%s5] sm:$0xff]
  %v1277 = vld [vmem:[%s5 + $0x8] sm:$0xff]
  %v1278 = vld [vmem:[%s5 + $0x10] sm:$0xff]
  %v1279 = vld [vmem:[%s5 + $0x18] sm:$0xff]
  %v1280 = vsel %vm79, %v1205, 0
  %1282 = vmatpush.msra.mxu0 0.0
  %1283 = vmatpush.msra.mxu0 0.0
  %1284 = vmatpush.msra.mxu0 0.0
  %1285 = vmatpush.msra.mxu0 0.0
  %1286 = vmatpush.msra.mxu0 0.0
  %1287 = vmatpush.msra.mxu0 0.0
  %1288 = vmatpush.msra.mxu0 0.0
  %1289 = vmatpush.msra.mxu0 0.0
  %1290 = vmatpush.msra.mxu0 0.0
  %1291 = vmatpush.msra.mxu0 0.0
  %1292 = vmatpush.msra.mxu0 0.0
  %1293 = vmatpush.msra.mxu0 0.0
  %1294 = vmatpush.msra.mxu0 %v1279
  %1295 = vmatpush.msra.mxu0 %v1278
  %1296 = vmatpush.msra.mxu0 %v1277
  %1297 = vmatpush.msra.mxu0 %v1276
  %1298 = vmatmul.f32.gmra.mxu0 %v1280
  %v1299 = vpop.f32.mrf.mxu0
  %v1300 = vadd.f32 0.0, %v1299
  %1301 = vdwg.mxu0
  %v1302 = vadd.f32 %v1275, %v1300
  %v1303 = vxor.u32 %v1302, 2147483648
  %v1304 = vmul.f32 %v1303, 1.442695
  %v1305 = vpow.pop %v1304
  %v1306 = vadd.f32 %v1305, 1.0
  %v1307 = vrcp.pop %v1306
  %v1308 = vmul.f32 %v1306, %v1307
  %v1309 = vsub.f32 1.0, %v1308
  %v1310 = vmul.f32 %v1307, %v1309
  %v1311 = vadd.f32 %v1307, %v1310
  %vm1312 = vweird.f32 %v1306
  %vm1313 = vweird.f32 %v1307
  %vm1314 = vmor %vm1312, %vm1313
  %v1315 = vsel %vm1314, %v1307, %v1311
  %v1316 = vand.u32 2147483647, %v1306
  %vm1317 = vcmp.eq.f32.partialorder %v1316, 8.507059e+37
  %v1318 = vand.u32 %v1306, 2147483648
  %v1319 = vor.u32 1.1754944e-38, %v1318
  %v1320 = vsel %vm1317, %v1319, %v1315
  %v1321 = vmul.f32 1.0, %v1320
  %v1322 = vtanh.pop %v1302
  %v1323 = vmul.f32 %v1321, %v1190
  %1325 = vrot.lane.b32.xlu0 %v1322, 64
  %v1326 = vpop.permute.xlu0 %1325
  %v1328 = vmul.f32 %v1321, %v1326
  %1330 = vrot.lane.b32.xlu0 %v1328, 32
  %v1331 = vpop.permute.xlu0 %1330
  %v1333 = vadd.f32 %v1323, %v1331
  %v1334 = vtanh.pop %v1333
  %1336 = vrot.lane.b32.xlu0 %v1334, 64
  %v1337 = vpop.permute.xlu0 %1336
  %v1339 = vmul.f32 %v1321, %v1337
  %1341 = vrot.lane.b32.xlu0 %v1274, 32
  %v1342 = vpop.permute.xlu0 %1341
  %s1344 = scalar_lea.vmem %s10, 14
  %1345 = vst.msk [vmem:[%s1344] sm:$0x3] %vm337, %v1342
  %1347 = vrot.lane.b32.xlu0 %v1339, 32
  %v1348 = vpop.permute.xlu0 %1347
  %1350 = vst.msk [vmem:[%s11] sm:$0x3] %vm337, %v1348
  %v1351 = vld [vmem:[%s7] sm:$0xff]
  %v1352 = vld [vmem:[%s7 + $0x8] sm:$0xff]
  %v1353 = vld [vmem:[%s7 + $0x10] sm:$0xff]
  %v1354 = vld [vmem:[%s7 + $0x18] sm:$0xff]
  %v1355 = vld [vmem:[%s8] sm:$0xff]
  %v1356 = vld [vmem:[%s8 + $0x8] sm:$0xff]
  %v1357 = vld [vmem:[%s8 + $0x10] sm:$0xff]
  %v1358 = vld [vmem:[%s8 + $0x18] sm:$0xff]
  %v1359 = vsel %vm79, %v1348, 0
  %1361 = vmatpush.msra.mxu0 0.0
  %1362 = vmatpush.msra.mxu0 0.0
  %1363 = vmatpush.msra.mxu0 0.0
  %1364 = vmatpush.msra.mxu0 0.0
  %1365 = vmatpush.msra.mxu0 0.0
  %1366 = vmatpush.msra.mxu0 0.0
  %1367 = vmatpush.msra.mxu0 0.0
  %1368 = vmatpush.msra.mxu0 0.0
  %1369 = vmatpush.msra.mxu0 0.0
  %1370 = vmatpush.msra.mxu0 0.0
  %1371 = vmatpush.msra.mxu0 0.0
  %1372 = vmatpush.msra.mxu0 0.0
  %1373 = vmatpush.msra.mxu0 %v1358
  %1374 = vmatpush.msra.mxu0 %v1357
  %1375 = vmatpush.msra.mxu0 %v1356
  %1376 = vmatpush.msra.mxu0 %v1355
  %1377 = vmatmul.f32.gmra.mxu0 %v1359
  %v1378 = vpop.f32.mrf.mxu0
  %v1379 = vadd.f32 0.0, %v1378
  %1380 = vdwg.mxu0
  %v1381 = vsel %vm79, %v1342, 0
  %1383 = vmatpush.msra.mxu0 0.0
  %1384 = vmatpush.msra.mxu0 0.0
  %1385 = vmatpush.msra.mxu0 0.0
  %1386 = vmatpush.msra.mxu0 0.0
  %1387 = vmatpush.msra.mxu0 0.0
  %1388 = vmatpush.msra.mxu0 0.0
  %1389 = vmatpush.msra.mxu0 0.0
  %1390 = vmatpush.msra.mxu0 0.0
  %1391 = vmatpush.msra.mxu0 0.0
  %1392 = vmatpush.msra.mxu0 0.0
  %1393 = vmatpush.msra.mxu0 0.0
  %1394 = vmatpush.msra.mxu0 0.0
  %1395 = vmatpush.msra.mxu0 %v1354
  %1396 = vmatpush.msra.mxu0 %v1353
  %1397 = vmatpush.msra.mxu0 %v1352
  %1398 = vmatpush.msra.mxu0 %v1351
  %1399 = vmatmul.f32.gmra.mxu0 %v1381
  %v1400 = vpop.f32.mrf.mxu0
  %v1401 = vadd.f32 %v1379, %v1400
  %1402 = vdwg.mxu0
  %v1403 = vld [vmem:[%s9] sm:$0x1]
  %v1405 = vperm.slane %v1403, 0
  %v1407 = vadd.f32 %v1401, %v1405
  %v1408 = vtanh.pop %v1407
  %1409 = vst.msk [vmem:[%s12] sm:$0x3] %vm337, %v1408
  // Predicated region
  $region42: #{seq2seq_forward.2} parent=0 // pred_check
    _
  $region43: #{seq2seq_forward.2} parent=0 // pred_check_branch
    %1411 = sbr.rel (0) target = $region45
  $region44: #{seq2seq_forward.2} parent=0 // pred_region
    _
  $region45: #{seq2seq_forward.2} parent=0 // pred_fallthru
    _
  // Predicated region
  $region46: #{seq2seq_forward.2} parent=0 // pred_check
    _
  $region47: #{seq2seq_forward.2} parent=0 // pred_check_branch
    %1413 = sbr.rel (0) target = $region49
  $region48: #{seq2seq_forward.2} parent=0 // pred_region
    _
  $region49: #{seq2seq_forward.2} parent=0 // pred_fallthru
    _
  // Predicated region
  $region50: #{seq2seq_forward.2} parent=0 // pred_check
    _
  $region51: #{seq2seq_forward.2} parent=0 // pred_check_branch
    %1415 = sbr.rel (0) target = $region53
  $region52: #{seq2seq_forward.2} parent=0 // pred_region
    _
  $region53: #{seq2seq_forward.2} parent=0 // pred_fallthru
    _
  // Predicated region
  $region54: #{seq2seq_forward.2} parent=0 // pred_check
    _
  $region55: #{seq2seq_forward.2} parent=0 // pred_check_branch
    %1417 = sbr.rel (0) target = $region57
  $region56: #{seq2seq_forward.2} parent=0 // pred_region
    _
  $region57: #{seq2seq_forward.2} parent=0 // pred_fallthru
    _
  // Predicated region
  $region58: #{seq2seq_forward.2} parent=0 // pred_check
    _
  $region59: #{seq2seq_forward.2} parent=0 // pred_check_branch
    %1419 = sbr.rel (0) target = $region61
  $region60: #{seq2seq_forward.2} parent=0 // pred_region
    _
  $region61: #{seq2seq_forward.2} parent=0 // pred_fallthru
    _
  // Predicated region
  $region62: #{seq2seq_forward.2} parent=0 // pred_check
    _
  $region63: #{seq2seq_forward.2} parent=0 // pred_check_branch
    %1421 = sbr.rel (0) target = $region65
  $region64: #{seq2seq_forward.2} parent=0 // pred_region
    _
  $region65: #{seq2seq_forward.2} parent=0 // pred_fallthru
    _

// kernel: seq2seq_forward.3
$region0: #{seq2seq_forward.3}
  #allocation0 [shape = 'u32[]', space=smem, size = 0x4, offset = 0x4, fixed_abs, tag = 'smem constant byte address 0x4 - core index']
  #allocation1 [shape = 'u32[72,128]{1,0:T(1,128)}', space=vmem, size = 0x9000, scoped, tag = 'internal scratch']
  %s0 = inlined_call_operand.vmem [shape: s32[6], index: 0, kind: input, shape index: {}]
  %s1 = inlined_call_operand.vmem [shape: s32[6,2,1], index: 1, kind: input, shape index: {}]
  %s2 = inlined_call_operand.vmem [shape: f32[2,8], index: 2, kind: input, shape index: {}]
  %s3 = inlined_call_operand.vmem [shape: f32[2,8,64], index: 3, kind: input, shape index: {}]
  %s4 = inlined_call_operand.vmem [shape: f32[2,32], index: 4, kind: input, shape index: {}]
  %s5 = inlined_call_operand.vmem [shape: f32[48,32], index: 5, kind: input, shape index: {}]
  %s6 = inlined_call_operand.vmem [shape: f32[32,32], index: 6, kind: input, shape index: {}]
  %s7 = inlined_call_operand.vmem [shape: f32[64,32], index: 7, kind: input, shape index: {}]
  %s8 = inlined_call_operand.vmem [shape: f32[1,32], index: 8, kind: input, shape index: {}]
  %s9 = inlined_call_operand.vmem [shape: f32[1,32], index: 9, kind: input, shape index: {}]
  %s10 = inlined_call_operand.vmem [shape: f32[32,128], index: 10, kind: input, shape index: {}]
  %s11 = inlined_call_operand.vmem [shape: f32[64,128], index: 11, kind: input, shape index: {}]
  %s12 = inlined_call_operand.vmem [shape: f32[32,128], index: 12, kind: input, shape index: {}]
  %s13 = inlined_call_operand.vmem [shape: f32[1,128], index: 13, kind: input, shape index: {}]
  %s14 = inlined_call_operand.vmem [shape: f32[32,48], index: 14, kind: input, shape index: {}]
  %s15 = inlined_call_operand.vmem [shape: f32[64,48], index: 15, kind: input, shape index: {}]
  %s16 = inlined_call_operand.vmem [shape: f32[32,48], index: 16, kind: input, shape index: {}]
  %s17 = inlined_call_operand.vmem [shape: f32[1,48], index: 17, kind: input, shape index: {}]
  %s18 = inlined_call_operand.hbm [shape: f32[6,2,48], index: 18, kind: output, shape index: {}]
  %s19 = sld [smem:[#allocation0]]
  $region86: #{seq2seq_forward.3} parent=0
    _
  %s21 = ssub.s32 1, %s19
  %s22 = scalar_select 0, %s21, %s19
  $region1: #{seq2seq_forward.3} parent=0
    #allocation2 [shape = 'u8[512]{0}', space=smem, size = 0x200, scoped, tag = 'input window, operand 0, single buffered']
    #allocation3 [shape = 's32[1]{0}', space=sflag, size = 0x4, scoped, tag = 'scoped memory for seq2seq_forward.3']
    #allocation4 [shape = 's32[1]{0}', space=sflag, size = 0x4, scoped, tag = 'scoped memory for seq2seq_forward.3']
    #allocation5 [shape = 'u8[6144]{0}', space=vmem, size = 0x1800, scoped, tag = 'output window, operand 0, single buffered']
    %23 = vsyncpa [#allocation4], 0
    %24 = vsyncpa [#allocation3], 0
    // Predicated region
    $region2: #{seq2seq_forward.3} parent=1 // pred_check
      _
    $region3: #{seq2seq_forward.3} parent=1 // pred_check_branch
      %26 = sbr.rel (0) target = $region5
    $region4: #{seq2seq_forward.3} parent=1 // pred_region
      %28 = vsyncadd [#allocation4], 0
      %s30 = sshll.u32 %s0, 4
      %s31 = int_to_ptr.vmem [resolvable:$true] %s30
      %33 = dma.vmem_to_smem %s31, 16, [#allocation2], [#allocation4]
    $region5: #{seq2seq_forward.3} parent=1 // pred_fallthru
      _
    // Predicated region
    $region6: #{seq2seq_forward.3} parent=1 // pred_check
      _
    $region7: #{seq2seq_forward.3} parent=1 // pred_check_branch
      %35 = sbr.rel (0) target = $region9
    $region8: #{seq2seq_forward.3} parent=1 // pred_region
      _
    $region9: #{seq2seq_forward.3} parent=1 // pred_fallthru
      _
    // Predicated region
    $region10: #{seq2seq_forward.3} parent=1 // pred_check
      _
    $region11: #{seq2seq_forward.3} parent=1 // pred_check_branch
      %37 = sbr.rel (0) target = $region13
    $region12: #{seq2seq_forward.3} parent=1 // pred_region
      _
    $region13: #{seq2seq_forward.3} parent=1 // pred_fallthru
      _
    // Predicated region
    $region14: #{seq2seq_forward.3} parent=1 // pred_check
      _
    $region15: #{seq2seq_forward.3} parent=1 // pred_check_branch
      %39 = sbr.rel (0) target = $region17
    $region16: #{seq2seq_forward.3} parent=1 // pred_region
      _
    $region17: #{seq2seq_forward.3} parent=1 // pred_fallthru
      _
    // Predicated region
    $region18: #{seq2seq_forward.3} parent=1 // pred_check
      _
    $region19: #{seq2seq_forward.3} parent=1 // pred_check_branch
      %41 = sbr.rel (0) target = $region21
    $region20: #{seq2seq_forward.3} parent=1 // pred_region
      _
    $region21: #{seq2seq_forward.3} parent=1 // pred_fallthru
      _
    // Predicated region
    $region22: #{seq2seq_forward.3} parent=1 // pred_check
      _
    $region23: #{seq2seq_forward.3} parent=1 // pred_check_branch
      %43 = sbr.rel (0) target = $region25
    $region24: #{seq2seq_forward.3} parent=1 // pred_region
      _
    $region25: #{seq2seq_forward.3} parent=1 // pred_fallthru
      _
    // Predicated region
    $region26: #{seq2seq_forward.3} parent=1 // pred_check
      _
    $region27: #{seq2seq_forward.3} parent=1 // pred_check_branch
      %45 = sbr.rel (0) target = $region29
    $region28: #{seq2seq_forward.3} parent=1 // pred_region
      _
    $region29: #{seq2seq_forward.3} parent=1 // pred_fallthru
      _
    // Predicated region
    $region30: #{seq2seq_forward.3} parent=1 // pred_check
      _
    $region31: #{seq2seq_forward.3} parent=1 // pred_check_branch
      %47 = sbr.rel (0) target = $region33
    $region32: #{seq2seq_forward.3} parent=1 // pred_region
      _
    $region33: #{seq2seq_forward.3} parent=1 // pred_fallthru
      _
    // Predicated region
    $region34: #{seq2seq_forward.3} parent=1 // pred_check
      _
    $region35: #{seq2seq_forward.3} parent=1 // pred_check_branch
      %49 = sbr.rel (0) target = $region37
    $region36: #{seq2seq_forward.3} parent=1 // pred_region
      _
    $region37: #{seq2seq_forward.3} parent=1 // pred_fallthru
      _
    // Predicated region
    $region38: #{seq2seq_forward.3} parent=1 // pred_check
      _
    $region39: #{seq2seq_forward.3} parent=1 // pred_check_branch
      %51 = sbr.rel (0) target = $region41
    $region40: #{seq2seq_forward.3} parent=1 // pred_region
      _
    $region41: #{seq2seq_forward.3} parent=1 // pred_fallthru
      _
    // Predicated region
    $region42: #{seq2seq_forward.3} parent=1 // pred_check
      _
    $region43: #{seq2seq_forward.3} parent=1 // pred_check_branch
      %53 = sbr.rel (0) target = $region45
    $region44: #{seq2seq_forward.3} parent=1 // pred_region
      _
    $region45: #{seq2seq_forward.3} parent=1 // pred_fallthru
      _
    // Predicated region
    $region46: #{seq2seq_forward.3} parent=1 // pred_check
      _
    $region47: #{seq2seq_forward.3} parent=1 // pred_check_branch
      %55 = sbr.rel (0) target = $region49
    $region48: #{seq2seq_forward.3} parent=1 // pred_region
      _
    $region49: #{seq2seq_forward.3} parent=1 // pred_fallthru
      _
    // Predicated region
    $region50: #{seq2seq_forward.3} parent=1 // pred_check
      _
    $region51: #{seq2seq_forward.3} parent=1 // pred_check_branch
      %57 = sbr.rel (0) target = $region53
    $region52: #{seq2seq_forward.3} parent=1 // pred_region
      _
    $region53: #{seq2seq_forward.3} parent=1 // pred_fallthru
      _
    // Predicated region
    $region54: #{seq2seq_forward.3} parent=1 // pred_check
      _
    $region55: #{seq2seq_forward.3} parent=1 // pred_check_branch
      %59 = sbr.rel (0) target = $region57
    $region56: #{seq2seq_forward.3} parent=1 // pred_region
      _
    $region57: #{seq2seq_forward.3} parent=1 // pred_fallthru
      _
    // Predicated region
    $region58: #{seq2seq_forward.3} parent=1 // pred_check
      _
    $region59: #{seq2seq_forward.3} parent=1 // pred_check_branch
      %61 = sbr.rel (0) target = $region61
    $region60: #{seq2seq_forward.3} parent=1 // pred_region
      _
    $region61: #{seq2seq_forward.3} parent=1 // pred_fallthru
      _
    // Predicated region
    $region62: #{seq2seq_forward.3} parent=1 // pred_check
      _
    $region63: #{seq2seq_forward.3} parent=1 // pred_check_branch
      %63 = sbr.rel (0) target = $region65
    $region64: #{seq2seq_forward.3} parent=1 // pred_region
      _
    $region65: #{seq2seq_forward.3} parent=1 // pred_fallthru
      _
    // Predicated region
    $region66: #{seq2seq_forward.3} parent=1 // pred_check
      _
    $region67: #{seq2seq_forward.3} parent=1 // pred_check_branch
      %65 = sbr.rel (0) target = $region69
    $region68: #{seq2seq_forward.3} parent=1 // pred_region
      _
    $region69: #{seq2seq_forward.3} parent=1 // pred_fallthru
      _
    // Predicated region
    $region70: #{seq2seq_forward.3} parent=1 // pred_check
      _
    $region71: #{seq2seq_forward.3} parent=1 // pred_check_branch
      %67 = sbr.rel (0) target = $region73
    $region72: #{seq2seq_forward.3} parent=1 // pred_region
      _
    $region73: #{seq2seq_forward.3} parent=1 // pred_fallthru
      _
    // Predicated region
    $region74: #{seq2seq_forward.3} parent=1 // pred_check
      _
    $region75: #{seq2seq_forward.3} parent=1 // pred_check_branch
      %69 = sbr.rel (0) target = $region77
    $region76: #{seq2seq_forward.3} parent=1 // pred_region
      %71 = dma.done [#allocation4], 16
    $region77: #{seq2seq_forward.3} parent=1 // pred_fallthru
      _
    %72 = sfence
    %v73 = vld [vmem:[%s3] sm:$0xff]
    %v74 = vld [vmem:[%s3 + $0x8] sm:$0xff]
    %v75 = vld [vmem:[%s7] sm:$0xff]
    %v76 = vld [vmem:[%s7 + $0x8] sm:$0xff]
    %v77 = vld [vmem:[%s7 + $0x10] sm:$0xff]
    %v78 = vld [vmem:[%s7 + $0x18] sm:$0xff]
    %v79 = vld [vmem:[%s7 + $0x20] sm:$0xff]
    %v80 = vld [vmem:[%s7 + $0x28] sm:$0xff]
    %v81 = vld [vmem:[%s7 + $0x30] sm:$0xff]
    %v82 = vld [vmem:[%s7 + $0x38] sm:$0xff]
    %vm83 = vcmask 523264
    %v85 = vsel %vm83, %v73, 0
    %v88 = vsel %vm83, %v74, 0
    %90 = vmatpush.msra.mxu0 0.0
    %91 = vmatpush.msra.mxu0 0.0
    %92 = vmatpush.msra.mxu0 0.0
    %93 = vmatpush.msra.mxu0 0.0
    %94 = vmatpush.msra.mxu0 0.0
    %95 = vmatpush.msra.mxu0 0.0
    %96 = vmatpush.msra.mxu0 0.0
    %97 = vmatpush.msra.mxu0 0.0
    %98 = vmatpush.msra.mxu0 %v82
    %99 = vmatpush.msra.mxu0 %v81
    %100 = vmatpush.msra.mxu0 %v80
    %101 = vmatpush.msra.mxu0 %v79
    %102 = vmatpush.msra.mxu0 %v78
    %103 = vmatpush.msra.mxu0 %v77
    %104 = vmatpush.msra.mxu0 %v76
    %105 = vmatpush.msra.mxu0 %v75
    %106 = vmatmul.f32.gmra.mxu0 %v85
    %v107 = vpop.f32.mrf.mxu0
    %v108 = vadd.f32 0.0, %v107
    %109 = vmatmul.f32.gmra.mxu0 %v88
    %v110 = vpop.f32.mrf.mxu0
    %v111 = vadd.f32 0.0, %v110
    %112 = vdwg.mxu0
    %v113 = vld [vmem:[%s8] sm:$0x1]
    %v115 = vperm.slane %v113, 0
    %v117 = vadd.f32 %v108, %v115
    %v118 = vadd.f32 %v111, %v115
    %v119 = vld [vmem:[%s9] sm:$0x1]
    %v121 = vperm.slane %v119, 0
    %v123 = vld [vmem:[%s2] sm:$0x3]
    %vm124 = vcmp.gt.f32.partialorder %v123, 0.5
    %v125 = vlaneseq
    %v126 = vand.u32 %v125, 127
    %v127 = vld [vmem:[%s13] sm:$0x1]
    %v129 = vperm.slane %v127, 0
    %v131 = vld [vmem:[%s17] sm:$0x1]
    %v133 = vperm.slane %v131, 0
    %v135 = vld [vmem:[%s4] sm:$0x3]
    %vm136 = vcmp.eq.s32.totalorder %v126, 1
    %v137 = vsel %vm136, 1, 0
    %v138 = vcvt.s32.f32 %v137
    %v139 = vld [vmem:[%s5] sm:$0xff]
    %v140 = vld [vmem:[%s5 + $0x8] sm:$0xff]
    %v141 = vld [vmem:[%s5 + $0x10] sm:$0xff]
    %v142 = vld [vmem:[%s5 + $0x18] sm:$0xff]
    %v143 = vld [vmem:[%s5 + $0x20] sm:$0xff]
    %v144 = vld [vmem:[%s5 + $0x28] sm:$0xff]
    %vm145 = vcmask 392192
    %v147 = vsel %vm145, %v138, 0
    %149 = vmatpush.msra.mxu0 0.0
    %150 = vmatpush.msra.mxu0 0.0
    %151 = vmatpush.msra.mxu0 0.0
    %152 = vmatpush.msra.mxu0 0.0
    %153 = vmatpush.msra.mxu0 0.0
    %154 = vmatpush.msra.mxu0 0.0
    %155 = vmatpush.msra.mxu0 0.0
    %156 = vmatpush.msra.mxu0 0.0
    %157 = vmatpush.msra.mxu0 0.0
    %158 = vmatpush.msra.mxu0 0.0
    %159 = vmatpush.msra.mxu0 %v144
    %160 = vmatpush.msra.mxu0 %v143
    %161 = vmatpush.msra.mxu0 %v142
    %162 = vmatpush.msra.mxu0 %v141
    %163 = vmatpush.msra.mxu0 %v140
    %164 = vmatpush.msra.mxu0 %v139
    %165 = vmatmul.f32.gmra.mxu0 %v147
    %v166 = vpop.f32.mrf.mxu0
    %v167 = vadd.f32 0.0, %v166
    %168 = vdwg.mxu0
    %v169 = vld [vmem:[%s6] sm:$0xff]
    %v170 = vld [vmem:[%s6 + $0x8] sm:$0xff]
    %v171 = vld [vmem:[%s6 + $0x10] sm:$0xff]
    %v172 = vld [vmem:[%s6 + $0x18] sm:$0xff]
    %vm173 = vcmask 261120
    %v175 = vsel %vm173, %v135, 0
    %177 = vmatpush.msra.mxu0 0.0
    %178 = vmatpush.msra.mxu0 0.0
    %179 = vmatpush.msra.mxu0 0.0
    %180 = vmatpush.msra.mxu0 0.0
    %181 = vmatpush.msra.mxu0 0.0
    %182 = vmatpush.msra.mxu0 0.0
    %183 = vmatpush.msra.mxu0 0.0
    %184 = vmatpush.msra.mxu0 0.0
    %185 = vmatpush.msra.mxu0 0.0
    %186 = vmatpush.msra.mxu0 0.0
    %187 = vmatpush.msra.mxu0 0.0
    %188 = vmatpush.msra.mxu0 0.0
    %189 = vmatpush.msra.mxu0 %v172
    %190 = vmatpush.msra.mxu0 %v171
    %191 = vmatpush.msra.mxu0 %v170
    %192 = vmatpush.msra.mxu0 %v169
    %193 = vmatmul.f32.gmra.mxu0 %v175
    %v194 = vpop.f32.mrf.mxu0
    %v195 = vadd.f32 0.0, %v194
    %196 = vdwg.mxu0
    %v198 = vrot.slane %v195, 1
    %v199 = vperm.slane %v195, 0
    %v200 = vperm.slane %v198, 0
    %v203 = vadd.f32 %v117, %v199
    %v204 = vadd.f32 %v118, %v200
    %v205 = vtanh.pop %v203
    %v206 = vtanh.pop %v204
    %v207 = vmul.f32 %v205, %v121
    %v208 = vmul.f32 %v206, %v121
    %v209 = vsel %vm173, %v207, 0.0
    %210 = vadd.xlane.f32.xlu0 %v209
    %v211 = vpop.xlane.xlu0 %210
    %v212 = vsel %vm173, %v208, 0.0
    %213 = vadd.xlane.f32.xlu0 %v212
    %v214 = vpop.xlane.xlu0 %213
    %v217 = vperm.slane %v211, %v126
    %v218 = vperm.slane %v214, %v126
    %vm219 = vcmask 1041409
    %v220 = vsel %vm219, %v218, %v217
    %v222 = vsel %vm124, -1e+10, %v220
    %vm223 = vcmask 58368
    %v224 = vsel %vm223, %v222, -inf
    %225 = vmax.xlane.f32.xlu0 %v224
    %v226 = vpop.xlane.xlu0 %225
    %v227 = vsub.f32 %v222, %v226
    %v228 = vmul.f32 %v227, 1.442695
    %v229 = vpow.pop %v228
    %v230 = vsel %vm223, %v229, 0.0
    %231 = vadd.xlane.f32.xlu0 %v230
    %v232 = vpop.xlane.xlu0 %231
    %v233 = vrcp.pop %v232
    %v234 = vmul.f32 %v229, %v233
    %v236 = vrot.slane %v234, 1
    %vm237 = vcmask 64512
    %v238 = vsel %vm237, %v234, 0
    %240 = vmatpush.msra.mxu0 0.0
    %241 = vmatpush.msra.mxu0 0.0
    %242 = vmatpush.msra.mxu0 0.0
    %243 = vmatpush.msra.mxu0 0.0
    %244 = vmatpush.msra.mxu0 0.0
    %245 = vmatpush.msra.mxu0 0.0
    %246 = vmatpush.msra.mxu0 0.0
    %247 = vmatpush.msra.mxu0 0.0
    %248 = vmatpush.msra.mxu0 0.0
    %249 = vmatpush.msra.mxu0 0.0
    %250 = vmatpush.msra.mxu0 0.0
    %251 = vmatpush.msra.mxu0 0.0
    %252 = vmatpush.msra.mxu0 0.0
    %253 = vmatpush.msra.mxu0 0.0
    %254 = vmatpush.msra.mxu0 0.0
    %255 = vmatpush.msra.mxu0 %v73
    %256 = vmatmul.f32.gmra.mxu0 %v238
    %v257 = vpop.f32.mrf.mxu0
    %v258 = vadd.f32 0.0, %v257
    %259 = vdwg.mxu0
    %v260 = vsel %vm237, %v236, 0
    %262 = vmatpush.msra.mxu0 0.0
    %263 = vmatpush.msra.mxu0 0.0
    %264 = vmatpush.msra.mxu0 0.0
    %265 = vmatpush.msra.mxu0 0.0
    %266 = vmatpush.msra.mxu0 0.0
    %267 = vmatpush.msra.mxu0 0.0
    %268 = vmatpush.msra.mxu0 0.0
    %269 = vmatpush.msra.mxu0 0.0
    %270 = vmatpush.msra.mxu0 0.0
    %271 = vmatpush.msra.mxu0 0.0
    %272 = vmatpush.msra.mxu0 0.0
    %273 = vmatpush.msra.mxu0 0.0
    %274 = vmatpush.msra.mxu0 0.0
    %275 = vmatpush.msra.mxu0 0.0
    %276 = vmatpush.msra.mxu0 0.0
    %277 = vmatpush.msra.mxu0 %v74
    %278 = vmatmul.f32.gmra.mxu0 %v260
    %v279 = vpop.f32.mrf.mxu0
    %v280 = vadd.f32 0.0, %v279
    %281 = vdwg.mxu0
    %v282 = vld [vmem:[%s10] sm:$0xff]
    %v283 = vld [vmem:[%s10 + $0x8] sm:$0xff]
    %v284 = vld [vmem:[%s10 + $0x10] sm:$0xff]
    %v285 = vld [vmem:[%s10 + $0x18] sm:$0xff]
    %v286 = vld [vmem:[%s11] sm:$0xff]
    %v287 = vld [vmem:[%s11 + $0x8] sm:$0xff]
    %v288 = vld [vmem:[%s11 + $0x10] sm:$0xff]
    %v289 = vld [vmem:[%s11 + $0x18] sm:$0xff]
    %v290 = vld [vmem:[%s11 + $0x20] sm:$0xff]
    %v291 = vld [vmem:[%s11 + $0x28] sm:$0xff]
    %v292 = vld [vmem:[%s11 + $0x30] sm:$0xff]
    %v293 = vld [vmem:[%s11 + $0x38] sm:$0xff]
    %v296 = vrot.slane %v280, 7
    %v297 = vsel %vm219, %v296, %v258
    %v298 = vsel %vm83, %v297, 0
    %300 = vmatpush.msra.mxu0 0.0
    %301 = vmatpush.msra.mxu0 0.0
    %302 = vmatpush.msra.mxu0 0.0
    %303 = vmatpush.msra.mxu0 0.0
    %304 = vmatpush.msra.mxu0 0.0
    %305 = vmatpush.msra.mxu0 0.0
    %306 = vmatpush.msra.mxu0 0.0
    %307 = vmatpush.msra.mxu0 0.0
    %308 = vmatpush.msra.mxu0 %v293
    %309 = vmatpush.msra.mxu0 %v292
    %310 = vmatpush.msra.mxu0 %v291
    %311 = vmatpush.msra.mxu0 %v290
    %312 = vmatpush.msra.mxu0 %v289
    %313 = vmatpush.msra.mxu0 %v288
    %314 = vmatpush.msra.mxu0 %v287
    %315 = vmatpush.msra.mxu0 %v286
    %316 = vmatmul.f32.gmra.mxu0 %v298
    %v317 = vpop.f32.mrf.mxu0
    %v318 = vadd.f32 0.0, %v317
    %319 = vdwg.mxu0
    %v321 = vsel %vm173, %v167, 0
    %323 = vmatpush.msra.mxu0 0.0
    %324 = vmatpush.msra.mxu0 0.0
    %325 = vmatpush.msra.mxu0 0.0
    %326 = vmatpush.msra.mxu0 0.0
    %327 = vmatpush.msra.mxu0 0.0
    %328 = vmatpush.msra.mxu0 0.0
    %329 = vmatpush.msra.mxu0 0.0
    %330 = vmatpush.msra.mxu0 0.0
    %331 = vmatpush.msra.mxu0 0.0
    %332 = vmatpush.msra.mxu0 0.0
    %333 = vmatpush.msra.mxu0 0.0
    %334 = vmatpush.msra.mxu0 0.0
    %335 = vmatpush.msra.mxu0 %v285
    %336 = vmatpush.msra.mxu0 %v284
    %337 = vmatpush.msra.mxu0 %v283
    %338 = vmatpush.msra.mxu0 %v282
    %339 = vmatmul.f32.gmra.mxu0 %v321
    %v340 = vpop.f32.mrf.mxu0
    %v341 = vadd.f32 %v318, %v340
    %342 = vdwg.mxu0
    %v343 = vld [vmem:[%s12] sm:$0xff]
    %v344 = vld [vmem:[%s12 + $0x8] sm:$0xff]
    %v345 = vld [vmem:[%s12 + $0x10] sm:$0xff]
    %v346 = vld [vmem:[%s12 + $0x18] sm:$0xff]
    %347 = vmatpush.msra.mxu0 0.0
    %348 = vmatpush.msra.mxu0 0.0
    %349 = vmatpush.msra.mxu0 0.0
    %350 = vmatpush.msra.mxu0 0.0
    %351 = vmatpush.msra.mxu0 0.0
    %352 = vmatpush.msra.mxu0 0.0
    %353 = vmatpush.msra.mxu0 0.0
    %354 = vmatpush.msra.mxu0 0.0
    %355 = vmatpush.msra.mxu0 0.0
    %356 = vmatpush.msra.mxu0 0.0
    %357 = vmatpush.msra.mxu0 0.0
    %358 = vmatpush.msra.mxu0 0.0
    %359 = vmatpush.msra.mxu0 %v346
    %360 = vmatpush.msra.mxu0 %v345
    %361 = vmatpush.msra.mxu0 %v344
    %362 = vmatpush.msra.mxu0 %v343
    %363 = vmatmul.f32.gmra.mxu0 %v175
    %v364 = vpop.f32.mrf.mxu0
    %v365 = vadd.f32 0.0, %v364
    %366 = vdwg.mxu0
    %v367 = vadd.f32 %v341, %v365
    %v368 = vadd.f32 %v367, %v129
    %v369 = vxor.u32 %v368, 2147483648
    %v370 = vmul.f32 %v369, 1.442695
    %v371 = vpow.pop %v370
    %v372 = vadd.f32 %v371, 1.0
    %v373 = vrcp.pop %v372
    %v374 = vmul.f32 %v372, %v373
    %v375 = vsub.f32 1.0, %v374
    %v376 = vmul.f32 %v373, %v375
    %v377 = vadd.f32 %v373, %v376
    %vm378 = vweird.f32 %v372
    %vm379 = vweird.f32 %v373
    %vm380 = vmor %vm378, %vm379
    %v381 = vsel %vm380, %v373, %v377
    %v382 = vand.u32 2147483647, %v372
    %vm383 = vcmp.eq.f32.partialorder %v382, 8.507059e+37
    %v384 = vand.u32 %v372, 2147483648
    %v385 = vor.u32 1.1754944e-38, %v384
    %v386 = vsel %vm383, %v385, %v381
    %v387 = vmul.f32 1.0, %v386
    %v388 = vtanh.pop %v368
    %v389 = vmul.f32 %v387, 0.0
    %391 = vrot.lane.b32.xlu0 %v388, 64
    %v392 = vpop.permute.xlu0 %391
    %v394 = vmul.f32 %v387, %v392
    %396 = vrot.lane.b32.xlu0 %v394, 32
    %v397 = vpop.permute.xlu0 %396
    %v399 = vadd.f32 %v389, %v397
    %v400 = vtanh.pop %v399
    %402 = vrot.lane.b32.xlu0 %v400, 64
    %v403 = vpop.permute.xlu0 %402
    %v405 = vmul.f32 %v387, %v403
    %v406 = vld [vmem:[%s14] sm:$0xff]
    %v407 = vld [vmem:[%s14 + $0x8] sm:$0xff]
    %v408 = vld [vmem:[%s14 + $0x10] sm:$0xff]
    %v409 = vld [vmem:[%s14 + $0x18] sm:$0xff]
    %v410 = vld [vmem:[%s15] sm:$0xff]
    %v411 = vld [vmem:[%s15 + $0x8] sm:$0xff]
    %v412 = vld [vmem:[%s15 + $0x10] sm:$0xff]
    %v413 = vld [vmem:[%s15 + $0x18] sm:$0xff]
    %v414 = vld [vmem:[%s15 + $0x20] sm:$0xff]
    %v415 = vld [vmem:[%s15 + $0x28] sm:$0xff]
    %v416 = vld [vmem:[%s15 + $0x30] sm:$0xff]
    %v417 = vld [vmem:[%s15 + $0x38] sm:$0xff]
    %418 = vmatpush.msra.mxu0 0.0
    %419 = vmatpush.msra.mxu0 0.0
    %420 = vmatpush.msra.mxu0 0.0
    %421 = vmatpush.msra.mxu0 0.0
    %422 = vmatpush.msra.mxu0 0.0
    %423 = vmatpush.msra.mxu0 0.0
    %424 = vmatpush.msra.mxu0 0.0
    %425 = vmatpush.msra.mxu0 0.0
    %426 = vmatpush.msra.mxu0 %v417
    %427 = vmatpush.msra.mxu0 %v416
    %428 = vmatpush.msra.mxu0 %v415
    %429 = vmatpush.msra.mxu0 %v414
    %430 = vmatpush.msra.mxu0 %v413
    %431 = vmatpush.msra.mxu0 %v412
    %432 = vmatpush.msra.mxu0 %v411
    %433 = vmatpush.msra.mxu0 %v410
    %434 = vmatmul.f32.gmra.mxu0 %v298
    %v435 = vpop.f32.mrf.mxu0
    %v436 = vadd.f32 0.0, %v435
    %437 = vdwg.mxu0
    %439 = vrot.lane.b32.xlu0 %v405, 32
    %v440 = vpop.permute.xlu0 %439
    %v441 = vsel %vm173, %v440, 0
    %443 = vmatpush.msra.mxu0 0.0
    %444 = vmatpush.msra.mxu0 0.0
    %445 = vmatpush.msra.mxu0 0.0
    %446 = vmatpush.msra.mxu0 0.0
    %447 = vmatpush.msra.mxu0 0.0
    %448 = vmatpush.msra.mxu0 0.0
    %449 = vmatpush.msra.mxu0 0.0
    %450 = vmatpush.msra.mxu0 0.0
    %451 = vmatpush.msra.mxu0 0.0
    %452 = vmatpush.msra.mxu0 0.0
    %453 = vmatpush.msra.mxu0 0.0
    %454 = vmatpush.msra.mxu0 0.0
    %455 = vmatpush.msra.mxu0 %v409
    %456 = vmatpush.msra.mxu0 %v408
    %457 = vmatpush.msra.mxu0 %v407
    %458 = vmatpush.msra.mxu0 %v406
    %459 = vmatmul.f32.gmra.mxu0 %v441
    %v460 = vpop.f32.mrf.mxu0
    %v461 = vadd.f32 %v436, %v460
    %462 = vdwg.mxu0
    %v463 = vld [vmem:[%s16] sm:$0xff]
    %v464 = vld [vmem:[%s16 + $0x8] sm:$0xff]
    %v465 = vld [vmem:[%s16 + $0x10] sm:$0xff]
    %v466 = vld [vmem:[%s16 + $0x18] sm:$0xff]
    %467 = vmatpush.msra.mxu0 0.0
    %468 = vmatpush.msra.mxu0 0.0
    %469 = vmatpush.msra.mxu0 0.0
    %470 = vmatpush.msra.mxu0 0.0
    %471 = vmatpush.msra.mxu0 0.0
    %472 = vmatpush.msra.mxu0 0.0
    %473 = vmatpush.msra.mxu0 0.0
    %474 = vmatpush.msra.mxu0 0.0
    %475 = vmatpush.msra.mxu0 0.0
    %476 = vmatpush.msra.mxu0 0.0
    %477 = vmatpush.msra.mxu0 0.0
    %478 = vmatpush.msra.mxu0 0.0
    %479 = vmatpush.msra.mxu0 %v466
    %480 = vmatpush.msra.mxu0 %v465
    %481 = vmatpush.msra.mxu0 %v464
    %482 = vmatpush.msra.mxu0 %v463
    %483 = vmatmul.f32.gmra.mxu0 %v321
    %v484 = vpop.f32.mrf.mxu0
    %v485 = vadd.f32 0.0, %v484
    %486 = vdwg.mxu0
    %v487 = vadd.f32 %v461, %v485
    %v488 = vadd.f32 %v487, %v133
    %vm489 = vcmask 386048
    %490 = vst.msk [vmem:[#allocation5] sm:$0x3] %vm489, %v488
    %v491 = vsel %vm489, %v488, -inf
    %492 = vmax.xlane.f32.xlu0 %v491
    %v493 = vpop.xlane.xlu0 %492
    %vm494 = vcmp.ge.f32.partialorder %v488, %v493
    %v495 = vsel %vm494, %v126, 48
    %v496 = vsel %vm489, %v495, 2147483647
    %v497 = vand.u32 %v496, 65535
    %v498 = vshra.s32 %v496, 16
    %v499 = vcvt.s32.f32 %v497
    %v500 = vcvt.s32.f32 %v498
    %501 = vmin.xlane.f32.xlu0 %v500
    %v502 = vpop.xlane.xlu0 %501
    %vm503 = vcmp.eq.f32.partialorder %v500, %v502
    %v504 = vsel %vm503, %v499, inf
    %505 = vmin.xlane.f32.xlu0 %v504
    %v506 = vpop.xlane.xlu0 %505
    %v507 = vcvt.f32.s32 %v506
    %v508 = vcvt.f32.s32 %v502
    %v509 = vshll.u32 %v508, 16
    %v510 = vadd.s32 %v509, %v507
    %s511 = sld [smem:[#allocation2]]
    %p512 = scmp.gt.s32.totalorder %s511, 0
    %s513 = scalar_select %p512, 1, 0
    %v514 = vld [vmem:[%s1] sm:$0x3]
    %v515 = vstv %s513
    %v516 = vmul.u32 %v515, %v514
    %s517 = ssub.s32 1, %s513
    %v518 = vstv %s517
    %v519 = vmul.u32 %v518, %v510
    %v520 = vadd.s32 %v516, %v519
    %521 = vset.pattern.permute.xlu0 0
    %522 = vperm.xlu0 %521, %v520
    %v523 = vpop.permute.xlu0 %522
    %vm524 = vcmp.eq.s32.totalorder %v523, %v126
    %v525 = vsel %vm524, 1, 0
    %v526 = vcvt.s32.f32 %v525
    %v527 = vld [vmem:[%s5] sm:$0xff]
    %v528 = vld [vmem:[%s5 + $0x8] sm:$0xff]
    %v529 = vld [vmem:[%s5 + $0x10] sm:$0xff]
    %v530 = vld [vmem:[%s5 + $0x18] sm:$0xff]
    %v531 = vld [vmem:[%s5 + $0x20] sm:$0xff]
    %v532 = vld [vmem:[%s5 + $0x28] sm:$0xff]
    %v534 = vsel %vm145, %v526, 0
    %536 = vmatpush.msra.mxu0 0.0
    %537 = vmatpush.msra.mxu0 0.0
    %538 = vmatpush.msra.mxu0 0.0
    %539 = vmatpush.msra.mxu0 0.0
    %540 = vmatpush.msra.mxu0 0.0
    %541 = vmatpush.msra.mxu0 0.0
    %542 = vmatpush.msra.mxu0 0.0
    %543 = vmatpush.msra.mxu0 0.0
    %544 = vmatpush.msra.mxu0 0.0
    %545 = vmatpush.msra.mxu0 0.0
    %546 = vmatpush.msra.mxu0 %v532
    %547 = vmatpush.msra.mxu0 %v531
    %548 = vmatpush.msra.mxu0 %v530
    %549 = vmatpush.msra.mxu0 %v529
    %550 = vmatpush.msra.mxu0 %v528
    %551 = vmatpush.msra.mxu0 %v527
    %552 = vmatmul.f32.gmra.mxu0 %v534
    %v553 = vpop.f32.mrf.mxu0
    %v554 = vadd.f32 0.0, %v553
    %555 = vdwg.mxu0
    %v556 = vld [vmem:[%s6] sm:$0xff]
    %v557 = vld [vmem:[%s6 + $0x8] sm:$0xff]
    %v558 = vld [vmem:[%s6 + $0x10] sm:$0xff]
    %v559 = vld [vmem:[%s6 + $0x18] sm:$0xff]
    %560 = vmatpush.msra.mxu0 0.0
    %561 = vmatpush.msra.mxu0 0.0
    %562 = vmatpush.msra.mxu0 0.0
    %563 = vmatpush.msra.mxu0 0.0
    %564 = vmatpush.msra.mxu0 0.0
    %565 = vmatpush.msra.mxu0 0.0
    %566 = vmatpush.msra.mxu0 0.0
    %567 = vmatpush.msra.mxu0 0.0
    %568 = vmatpush.msra.mxu0 0.0
    %569 = vmatpush.msra.mxu0 0.0
    %570 = vmatpush.msra.mxu0 0.0
    %571 = vmatpush.msra.mxu0 0.0
    %572 = vmatpush.msra.mxu0 %v559
    %573 = vmatpush.msra.mxu0 %v558
    %574 = vmatpush.msra.mxu0 %v557
    %575 = vmatpush.msra.mxu0 %v556
    %576 = vmatmul.f32.gmra.mxu0 %v441
    %v577 = vpop.f32.mrf.mxu0
    %v578 = vadd.f32 0.0, %v577
    %579 = vdwg.mxu0
    %v581 = vrot.slane %v578, 1
    %v582 = vperm.slane %v578, 0
    %v583 = vperm.slane %v581, 0
    %v586 = vadd.f32 %v117, %v582
    %v587 = vadd.f32 %v118, %v583
    %v588 = vtanh.pop %v586
    %v589 = vtanh.pop %v587
    %v590 = vmul.f32 %v588, %v121
    %v591 = vmul.f32 %v589, %v121
    %v592 = vsel %vm173, %v590, 0.0
    %593 = vadd.xlane.f32.xlu0 %v592
    %v594 = vpop.xlane.xlu0 %593
    %v595 = vsel %vm173, %v591, 0.0
    %596 = vadd.xlane.f32.xlu0 %v595
    %v597 = vpop.xlane.xlu0 %596
    %v600 = vperm.slane %v594, %v126
    %v601 = vperm.slane %v597, %v126
    %v602 = vsel %vm219, %v601, %v600
    %v604 = vsel %vm124, -1e+10, %v602
    %v605 = vsel %vm223, %v604, -inf
    %606 = vmax.xlane.f32.xlu0 %v605
    %v607 = vpop.xlane.xlu0 %606
    %v608 = vsub.f32 %v604, %v607
    %v609 = vmul.f32 %v608, 1.442695
    %v610 = vpow.pop %v609
    %v611 = vsel %vm223, %v610, 0.0
    %612 = vadd.xlane.f32.xlu0 %v611
    %v613 = vpop.xlane.xlu0 %612
    %v614 = vrcp.pop %v613
    %v615 = vmul.f32 %v610, %v614
    %v617 = vrot.slane %v615, 1
    %v618 = vld [vmem:[%s3] sm:$0xff]
    %v619 = vld [vmem:[%s3 + $0x8] sm:$0xff]
    %v620 = vsel %vm237, %v615, 0
    %622 = vmatpush.msra.mxu0 0.0
    %623 = vmatpush.msra.mxu0 0.0
    %624 = vmatpush.msra.mxu0 0.0
    %625 = vmatpush.msra.mxu0 0.0
    %626 = vmatpush.msra.mxu0 0.0
    %627 = vmatpush.msra.mxu0 0.0
    %628 = vmatpush.msra.mxu0 0.0
    %629 = vmatpush.msra.mxu0 0.0
    %630 = vmatpush.msra.mxu0 0.0
    %631 = vmatpush.msra.mxu0 0.0
    %632 = vmatpush.msra.mxu0 0.0
    %633 = vmatpush.msra.mxu0 0.0
    %634 = vmatpush.msra.mxu0 0.0
    %635 = vmatpush.msra.mxu0 0.0
    %636 = vmatpush.msra.mxu0 0.0
    %637 = vmatpush.msra.mxu0 %v618
    %638 = vmatmul.f32.gmra.mxu0 %v620
    %v639 = vpop.f32.mrf.mxu0
    %v640 = vadd.f32 0.0, %v639
    %641 = vdwg.mxu0
    %v642 = vsel %vm237, %v617, 0
    %644 = vmatpush.msra.mxu0 0.0
    %645 = vmatpush.msra.mxu0 0.0
    %646 = vmatpush.msra.mxu0 0.0
    %647 = vmatpush.msra.mxu0 0.0
    %648 = vmatpush.msra.mxu0 0.0
    %649 = vmatpush.msra.mxu0 0.0
    %650 = vmatpush.msra.mxu0 0.0
    %651 = vmatpush.msra.mxu0 0.0
    %652 = vmatpush.msra.mxu0 0.0
    %653 = vmatpush.msra.mxu0 0.0
    %654 = vmatpush.msra.mxu0 0.0
    %655 = vmatpush.msra.mxu0 0.0
    %656 = vmatpush.msra.mxu0 0.0
    %657 = vmatpush.msra.mxu0 0.0
    %658 = vmatpush.msra.mxu0 0.0
    %659 = vmatpush.msra.mxu0 %v619
    %660 = vmatmul.f32.gmra.mxu0 %v642
    %v661 = vpop.f32.mrf.mxu0
    %v662 = vadd.f32 0.0, %v661
    %663 = vdwg.mxu0
    %v664 = vld [vmem:[%s10] sm:$0xff]
    %v665 = vld [vmem:[%s10 + $0x8] sm:$0xff]
    %v666 = vld [vmem:[%s10 + $0x10] sm:$0xff]
    %v667 = vld [vmem:[%s10 + $0x18] sm:$0xff]
    %v668 = vld [vmem:[%s11] sm:$0xff]
    %v669 = vld [vmem:[%s11 + $0x8] sm:$0xff]
    %v670 = vld [vmem:[%s11 + $0x10] sm:$0xff]
    %v671 = vld [vmem:[%s11 + $0x18] sm:$0xff]
    %v672 = vld [vmem:[%s11 + $0x20] sm:$0xff]
    %v673 = vld [vmem:[%s11 + $0x28] sm:$0xff]
    %v674 = vld [vmem:[%s11 + $0x30] sm:$0xff]
    %v675 = vld [vmem:[%s11 + $0x38] sm:$0xff]
    %v678 = vrot.slane %v662, 7
    %v679 = vsel %vm219, %v678, %v640
    %v680 = vsel %vm83, %v679, 0
    %682 = vmatpush.msra.mxu0 0.0
    %683 = vmatpush.msra.mxu0 0.0
    %684 = vmatpush.msra.mxu0 0.0
    %685 = vmatpush.msra.mxu0 0.0
    %686 = vmatpush.msra.mxu0 0.0
    %687 = vmatpush.msra.mxu0 0.0
    %688 = vmatpush.msra.mxu0 0.0
    %689 = vmatpush.msra.mxu0 0.0
    %690 = vmatpush.msra.mxu0 %v675
    %691 = vmatpush.msra.mxu0 %v674
    %692 = vmatpush.msra.mxu0 %v673
    %693 = vmatpush.msra.mxu0 %v672
    %694 = vmatpush.msra.mxu0 %v671
    %695 = vmatpush.msra.mxu0 %v670
    %696 = vmatpush.msra.mxu0 %v669
    %697 = vmatpush.msra.mxu0 %v668
    %698 = vmatmul.f32.gmra.mxu0 %v680
    %v699 = vpop.f32.mrf.mxu0
    %v700 = vadd.f32 0.0, %v699
    %701 = vdwg.mxu0
    %v703 = vsel %vm173, %v554, 0
    %705 = vmatpush.msra.mxu0 0.0
    %706 = vmatpush.msra.mxu0 0.0
    %707 = vmatpush.msra.mxu0 0.0
    %708 = vmatpush.msra.mxu0 0.0
    %709 = vmatpush.msra.mxu0 0.0
    %710 = vmatpush.msra.mxu0 0.0
    %711 = vmatpush.msra.mxu0 0.0
    %712 = vmatpush.msra.mxu0 0.0
    %713 = vmatpush.msra.mxu0 0.0
    %714 = vmatpush.msra.mxu0 0.0
    %715 = vmatpush.msra.mxu0 0.0
    %716 = vmatpush.msra.mxu0 0.0
    %717 = vmatpush.msra.mxu0 %v667
    %718 = vmatpush.msra.mxu0 %v666
    %719 = vmatpush.msra.mxu0 %v665
    %720 = vmatpush.msra.mxu0 %v664
    %721 = vmatmul.f32.gmra.mxu0 %v703
    %v722 = vpop.f32.mrf.mxu0
    %v723 = vadd.f32 %v700, %v722
    %724 = vdwg.mxu0
    %v725 = vld [vmem:[%s12] sm:$0xff]
    %v726 = vld [vmem:[%s12 + $0x8] sm:$0xff]
    %v727 = vld [vmem:[%s12 + $0x10] sm:$0xff]
    %v728 = vld [vmem:[%s12 + $0x18] sm:$0xff]
    %729 = vmatpush.msra.mxu0 0.0
    %730 = vmatpush.msra.mxu0 0.0
    %731 = vmatpush.msra.mxu0 0.0
    %732 = vmatpush.msra.mxu0 0.0
    %733 = vmatpush.msra.mxu0 0.0
    %734 = vmatpush.msra.mxu0 0.0
    %735 = vmatpush.msra.mxu0 0.0
    %736 = vmatpush.msra.mxu0 0.0
    %737 = vmatpush.msra.mxu0 0.0
    %738 = vmatpush.msra.mxu0 0.0
    %739 = vmatpush.msra.mxu0 0.0
    %740 = vmatpush.msra.mxu0 0.0
    %741 = vmatpush.msra.mxu0 %v728
    %742 = vmatpush.msra.mxu0 %v727
    %743 = vmatpush.msra.mxu0 %v726
    %744 = vmatpush.msra.mxu0 %v725
    %745 = vmatmul.f32.gmra.mxu0 %v441
    %v746 = vpop.f32.mrf.mxu0
    %v747 = vadd.f32 0.0, %v746
    %748 = vdwg.mxu0
    %v749 = vadd.f32 %v723, %v747
    %v750 = vadd.f32 %v749, %v129
    %v751 = vxor.u32 %v750, 2147483648
    %v752 = vmul.f32 %v751, 1.442695
    %v753 = vpow.pop %v752
    %v754 = vadd.f32 %v753, 1.0
    %v755 = vrcp.pop %v754
    %v756 = vmul.f32 %v754, %v755
    %v757 = vsub.f32 1.0, %v756
    %v758 = vmul.f32 %v755, %v757
    %v759 = vadd.f32 %v755, %v758
    %vm760 = vweird.f32 %v754
    %vm761 = vweird.f32 %v755
    %vm762 = vmor %vm760, %vm761
    %v763 = vsel %vm762, %v755, %v759
    %v764 = vand.u32 2147483647, %v754
    %vm765 = vcmp.eq.f32.partialorder %v764, 8.507059e+37
    %v766 = vand.u32 %v754, 2147483648
    %v767 = vor.u32 1.1754944e-38, %v766
    %v768 = vsel %vm765, %v767, %v763
    %v769 = vmul.f32 1.0, %v768
    %v770 = vtanh.pop %v750
    %v771 = vmul.f32 %v769, %v399
    %773 = vrot.lane.b32.xlu0 %v770, 64
    %v774 = vpop.permute.xlu0 %773
    %v776 = vmul.f32 %v769, %v774
    %778 = vrot.lane.b32.xlu0 %v776, 32
    %v779 = vpop.permute.xlu0 %778
    %v781 = vadd.f32 %v771, %v779
    %v782 = vtanh.pop %v781
    %784 = vrot.lane.b32.xlu0 %v782, 64
    %v785 = vpop.permute.xlu0 %784
    %v787 = vmul.f32 %v769, %v785
    %v788 = vld [vmem:[%s14] sm:$0xff]
    %v789 = vld [vmem:[%s14 + $0x8] sm:$0xff]
    %v790 = vld [vmem:[%s14 + $0x10] sm:$0xff]
    %v791 = vld [vmem:[%s14 + $0x18] sm:$0xff]
    %v792 = vld [vmem:[%s15] sm:$0xff]
    %v793 = vld [vmem:[%s15 + $0x8] sm:$0xff]
    %v794 = vld [vmem:[%s15 + $0x10] sm:$0xff]
    %v795 = vld [vmem:[%s15 + $0x18] sm:$0xff]
    %v796 = vld [vmem:[%s15 + $0x20] sm:$0xff]
    %v797 = vld [vmem:[%s15 + $0x28] sm:$0xff]
    %v798 = vld [vmem:[%s15 + $0x30] sm:$0xff]
    %v799 = vld [vmem:[%s15 + $0x38] sm:$0xff]
    %800 = vmatpush.msra.mxu0 0.0
    %801 = vmatpush.msra.mxu0 0.0
    %802 = vmatpush.msra.mxu0 0.0
    %803 = vmatpush.msra.mxu0 0.0
    %804 = vmatpush.msra.mxu0 0.0
    %805 = vmatpush.msra.mxu0 0.0
    %806 = vmatpush.msra.mxu0 0.0
    %807 = vmatpush.msra.mxu0 0.0
    %808 = vmatpush.msra.mxu0 %v799
    %809 = vmatpush.msra.mxu0 %v798
    %810 = vmatpush.msra.mxu0 %v797
    %811 = vmatpush.msra.mxu0 %v796
    %812 = vmatpush.msra.mxu0 %v795
    %813 = vmatpush.msra.mxu0 %v794
    %814 = vmatpush.msra.mxu0 %v793
    %815 = vmatpush.msra.mxu0 %v792
    %816 = vmatmul.f32.gmra.mxu0 %v680
    %v817 = vpop.f32.mrf.mxu0
    %v818 = vadd.f32 0.0, %v817
    %819 = vdwg.mxu0
    %821 = vrot.lane.b32.xlu0 %v787, 32
    %v822 = vpop.permute.xlu0 %821
    %v823 = vsel %vm173, %v822, 0
    %825 = vmatpush.msra.mxu0 0.0
    %826 = vmatpush.msra.mxu0 0.0
    %827 = vmatpush.msra.mxu0 0.0
    %828 = vmatpush.msra.mxu0 0.0
    %829 = vmatpush.msra.mxu0 0.0
    %830 = vmatpush.msra.mxu0 0.0
    %831 = vmatpush.msra.mxu0 0.0
    %832 = vmatpush.msra.mxu0 0.0
    %833 = vmatpush.msra.mxu0 0.0
    %834 = vmatpush.msra.mxu0 0.0
    %835 = vmatpush.msra.mxu0 0.0
    %836 = vmatpush.msra.mxu0 0.0
    %837 = vmatpush.msra.mxu0 %v791
    %838 = vmatpush.msra.mxu0 %v790
    %839 = vmatpush.msra.mxu0 %v789
    %840 = vmatpush.msra.mxu0 %v788
    %841 = vmatmul.f32.gmra.mxu0 %v823
    %v842 = vpop.f32.mrf.mxu0
    %v843 = vadd.f32 %v818, %v842
    %844 = vdwg.mxu0
    %v845 = vld [vmem:[%s16] sm:$0xff]
    %v846 = vld [vmem:[%s16 + $0x8] sm:$0xff]
    %v847 = vld [vmem:[%s16 + $0x10] sm:$0xff]
    %v848 = vld [vmem:[%s16 + $0x18] sm:$0xff]
    %849 = vmatpush.msra.mxu0 0.0
    %850 = vmatpush.msra.mxu0 0.0
    %851 = vmatpush.msra.mxu0 0.0
    %852 = vmatpush.msra.mxu0 0.0
    %853 = vmatpush.msra.mxu0 0.0
    %854 = vmatpush.msra.mxu0 0.0
    %855 = vmatpush.msra.mxu0 0.0
    %856 = vmatpush.msra.mxu0 0.0
    %857 = vmatpush.msra.mxu0 0.0
    %858 = vmatpush.msra.mxu0 0.0
    %859 = vmatpush.msra.mxu0 0.0
    %860 = vmatpush.msra.mxu0 0.0
    %861 = vmatpush.msra.mxu0 %v848
    %862 = vmatpush.msra.mxu0 %v847
    %863 = vmatpush.msra.mxu0 %v846
    %864 = vmatpush.msra.mxu0 %v845
    %865 = vmatmul.f32.gmra.mxu0 %v703
    %v866 = vpop.f32.mrf.mxu0
    %v867 = vadd.f32 0.0, %v866
    %868 = vdwg.mxu0
    %v869 = vadd.f32 %v843, %v867
    %v870 = vadd.f32 %v869, %v133
    %s871 = scalar_lea.vmem [#allocation5], 2
    %872 = vst.msk [vmem:[%s871] sm:$0x3] %vm489, %v870
    %v873 = vsel %vm489, %v870, -inf
    %874 = vmax.xlane.f32.xlu0 %v873
    %v875 = vpop.xlane.xlu0 %874
    %vm876 = vcmp.ge.f32.partialorder %v870, %v875
    %v877 = vsel %vm876, %v126, 48
    %v878 = vsel %vm489, %v877, 2147483647
    %v879 = vand.u32 %v878, 65535
    %v880 = vshra.s32 %v878, 16
    %v881 = vcvt.s32.f32 %v879
    %v882 = vcvt.s32.f32 %v880
    %883 = vmin.xlane.f32.xlu0 %v882
    %v884 = vpop.xlane.xlu0 %883
    %vm885 = vcmp.eq.f32.partialorder %v882, %v884
    %v886 = vsel %vm885, %v881, inf
    %887 = vmin.xlane.f32.xlu0 %v886
    %v888 = vpop.xlane.xlu0 %887
    %v889 = vcvt.f32.s32 %v888
    %v890 = vcvt.f32.s32 %v884
    %v891 = vshll.u32 %v890, 16
    %v892 = vadd.s32 %v891, %v889
    %s893 = sld [smem:[#allocation2 + $0x1]]
    %p894 = scmp.gt.s32.totalorder %s893, 0
    %s895 = scalar_select %p894, 1, 0
    %s896 = scalar_lea.vmem %s1, 2
    %v897 = vld [vmem:[%s896] sm:$0x3]
    %v898 = vstv %s895
    %v899 = vmul.u32 %v898, %v897
    %s900 = ssub.s32 1, %s895
    %v901 = vstv %s900
    %v902 = vmul.u32 %v901, %v892
    %v903 = vadd.s32 %v899, %v902
    %904 = vset.pattern.permute.xlu0 0
    %905 = vperm.xlu0 %904, %v903
    %v906 = vpop.permute.xlu0 %905
    %vm907 = vcmp.eq.s32.totalorder %v906, %v126
    %v908 = vsel %vm907, 1, 0
    %v909 = vcvt.s32.f32 %v908
    %v910 = vld [vmem:[%s5] sm:$0xff]
    %v911 = vld [vmem:[%s5 + $0x8] sm:$0xff]
    %v912 = vld [vmem:[%s5 + $0x10] sm:$0xff]
    %v913 = vld [vmem:[%s5 + $0x18] sm:$0xff]
    %v914 = vld [vmem:[%s5 + $0x20] sm:$0xff]
    %v915 = vld [vmem:[%s5 + $0x28] sm:$0xff]
    %v917 = vsel %vm145, %v909, 0
    %919 = vmatpush.msra.mxu0 0.0
    %920 = vmatpush.msra.mxu0 0.0
    %921 = vmatpush.msra.mxu0 0.0
    %922 = vmatpush.msra.mxu0 0.0
    %923 = vmatpush.msra.mxu0 0.0
    %924 = vmatpush.msra.mxu0 0.0
    %925 = vmatpush.msra.mxu0 0.0
    %926 = vmatpush.msra.mxu0 0.0
    %927 = vmatpush.msra.mxu0 0.0
    %928 = vmatpush.msra.mxu0 0.0
    %929 = vmatpush.msra.mxu0 %v915
    %930 = vmatpush.msra.mxu0 %v914
    %931 = vmatpush.msra.mxu0 %v913
    %932 = vmatpush.msra.mxu0 %v912
    %933 = vmatpush.msra.mxu0 %v911
    %934 = vmatpush.msra.mxu0 %v910
    %935 = vmatmul.f32.gmra.mxu0 %v917
    %v936 = vpop.f32.mrf.mxu0
    %v937 = vadd.f32 0.0, %v936
    %938 = vdwg.mxu0
    %v939 = vld [vmem:[%s6] sm:$0xff]
    %v940 = vld [vmem:[%s6 + $0x8] sm:$0xff]
    %v941 = vld [vmem:[%s6 + $0x10] sm:$0xff]
    %v942 = vld [vmem:[%s6 + $0x18] sm:$0xff]
    %943 = vmatpush.msra.mxu0 0.0
    %944 = vmatpush.msra.mxu0 0.0
    %945 = vmatpush.msra.mxu0 0.0
    %946 = vmatpush.msra.mxu0 0.0
    %947 = vmatpush.msra.mxu0 0.0
    %948 = vmatpush.msra.mxu0 0.0
    %949 = vmatpush.msra.mxu0 0.0
    %950 = vmatpush.msra.mxu0 0.0
    %951 = vmatpush.msra.mxu0 0.0
    %952 = vmatpush.msra.mxu0 0.0
    %953 = vmatpush.msra.mxu0 0.0
    %954 = vmatpush.msra.mxu0 0.0
    %955 = vmatpush.msra.mxu0 %v942
    %956 = vmatpush.msra.mxu0 %v941
    %957 = vmatpush.msra.mxu0 %v940
    %958 = vmatpush.msra.mxu0 %v939
    %959 = vmatmul.f32.gmra.mxu0 %v823
    %v960 = vpop.f32.mrf.mxu0
    %v961 = vadd.f32 0.0, %v960
    %962 = vdwg.mxu0
    %v964 = vrot.slane %v961, 1
    %v965 = vperm.slane %v961, 0
    %v966 = vperm.slane %v964, 0
    %v969 = vadd.f32 %v117, %v965
    %v970 = vadd.f32 %v118, %v966
    %v971 = vtanh.pop %v969
    %v972 = vtanh.pop %v970
    %v973 = vmul.f32 %v971, %v121
    %v974 = vmul.f32 %v972, %v121
    %v975 = vsel %vm173, %v973, 0.0
    %976 = vadd.xlane.f32.xlu0 %v975
    %v977 = vpop.xlane.xlu0 %976
    %v978 = vsel %vm173, %v974, 0.0
    %979 = vadd.xlane.f32.xlu0 %v978
    %v980 = vpop.xlane.xlu0 %979
    %v983 = vperm.slane %v977, %v126
    %v984 = vperm.slane %v980, %v126
    %v985 = vsel %vm219, %v984, %v983
    %v987 = vsel %vm124, -1e+10, %v985
    %v988 = vsel %vm223, %v987, -inf
    %989 = vmax.xlane.f32.xlu0 %v988
    %v990 = vpop.xlane.xlu0 %989
    %v991 = vsub.f32 %v987, %v990
    %v992 = vmul.f32 %v991, 1.442695
    %v993 = vpow.pop %v992
    %v994 = vsel %vm223, %v993, 0.0
    %995 = vadd.xlane.f32.xlu0 %v994
    %v996 = vpop.xlane.xlu0 %995
    %v997 = vrcp.pop %v996
    %v998 = vmul.f32 %v993, %v997
    %v1000 = vrot.slane %v998, 1
    %v1001 = vld [vmem:[%s3] sm:$0xff]
    %v1002 = vld [vmem:[%s3 + $0x8] sm:$0xff]
    %v1003 = vsel %vm237, %v998, 0
    %1005 = vmatpush.msra.mxu0 0.0
    %1006 = vmatpush.msra.mxu0 0.0
    %1007 = vmatpush.msra.mxu0 0.0
    %1008 = vmatpush.msra.mxu0 0.0
    %1009 = vmatpush.msra.mxu0 0.0
    %1010 = vmatpush.msra.mxu0 0.0
    %1011 = vmatpush.msra.mxu0 0.0
    %1012 = vmatpush.msra.mxu0 0.0
    %1013 = vmatpush.msra.mxu0 0.0
    %1014 = vmatpush.msra.mxu0 0.0
    %1015 = vmatpush.msra.mxu0 0.0
    %1016 = vmatpush.msra.mxu0 0.0
    %1017 = vmatpush.msra.mxu0 0.0
    %1018 = vmatpush.msra.mxu0 0.0
    %1019 = vmatpush.msra.mxu0 0.0
    %1020 = vmatpush.msra.mxu0 %v1001
    %1021 = vmatmul.f32.gmra.mxu0 %v1003
    %v1022 = vpop.f32.mrf.mxu0
    %v1023 = vadd.f32 0.0, %v1022
    %1024 = vdwg.mxu0
    %v1025 = vsel %vm237, %v1000, 0
    %1027 = vmatpush.msra.mxu0 0.0
    %1028 = vmatpush.msra.mxu0 0.0
    %1029 = vmatpush.msra.mxu0 0.0
    %1030 = vmatpush.msra.mxu0 0.0
    %1031 = vmatpush.msra.mxu0 0.0
    %1032 = vmatpush.msra.mxu0 0.0
    %1033 = vmatpush.msra.mxu0 0.0
    %1034 = vmatpush.msra.mxu0 0.0
    %1035 = vmatpush.msra.mxu0 0.0
    %1036 = vmatpush.msra.mxu0 0.0
    %1037 = vmatpush.msra.mxu0 0.0
    %1038 = vmatpush.msra.mxu0 0.0
    %1039 = vmatpush.msra.mxu0 0.0
    %1040 = vmatpush.msra.mxu0 0.0
    %1041 = vmatpush.msra.mxu0 0.0
    %1042 = vmatpush.msra.mxu0 %v1002
    %1043 = vmatmul.f32.gmra.mxu0 %v1025
    %v1044 = vpop.f32.mrf.mxu0
    %v1045 = vadd.f32 0.0, %v1044
    %1046 = vdwg.mxu0
    %v1047 = vld [vmem:[%s10] sm:$0xff]
    %v1048 = vld [vmem:[%s10 + $0x8] sm:$0xff]
    %v1049 = vld [vmem:[%s10 + $0x10] sm:$0xff]
    %v1050 = vld [vmem:[%s10 + $0x18] sm:$0xff]
    %v1051 = vld [vmem:[%s11] sm:$0xff]
    %v1052 = vld [vmem:[%s11 + $0x8] sm:$0xff]
    %v1053 = vld [vmem:[%s11 + $0x10] sm:$0xff]
    %v1054 = vld [vmem:[%s11 + $0x18] sm:$0xff]
    %v1055 = vld [vmem:[%s11 + $0x20] sm:$0xff]
    %v1056 = vld [vmem:[%s11 + $0x28] sm:$0xff]
    %v1057 = vld [vmem:[%s11 + $0x30] sm:$0xff]
    %v1058 = vld [vmem:[%s11 + $0x38] sm:$0xff]
    %v1061 = vrot.slane %v1045, 7
    %v1062 = vsel %vm219, %v1061, %v1023
    %v1063 = vsel %vm83, %v1062, 0
    %1065 = vmatpush.msra.mxu0 0.0
    %1066 = vmatpush.msra.mxu0 0.0
    %1067 = vmatpush.msra.mxu0 0.0
    %1068 = vmatpush.msra.mxu0 0.0
    %1069 = vmatpush.msra.mxu0 0.0
    %1070 = vmatpush.msra.mxu0 0.0
    %1071 = vmatpush.msra.mxu0 0.0
    %1072 = vmatpush.msra.mxu0 0.0
    %1073 = vmatpush.msra.mxu0 %v1058
    %1074 = vmatpush.msra.mxu0 %v1057
    %1075 = vmatpush.msra.mxu0 %v1056
    %1076 = vmatpush.msra.mxu0 %v1055
    %1077 = vmatpush.msra.mxu0 %v1054
    %1078 = vmatpush.msra.mxu0 %v1053
    %1079 = vmatpush.msra.mxu0 %v1052
    %1080 = vmatpush.msra.mxu0 %v1051
    %1081 = vmatmul.f32.gmra.mxu0 %v1063
    %v1082 = vpop.f32.mrf.mxu0
    %v1083 = vadd.f32 0.0, %v1082
    %1084 = vdwg.mxu0
    %v1086 = vsel %vm173, %v937, 0
    %1088 = vmatpush.msra.mxu0 0.0
    %1089 = vmatpush.msra.mxu0 0.0
    %1090 = vmatpush.msra.mxu0 0.0
    %1091 = vmatpush.msra.mxu0 0.0
    %1092 = vmatpush.msra.mxu0 0.0
    %1093 = vmatpush.msra.mxu0 0.0
    %1094 = vmatpush.msra.mxu0 0.0
    %1095 = vmatpush.msra.mxu0 0.0
    %1096 = vmatpush.msra.mxu0 0.0
    %1097 = vmatpush.msra.mxu0 0.0
    %1098 = vmatpush.msra.mxu0 0.0
    %1099 = vmatpush.msra.mxu0 0.0
    %1100 = vmatpush.msra.mxu0 %v1050
    %1101 = vmatpush.msra.mxu0 %v1049
    %1102 = vmatpush.msra.mxu0 %v1048
    %1103 = vmatpush.msra.mxu0 %v1047
    %1104 = vmatmul.f32.gmra.mxu0 %v1086
    %v1105 = vpop.f32.mrf.mxu0
    %v1106 = vadd.f32 %v1083, %v1105
    %1107 = vdwg.mxu0
    %v1108 = vld [vmem:[%s12] sm:$0xff]
    %v1109 = vld [vmem:[%s12 + $0x8] sm:$0xff]
    %v1110 = vld [vmem:[%s12 + $0x10] sm:$0xff]
    %v1111 = vld [vmem:[%s12 + $0x18] sm:$0xff]
    %1112 = vmatpush.msra.mxu0 0.0
    %1113 = vmatpush.msra.mxu0 0.0
    %1114 = vmatpush.msra.mxu0 0.0
    %1115 = vmatpush.msra.mxu0 0.0
    %1116 = vmatpush.msra.mxu0 0.0
    %1117 = vmatpush.msra.mxu0 0.0
    %1118 = vmatpush.msra.mxu0 0.0
    %1119 = vmatpush.msra.mxu0 0.0
    %1120 = vmatpush.msra.mxu0 0.0
    %1121 = vmatpush.msra.mxu0 0.0
    %1122 = vmatpush.msra.mxu0 0.0
    %1123 = vmatpush.msra.mxu0 0.0
    %1124 = vmatpush.msra.mxu0 %v1111
    %1125 = vmatpush.msra.mxu0 %v1110
    %1126 = vmatpush.msra.mxu0 %v1109
    %1127 = vmatpush.msra.mxu0 %v1108
    %1128 = vmatmul.f32.gmra.mxu0 %v823
    %v1129 = vpop.f32.mrf.mxu0
    %v1130 = vadd.f32 0.0, %v1129
    %1131 = vdwg.mxu0
    %v1132 = vadd.f32 %v1106, %v1130
    %v1133 = vadd.f32 %v1132, %v129
    %v1134 = vxor.u32 %v1133, 2147483648
    %v1135 = vmul.f32 %v1134, 1.442695
    %v1136 = vpow.pop %v1135
    %v1137 = vadd.f32 %v1136, 1.0
    %v1138 = vrcp.pop %v1137
    %v1139 = vmul.f32 %v1137, %v1138
    %v1140 = vsub.f32 1.0, %v1139
    %v1141 = vmul.f32 %v1138, %v1140
    %v1142 = vadd.f32 %v1138, %v1141
    %vm1143 = vweird.f32 %v1137
    %vm1144 = vweird.f32 %v1138
    %vm1145 = vmor %vm1143, %vm1144
    %v1146 = vsel %vm1145, %v1138, %v1142
    %v1147 = vand.u32 2147483647, %v1137
    %vm1148 = vcmp.eq.f32.partialorder %v1147, 8.507059e+37
    %v1149 = vand.u32 %v1137, 2147483648
    %v1150 = vor.u32 1.1754944e-38, %v1149
    %v1151 = vsel %vm1148, %v1150, %v1146
    %v1152 = vmul.f32 1.0, %v1151
    %v1153 = vtanh.pop %v1133
    %v1154 = vmul.f32 %v1152, %v781
    %1156 = vrot.lane.b32.xlu0 %v1153, 64
    %v1157 = vpop.permute.xlu0 %1156
    %v1159 = vmul.f32 %v1152, %v1157
    %1161 = vrot.lane.b32.xlu0 %v1159, 32
    %v1162 = vpop.permute.xlu0 %1161
    %v1164 = vadd.f32 %v1154, %v1162
    %v1165 = vtanh.pop %v1164
    %1167 = vrot.lane.b32.xlu0 %v1165, 64
    %v1168 = vpop.permute.xlu0 %1167
    %v1170 = vmul.f32 %v1152, %v1168
    %v1171 = vld [vmem:[%s14] sm:$0xff]
    %v1172 = vld [vmem:[%s14 + $0x8] sm:$0xff]
    %v1173 = vld [vmem:[%s14 + $0x10] sm:$0xff]
    %v1174 = vld [vmem:[%s14 + $0x18] sm:$0xff]
    %v1175 = vld [vmem:[%s15] sm:$0xff]
    %v1176 = vld [vmem:[%s15 + $0x8] sm:$0xff]
    %v1177 = vld [vmem:[%s15 + $0x10] sm:$0xff]
    %v1178 = vld [vmem:[%s15 + $0x18] sm:$0xff]
    %v1179 = vld [vmem:[%s15 + $0x20] sm:$0xff]
    %v1180 = vld [vmem:[%s15 + $0x28] sm:$0xff]
    %v1181 = vld [vmem:[%s15 + $0x30] sm:$0xff]
    %v1182 = vld [vmem:[%s15 + $0x38] sm:$0xff]
    %1183 = vmatpush.msra.mxu0 0.0
    %1184 = vmatpush.msra.mxu0 0.0
    %1185 = vmatpush.msra.mxu0 0.0
    %1186 = vmatpush.msra.mxu0 0.0
    %1187 = vmatpush.msra.mxu0 0.0
    %1188 = vmatpush.msra.mxu0 0.0
    %1189 = vmatpush.msra.mxu0 0.0
    %1190 = vmatpush.msra.mxu0 0.0
    %1191 = vmatpush.msra.mxu0 %v1182
    %1192 = vmatpush.msra.mxu0 %v1181
    %1193 = vmatpush.msra.mxu0 %v1180
    %1194 = vmatpush.msra.mxu0 %v1179
    %1195 = vmatpush.msra.mxu0 %v1178
    %1196 = vmatpush.msra.mxu0 %v1177
    %1197 = vmatpush.msra.mxu0 %v1176
    %1198 = vmatpush.msra.mxu0 %v1175
    %1199 = vmatmul.f32.gmra.mxu0 %v1063
    %v1200 = vpop.f32.mrf.mxu0
    %v1201 = vadd.f32 0.0, %v1200
    %1202 = vdwg.mxu0
    %1204 = vrot.lane.b32.xlu0 %v1170, 32
    %v1205 = vpop.permute.xlu0 %1204
    %v1206 = vsel %vm173, %v1205, 0
    %1208 = vmatpush.msra.mxu0 0.0
    %1209 = vmatpush.msra.mxu0 0.0
    %1210 = vmatpush.msra.mxu0 0.0
    %1211 = vmatpush.msra.mxu0 0.0
    %1212 = vmatpush.msra.mxu0 0.0
    %1213 = vmatpush.msra.mxu0 0.0
    %1214 = vmatpush.msra.mxu0 0.0
    %1215 = vmatpush.msra.mxu0 0.0
    %1216 = vmatpush.msra.mxu0 0.0
    %1217 = vmatpush.msra.mxu0 0.0
    %1218 = vmatpush.msra.mxu0 0.0
    %1219 = vmatpush.msra.mxu0 0.0
    %1220 = vmatpush.msra.mxu0 %v1174
    %1221 = vmatpush.msra.mxu0 %v1173
    %1222 = vmatpush.msra.mxu0 %v1172
    %1223 = vmatpush.msra.mxu0 %v1171
    %1224 = vmatmul.f32.gmra.mxu0 %v1206
    %v1225 = vpop.f32.mrf.mxu0
    %v1226 = vadd.f32 %v1201, %v1225
    %1227 = vdwg.mxu0
    %v1228 = vld [vmem:[%s16] sm:$0xff]
    %v1229 = vld [vmem:[%s16 + $0x8] sm:$0xff]
    %v1230 = vld [vmem:[%s16 + $0x10] sm:$0xff]
    %v1231 = vld [vmem:[%s16 + $0x18] sm:$0xff]
    %1232 = vmatpush.msra.mxu0 0.0
    %1233 = vmatpush.msra.mxu0 0.0
    %1234 = vmatpush.msra.mxu0 0.0
    %1235 = vmatpush.msra.mxu0 0.0
    %1236 = vmatpush.msra.mxu0 0.0
    %1237 = vmatpush.msra.mxu0 0.0
    %1238 = vmatpush.msra.mxu0 0.0
    %1239 = vmatpush.msra.mxu0 0.0
    %1240 = vmatpush.msra.mxu0 0.0
    %1241 = vmatpush.msra.mxu0 0.0
    %1242 = vmatpush.msra.mxu0 0.0
    %1243 = vmatpush.msra.mxu0 0.0
    %1244 = vmatpush.msra.mxu0 %v1231
    %1245 = vmatpush.msra.mxu0 %v1230
    %1246 = vmatpush.msra.mxu0 %v1229
    %1247 = vmatpush.msra.mxu0 %v1228
    %1248 = vmatmul.f32.gmra.mxu0 %v1086
    %v1249 = vpop.f32.mrf.mxu0
    %v1250 = vadd.f32 0.0, %v1249
    %1251 = vdwg.mxu0
    %v1252 = vadd.f32 %v1226, %v1250
    %v1253 = vadd.f32 %v1252, %v133
    %s1254 = scalar_lea.vmem [#allocation5], 4
    %1255 = vst.msk [vmem:[%s1254] sm:$0x3] %vm489, %v1253
    %v1256 = vsel %vm489, %v1253, -inf
    %1257 = vmax.xlane.f32.xlu0 %v1256
    %v1258 = vpop.xlane.xlu0 %1257
    %vm1259 = vcmp.ge.f32.partialorder %v1253, %v1258
    %v1260 = vsel %vm1259, %v126, 48
    %v1261 = vsel %vm489, %v1260, 2147483647
    %v1262 = vand.u32 %v1261, 65535
    %v1263 = vshra.s32 %v1261, 16
    %v1264 = vcvt.s32.f32 %v1262
    %v1265 = vcvt.s32.f32 %v1263
    %1266 = vmin.xlane.f32.xlu0 %v1265
    %v1267 = vpop.xlane.xlu0 %1266
    %vm1268 = vcmp.eq.f32.partialorder %v1265, %v1267
    %v1269 = vsel %vm1268, %v1264, inf
    %1270 = vmin.xlane.f32.xlu0 %v1269
    %v1271 = vpop.xlane.xlu0 %1270
    %v1272 = vcvt.f32.s32 %v1271
    %v1273 = vcvt.f32.s32 %v1267
    %v1274 = vshll.u32 %v1273, 16
    %v1275 = vadd.s32 %v1274, %v1272
    %s1276 = sld [smem:[#allocation2 + $0x2]]
    %p1277 = scmp.gt.s32.totalorder %s1276, 0
    %s1278 = scalar_select %p1277, 1, 0
    %s1279 = scalar_lea.vmem %s1, 4
    %v1280 = vld [vmem:[%s1279] sm:$0x3]
    %v1281 = vstv %s1278
    %v1282 = vmul.u32 %v1281, %v1280
    %s1283 = ssub.s32 1, %s1278
    %v1284 = vstv %s1283
    %v1285 = vmul.u32 %v1284, %v1275
    %v1286 = vadd.s32 %v1282, %v1285
    %1287 = vset.pattern.permute.xlu0 0
    %1288 = vperm.xlu0 %1287, %v1286
    %v1289 = vpop.permute.xlu0 %1288
    %vm1290 = vcmp.eq.s32.totalorder %v1289, %v126
    %v1291 = vsel %vm1290, 1, 0
    %v1292 = vcvt.s32.f32 %v1291
    %v1293 = vld [vmem:[%s5] sm:$0xff]
    %v1294 = vld [vmem:[%s5 + $0x8] sm:$0xff]
    %v1295 = vld [vmem:[%s5 + $0x10] sm:$0xff]
    %v1296 = vld [vmem:[%s5 + $0x18] sm:$0xff]
    %v1297 = vld [vmem:[%s5 + $0x20] sm:$0xff]
    %v1298 = vld [vmem:[%s5 + $0x28] sm:$0xff]
    %v1300 = vsel %vm145, %v1292, 0
    %1302 = vmatpush.msra.mxu0 0.0
    %1303 = vmatpush.msra.mxu0 0.0
    %1304 = vmatpush.msra.mxu0 0.0
    %1305 = vmatpush.msra.mxu0 0.0
    %1306 = vmatpush.msra.mxu0 0.0
    %1307 = vmatpush.msra.mxu0 0.0
    %1308 = vmatpush.msra.mxu0 0.0
    %1309 = vmatpush.msra.mxu0 0.0
    %1310 = vmatpush.msra.mxu0 0.0
    %1311 = vmatpush.msra.mxu0 0.0
    %1312 = vmatpush.msra.mxu0 %v1298
    %1313 = vmatpush.msra.mxu0 %v1297
    %1314 = vmatpush.msra.mxu0 %v1296
    %1315 = vmatpush.msra.mxu0 %v1295
    %1316 = vmatpush.msra.mxu0 %v1294
    %1317 = vmatpush.msra.mxu0 %v1293
    %1318 = vmatmul.f32.gmra.mxu0 %v1300
    %v1319 = vpop.f32.mrf.mxu0
    %v1320 = vadd.f32 0.0, %v1319
    %1321 = vdwg.mxu0
    %v1322 = vld [vmem:[%s6] sm:$0xff]
    %v1323 = vld [vmem:[%s6 + $0x8] sm:$0xff]
    %v1324 = vld [vmem:[%s6 + $0x10] sm:$0xff]
    %v1325 = vld [vmem:[%s6 + $0x18] sm:$0xff]
    %1326 = vmatpush.msra.mxu0 0.0
    %1327 = vmatpush.msra.mxu0 0.0
    %1328 = vmatpush.msra.mxu0 0.0
    %1329 = vmatpush.msra.mxu0 0.0
    %1330 = vmatpush.msra.mxu0 0.0
    %1331 = vmatpush.msra.mxu0 0.0
    %1332 = vmatpush.msra.mxu0 0.0
    %1333 = vmatpush.msra.mxu0 0.0
    %1334 = vmatpush.msra.mxu0 0.0
    %1335 = vmatpush.msra.mxu0 0.0
    %1336 = vmatpush.msra.mxu0 0.0
    %1337 = vmatpush.msra.mxu0 0.0
    %1338 = vmatpush.msra.mxu0 %v1325
    %1339 = vmatpush.msra.mxu0 %v1324
    %1340 = vmatpush.msra.mxu0 %v1323
    %1341 = vmatpush.msra.mxu0 %v1322
    %1342 = vmatmul.f32.gmra.mxu0 %v1206
    %v1343 = vpop.f32.mrf.mxu0
    %v1344 = vadd.f32 0.0, %v1343
    %1345 = vdwg.mxu0
    %v1347 = vrot.slane %v1344, 1
    %v1348 = vperm.slane %v1344, 0
    %v1349 = vperm.slane %v1347, 0
    %v1352 = vadd.f32 %v117, %v1348
    %v1353 = vadd.f32 %v118, %v1349
    %v1354 = vtanh.pop %v1352
    %v1355 = vtanh.pop %v1353
    %v1356 = vmul.f32 %v1354, %v121
    %v1357 = vmul.f32 %v1355, %v121
    %v1358 = vsel %vm173, %v1356, 0.0
    %1359 = vadd.xlane.f32.xlu0 %v1358
    %v1360 = vpop.xlane.xlu0 %1359
    %v1361 = vsel %vm173, %v1357, 0.0
    %1362 = vadd.xlane.f32.xlu0 %v1361
    %v1363 = vpop.xlane.xlu0 %1362
    %v1366 = vperm.slane %v1360, %v126
    %v1367 = vperm.slane %v1363, %v126
    %v1368 = vsel %vm219, %v1367, %v1366
    %v1370 = vsel %vm124, -1e+10, %v1368
    %v1371 = vsel %vm223, %v1370, -inf
    %1372 = vmax.xlane.f32.xlu0 %v1371
    %v1373 = vpop.xlane.xlu0 %1372
    %v1374 = vsub.f32 %v1370, %v1373
    %v1375 = vmul.f32 %v1374, 1.442695
    %v1376 = vpow.pop %v1375
    %v1377 = vsel %vm223, %v1376, 0.0
    %1378 = vadd.xlane.f32.xlu0 %v1377
    %v1379 = vpop.xlane.xlu0 %1378
    %v1380 = vrcp.pop %v1379
    %v1381 = vmul.f32 %v1376, %v1380
    %v1383 = vrot.slane %v1381, 1
    %v1384 = vld [vmem:[%s3] sm:$0xff]
    %v1385 = vld [vmem:[%s3 + $0x8] sm:$0xff]
    %v1386 = vsel %vm237, %v1381, 0
    %1388 = vmatpush.msra.mxu0 0.0
    %1389 = vmatpush.msra.mxu0 0.0
    %1390 = vmatpush.msra.mxu0 0.0
    %1391 = vmatpush.msra.mxu0 0.0
    %1392 = vmatpush.msra.mxu0 0.0
    %1393 = vmatpush.msra.mxu0 0.0
    %1394 = vmatpush.msra.mxu0 0.0
    %1395 = vmatpush.msra.mxu0 0.0
    %1396 = vmatpush.msra.mxu0 0.0
    %1397 = vmatpush.msra.mxu0 0.0
    %1398 = vmatpush.msra.mxu0 0.0
    %1399 = vmatpush.msra.mxu0 0.0
    %1400 = vmatpush.msra.mxu0 0.0
    %1401 = vmatpush.msra.mxu0 0.0
    %1402 = vmatpush.msra.mxu0 0.0
    %1403 = vmatpush.msra.mxu0 %v1384
    %1404 = vmatmul.f32.gmra.mxu0 %v1386
    %v1405 = vpop.f32.mrf.mxu0
    %v1406 = vadd.f32 0.0, %v1405
    %1407 = vdwg.mxu0
    %v1408 = vsel %vm237, %v1383, 0
    %1410 = vmatpush.msra.mxu0 0.0
    %1411 = vmatpush.msra.mxu0 0.0
    %1412 = vmatpush.msra.mxu0 0.0
    %1413 = vmatpush.msra.mxu0 0.0
    %1414 = vmatpush.msra.mxu0 0.0
    %1415 = vmatpush.msra.mxu0 0.0
    %1416 = vmatpush.msra.mxu0 0.0
    %1417 = vmatpush.msra.mxu0 0.0
    %1418 = vmatpush.msra.mxu0 0.0
    %1419 = vmatpush.msra.mxu0 0.0
    %1420 = vmatpush.msra.mxu0 0.0
    %1421 = vmatpush.msra.mxu0 0.0
    %1422 = vmatpush.msra.mxu0 0.0
    %1423 = vmatpush.msra.mxu0 0.0
    %1424 = vmatpush.msra.mxu0 0.0
    %1425 = vmatpush.msra.mxu0 %v1385
    %1426 = vmatmul.f32.gmra.mxu0 %v1408
    %v1427 = vpop.f32.mrf.mxu0
    %v1428 = vadd.f32 0.0, %v1427
    %1429 = vdwg.mxu0
    %v1430 = vld [vmem:[%s10] sm:$0xff]
    %v1431 = vld [vmem:[%s10 + $0x8] sm:$0xff]
    %v1432 = vld [vmem:[%s10 + $0x10] sm:$0xff]
    %v1433 = vld [vmem:[%s10 + $0x18] sm:$0xff]
    %v1434 = vld [vmem:[%s11] sm:$0xff]
    %v1435 = vld [vmem:[%s11 + $0x8] sm:$0xff]
    %v1436 = vld [vmem:[%s11 + $0x10] sm:$0xff]
    %v1437 = vld [vmem:[%s11 + $0x18] sm:$0xff]
    %v1438 = vld [vmem:[%s11 + $0x20] sm:$0xff]
    %v1439 = vld [vmem:[%s11 + $0x28] sm:$0xff]
    %v1440 = vld [vmem:[%s11 + $0x30] sm:$0xff]
    %v1441 = vld [vmem:[%s11 + $0x38] sm:$0xff]
    %v1444 = vrot.slane %v1428, 7
    %v1445 = vsel %vm219, %v1444, %v1406
    %v1446 = vsel %vm83, %v1445, 0
    %1448 = vmatpush.msra.mxu0 0.0
    %1449 = vmatpush.msra.mxu0 0.0
    %1450 = vmatpush.msra.mxu0 0.0
    %1451 = vmatpush.msra.mxu0 0.0
    %1452 = vmatpush.msra.mxu0 0.0
    %1453 = vmatpush.msra.mxu0 0.0
    %1454 = vmatpush.msra.mxu0 0.0
    %1455 = vmatpush.msra.mxu0 0.0
    %1456 = vmatpush.msra.mxu0 %v1441
    %1457 = vmatpush.msra.mxu0 %v1440
    %1458 = vmatpush.msra.mxu0 %v1439
    %1459 = vmatpush.msra.mxu0 %v1438
    %1460 = vmatpush.msra.mxu0 %v1437
    %1461 = vmatpush.msra.mxu0 %v1436
    %1462 = vmatpush.msra.mxu0 %v1435
    %1463 = vmatpush.msra.mxu0 %v1434
    %1464 = vmatmul.f32.gmra.mxu0 %v1446
    %v1465 = vpop.f32.mrf.mxu0
    %v1466 = vadd.f32 0.0, %v1465
    %1467 = vdwg.mxu0
    %v1469 = vsel %vm173, %v1320, 0
    %1471 = vmatpush.msra.mxu0 0.0
    %1472 = vmatpush.msra.mxu0 0.0
    %1473 = vmatpush.msra.mxu0 0.0
    %1474 = vmatpush.msra.mxu0 0.0
    %1475 = vmatpush.msra.mxu0 0.0
    %1476 = vmatpush.msra.mxu0 0.0
    %1477 = vmatpush.msra.mxu0 0.0
    %1478 = vmatpush.msra.mxu0 0.0
    %1479 = vmatpush.msra.mxu0 0.0
    %1480 = vmatpush.msra.mxu0 0.0
    %1481 = vmatpush.msra.mxu0 0.0
    %1482 = vmatpush.msra.mxu0 0.0
    %1483 = vmatpush.msra.mxu0 %v1433
    %1484 = vmatpush.msra.mxu0 %v1432
    %1485 = vmatpush.msra.mxu0 %v1431
    %1486 = vmatpush.msra.mxu0 %v1430
    %1487 = vmatmul.f32.gmra.mxu0 %v1469
    %v1488 = vpop.f32.mrf.mxu0
    %v1489 = vadd.f32 %v1466, %v1488
    %1490 = vdwg.mxu0
    %v1491 = vld [vmem:[%s12] sm:$0xff]
    %v1492 = vld [vmem:[%s12 + $0x8] sm:$0xff]
    %v1493 = vld [vmem:[%s12 + $0x10] sm:$0xff]
    %v1494 = vld [vmem:[%s12 + $0x18] sm:$0xff]
    %1495 = vmatpush.msra.mxu0 0.0
    %1496 = vmatpush.msra.mxu0 0.0
    %1497 = vmatpush.msra.mxu0 0.0
    %1498 = vmatpush.msra.mxu0 0.0
    %1499 = vmatpush.msra.mxu0 0.0
    %1500 = vmatpush.msra.mxu0 0.0
    %1501 = vmatpush.msra.mxu0 0.0
    %1502 = vmatpush.msra.mxu0 0.0
    %1503 = vmatpush.msra.mxu0 0.0
    %1504 = vmatpush.msra.mxu0 0.0
    %1505 = vmatpush.msra.mxu0 0.0
    %1506 = vmatpush.msra.mxu0 0.0
    %1507 = vmatpush.msra.mxu0 %v1494
    %1508 = vmatpush.msra.mxu0 %v1493
    %1509 = vmatpush.msra.mxu0 %v1492
    %1510 = vmatpush.msra.mxu0 %v1491
    %1511 = vmatmul.f32.gmra.mxu0 %v1206
    %v1512 = vpop.f32.mrf.mxu0
    %v1513 = vadd.f32 0.0, %v1512
    %1514 = vdwg.mxu0
    %v1515 = vadd.f32 %v1489, %v1513
    %v1516 = vadd.f32 %v1515, %v129
    %v1517 = vxor.u32 %v1516, 2147483648
    %v1518 = vmul.f32 %v1517, 1.442695
    %v1519 = vpow.pop %v1518
    %v1520 = vadd.f32 %v1519, 1.0
    %v1521 = vrcp.pop %v1520
    %v1522 = vmul.f32 %v1520, %v1521
    %v1523 = vsub.f32 1.0, %v1522
    %v1524 = vmul.f32 %v1521, %v1523
    %v1525 = vadd.f32 %v1521, %v1524
    %vm1526 = vweird.f32 %v1520
    %vm1527 = vweird.f32 %v1521
    %vm1528 = vmor %vm1526, %vm1527
    %v1529 = vsel %vm1528, %v1521, %v1525
    %v1530 = vand.u32 2147483647, %v1520
    %vm1531 = vcmp.eq.f32.partialorder %v1530, 8.507059e+37
    %v1532 = vand.u32 %v1520, 2147483648
    %v1533 = vor.u32 1.1754944e-38, %v1532
    %v1534 = vsel %vm1531, %v1533, %v1529
    %v1535 = vmul.f32 1.0, %v1534
    %v1536 = vtanh.pop %v1516
    %v1537 = vmul.f32 %v1535, %v1164
    %1539 = vrot.lane.b32.xlu0 %v1536, 64
    %v1540 = vpop.permute.xlu0 %1539
    %v1542 = vmul.f32 %v1535, %v1540
    %1544 = vrot.lane.b32.xlu0 %v1542, 32
    %v1545 = vpop.permute.xlu0 %1544
    %v1547 = vadd.f32 %v1537, %v1545
    %v1548 = vtanh.pop %v1547
    %1550 = vrot.lane.b32.xlu0 %v1548, 64
    %v1551 = vpop.permute.xlu0 %1550
    %v1553 = vmul.f32 %v1535, %v1551
    %v1554 = vld [vmem:[%s14] sm:$0xff]
    %v1555 = vld [vmem:[%s14 + $0x8] sm:$0xff]
    %v1556 = vld [vmem:[%s14 + $0x10] sm:$0xff]
    %v1557 = vld [vmem:[%s14 + $0x18] sm:$0xff]
    %v1558 = vld [vmem:[%s15] sm:$0xff]
    %v1559 = vld [vmem:[%s15 + $0x8] sm:$0xff]
    %v1560 = vld [vmem:[%s15 + $0x10] sm:$0xff]
    %v1561 = vld [vmem:[%s15 + $0x18] sm:$0xff]
    %v1562 = vld [vmem:[%s15 + $0x20] sm:$0xff]
    %v1563 = vld [vmem:[%s15 + $0x28] sm:$0xff]
    %v1564 = vld [vmem:[%s15 + $0x30] sm:$0xff]
    %v1565 = vld [vmem:[%s15 + $0x38] sm:$0xff]
    %1566 = vmatpush.msra.mxu0 0.0
    %1567 = vmatpush.msra.mxu0 0.0
    %1568 = vmatpush.msra.mxu0 0.0
    %1569 = vmatpush.msra.mxu0 0.0
    %1570 = vmatpush.msra.mxu0 0.0
    %1571 = vmatpush.msra.mxu0 0.0
    %1572 = vmatpush.msra.mxu0 0.0
    %1573 = vmatpush.msra.mxu0 0.0
    %1574 = vmatpush.msra.mxu0 %v1565
    %1575 = vmatpush.msra.mxu0 %v1564
    %1576 = vmatpush.msra.mxu0 %v1563
    %1577 = vmatpush.msra.mxu0 %v1562
    %1578 = vmatpush.msra.mxu0 %v1561
    %1579 = vmatpush.msra.mxu0 %v1560
    %1580 = vmatpush.msra.mxu0 %v1559
    %1581 = vmatpush.msra.mxu0 %v1558
    %1582 = vmatmul.f32.gmra.mxu0 %v1446
    %v1583 = vpop.f32.mrf.mxu0
    %v1584 = vadd.f32 0.0, %v1583
    %1585 = vdwg.mxu0
    %1587 = vrot.lane.b32.xlu0 %v1553, 32
    %v1588 = vpop.permute.xlu0 %1587
    %v1589 = vsel %vm173, %v1588, 0
    %1591 = vmatpush.msra.mxu0 0.0
    %1592 = vmatpush.msra.mxu0 0.0
    %1593 = vmatpush.msra.mxu0 0.0
    %1594 = vmatpush.msra.mxu0 0.0
    %1595 = vmatpush.msra.mxu0 0.0
    %1596 = vmatpush.msra.mxu0 0.0
    %1597 = vmatpush.msra.mxu0 0.0
    %1598 = vmatpush.msra.mxu0 0.0
    %1599 = vmatpush.msra.mxu0 0.0
    %1600 = vmatpush.msra.mxu0 0.0
    %1601 = vmatpush.msra.mxu0 0.0
    %1602 = vmatpush.msra.mxu0 0.0
    %1603 = vmatpush.msra.mxu0 %v1557
    %1604 = vmatpush.msra.mxu0 %v1556
    %1605 = vmatpush.msra.mxu0 %v1555
    %1606 = vmatpush.msra.mxu0 %v1554
    %1607 = vmatmul.f32.gmra.mxu0 %v1589
    %v1608 = vpop.f32.mrf.mxu0
    %v1609 = vadd.f32 %v1584, %v1608
    %1610 = vdwg.mxu0
    %v1611 = vld [vmem:[%s16] sm:$0xff]
    %v1612 = vld [vmem:[%s16 + $0x8] sm:$0xff]
    %v1613 = vld [vmem:[%s16 + $0x10] sm:$0xff]
    %v1614 = vld [vmem:[%s16 + $0x18] sm:$0xff]
    %1615 = vmatpush.msra.mxu0 0.0
    %1616 = vmatpush.msra.mxu0 0.0
    %1617 = vmatpush.msra.mxu0 0.0
    %1618 = vmatpush.msra.mxu0 0.0
    %1619 = vmatpush.msra.mxu0 0.0
    %1620 = vmatpush.msra.mxu0 0.0
    %1621 = vmatpush.msra.mxu0 0.0
    %1622 = vmatpush.msra.mxu0 0.0
    %1623 = vmatpush.msra.mxu0 0.0
    %1624 = vmatpush.msra.mxu0 0.0
    %1625 = vmatpush.msra.mxu0 0.0
    %1626 = vmatpush.msra.mxu0 0.0
    %1627 = vmatpush.msra.mxu0 %v1614
    %1628 = vmatpush.msra.mxu0 %v1613
    %1629 = vmatpush.msra.mxu0 %v1612
    %1630 = vmatpush.msra.mxu0 %v1611
    %1631 = vmatmul.f32.gmra.mxu0 %v1469
    %v1632 = vpop.f32.mrf.mxu0
    %v1633 = vadd.f32 0.0, %v1632
    %1634 = vdwg.mxu0
    %v1635 = vadd.f32 %v1609, %v1633
    %v1636 = vadd.f32 %v1635, %v133
    %s1637 = scalar_lea.vmem [#allocation5], 6
    %1638 = vst.msk [vmem:[%s1637] sm:$0x3] %vm489, %v1636
    %v1639 = vsel %vm489, %v1636, -inf
    %1640 = vmax.xlane.f32.xlu0 %v1639
    %v1641 = vpop.xlane.xlu0 %1640
    %vm1642 = vcmp.ge.f32.partialorder %v1636, %v1641
    %v1643 = vsel %vm1642, %v126, 48
    %v1644 = vsel %vm489, %v1643, 2147483647
    %v1645 = vand.u32 %v1644, 65535
    %v1646 = vshra.s32 %v1644, 16
    %v1647 = vcvt.s32.f32 %v1645
    %v1648 = vcvt.s32.f32 %v1646
    %1649 = vmin.xlane.f32.xlu0 %v1648
    %v1650 = vpop.xlane.xlu0 %1649
    %vm1651 = vcmp.eq.f32.partialorder %v1648, %v1650
    %v1652 = vsel %vm1651, %v1647, inf
    %1653 = vmin.xlane.f32.xlu0 %v1652
    %v1654 = vpop.xlane.xlu0 %1653
    %v1655 = vcvt.f32.s32 %v1654
    %v1656 = vcvt.f32.s32 %v1650
    %v1657 = vshll.u32 %v1656, 16
    %v1658 = vadd.s32 %v1657, %v1655
    %s1659 = sld [smem:[#allocation2 + $0x3]]
    %p1660 = scmp.gt.s32.totalorder %s1659, 0
    %s1661 = scalar_select %p1660, 1, 0
    %s1662 = scalar_lea.vmem %s1, 6
    %v1663 = vld [vmem:[%s1662] sm:$0x3]
    %v1664 = vstv %s1661
    %v1665 = vmul.u32 %v1664, %v1663
    %s1666 = ssub.s32 1, %s1661
    %v1667 = vstv %s1666
    %v1668 = vmul.u32 %v1667, %v1658
    %v1669 = vadd.s32 %v1665, %v1668
    %1670 = vset.pattern.permute.xlu0 0
    %1671 = vperm.xlu0 %1670, %v1669
    %v1672 = vpop.permute.xlu0 %1671
    %vm1673 = vcmp.eq.s32.totalorder %v1672, %v126
    %v1674 = vsel %vm1673, 1, 0
    %v1675 = vcvt.s32.f32 %v1674
    %v1676 = vld [vmem:[%s5] sm:$0xff]
    %v1677 = vld [vmem:[%s5 + $0x8] sm:$0xff]
    %v1678 = vld [vmem:[%s5 + $0x10] sm:$0xff]
    %v1679 = vld [vmem:[%s5 + $0x18] sm:$0xff]
    %v1680 = vld [vmem:[%s5 + $0x20] sm:$0xff]
    %v1681 = vld [vmem:[%s5 + $0x28] sm:$0xff]
    %v1683 = vsel %vm145, %v1675, 0
    %1685 = vmatpush.msra.mxu0 0.0
    %1686 = vmatpush.msra.mxu0 0.0
    %1687 = vmatpush.msra.mxu0 0.0
    %1688 = vmatpush.msra.mxu0 0.0
    %1689 = vmatpush.msra.mxu0 0.0
    %1690 = vmatpush.msra.mxu0 0.0
    %1691 = vmatpush.msra.mxu0 0.0
    %1692 = vmatpush.msra.mxu0 0.0
    %1693 = vmatpush.msra.mxu0 0.0
    %1694 = vmatpush.msra.mxu0 0.0
    %1695 = vmatpush.msra.mxu0 %v1681
    %1696 = vmatpush.msra.mxu0 %v1680
    %1697 = vmatpush.msra.mxu0 %v1679
    %1698 = vmatpush.msra.mxu0 %v1678
    %1699 = vmatpush.msra.mxu0 %v1677
    %1700 = vmatpush.msra.mxu0 %v1676
    %1701 = vmatmul.f32.gmra.mxu0 %v1683
    %v1702 = vpop.f32.mrf.mxu0
    %v1703 = vadd.f32 0.0, %v1702
    %1704 = vdwg.mxu0
    %v1705 = vld [vmem:[%s6] sm:$0xff]
    %v1706 = vld [vmem:[%s6 + $0x8] sm:$0xff]
    %v1707 = vld [vmem:[%s6 + $0x10] sm:$0xff]
    %v1708 = vld [vmem:[%s6 + $0x18] sm:$0xff]
    %1709 = vmatpush.msra.mxu0 0.0
    %1710 = vmatpush.msra.mxu0 0.0
    %1711 = vmatpush.msra.mxu0 0.0
    %1712 = vmatpush.msra.mxu0 0.0
    %1713 = vmatpush.msra.mxu0 0.0
    %1714 = vmatpush.msra.mxu0 0.0
    %1715 = vmatpush.msra.mxu0 0.0
    %1716 = vmatpush.msra.mxu0 0.0
    %1717 = vmatpush.msra.mxu0 0.0
    %1718 = vmatpush.msra.mxu0 0.0
    %1719 = vmatpush.msra.mxu0 0.0
    %1720 = vmatpush.msra.mxu0 0.0
    %1721 = vmatpush.msra.mxu0 %v1708
    %1722 = vmatpush.msra.mxu0 %v1707
    %1723 = vmatpush.msra.mxu0 %v1706
    %1724 = vmatpush.msra.mxu0 %v1705
    %1725 = vmatmul.f32.gmra.mxu0 %v1589
    %v1726 = vpop.f32.mrf.mxu0
    %v1727 = vadd.f32 0.0, %v1726
    %1728 = vdwg.mxu0
    %v1730 = vrot.slane %v1727, 1
    %v1731 = vperm.slane %v1727, 0
    %v1732 = vperm.slane %v1730, 0
    %v1735 = vadd.f32 %v117, %v1731
    %v1736 = vadd.f32 %v118, %v1732
    %v1737 = vtanh.pop %v1735
    %v1738 = vtanh.pop %v1736
    %v1739 = vmul.f32 %v1737, %v121
    %v1740 = vmul.f32 %v1738, %v121
    %v1741 = vsel %vm173, %v1739, 0.0
    %1742 = vadd.xlane.f32.xlu0 %v1741
    %v1743 = vpop.xlane.xlu0 %1742
    %v1744 = vsel %vm173, %v1740, 0.0
    %1745 = vadd.xlane.f32.xlu0 %v1744
    %v1746 = vpop.xlane.xlu0 %1745
    %v1749 = vperm.slane %v1743, %v126
    %v1750 = vperm.slane %v1746, %v126
    %v1751 = vsel %vm219, %v1750, %v1749
    %v1753 = vsel %vm124, -1e+10, %v1751
    %v1754 = vsel %vm223, %v1753, -inf
    %1755 = vmax.xlane.f32.xlu0 %v1754
    %v1756 = vpop.xlane.xlu0 %1755
    %v1757 = vsub.f32 %v1753, %v1756
    %v1758 = vmul.f32 %v1757, 1.442695
    %v1759 = vpow.pop %v1758
    %v1760 = vsel %vm223, %v1759, 0.0
    %1761 = vadd.xlane.f32.xlu0 %v1760
    %v1762 = vpop.xlane.xlu0 %1761
    %v1763 = vrcp.pop %v1762
    %v1764 = vmul.f32 %v1759, %v1763
    %v1766 = vrot.slane %v1764, 1
    %v1767 = vld [vmem:[%s3] sm:$0xff]
    %v1768 = vld [vmem:[%s3 + $0x8] sm:$0xff]
    %v1769 = vsel %vm237, %v1764, 0
    %1771 = vmatpush.msra.mxu0 0.0
    %1772 = vmatpush.msra.mxu0 0.0
    %1773 = vmatpush.msra.mxu0 0.0
    %1774 = vmatpush.msra.mxu0 0.0
    %1775 = vmatpush.msra.mxu0 0.0
    %1776 = vmatpush.msra.mxu0 0.0
    %1777 = vmatpush.msra.mxu0 0.0
    %1778 = vmatpush.msra.mxu0 0.0
    %1779 = vmatpush.msra.mxu0 0.0
    %1780 = vmatpush.msra.mxu0 0.0
    %1781 = vmatpush.msra.mxu0 0.0
    %1782 = vmatpush.msra.mxu0 0.0
    %1783 = vmatpush.msra.mxu0 0.0
    %1784 = vmatpush.msra.mxu0 0.0
    %1785 = vmatpush.msra.mxu0 0.0
    %1786 = vmatpush.msra.mxu0 %v1767
    %1787 = vmatmul.f32.gmra.mxu0 %v1769
    %v1788 = vpop.f32.mrf.mxu0
    %v1789 = vadd.f32 0.0, %v1788
    %1790 = vdwg.mxu0
    %v1791 = vsel %vm237, %v1766, 0
    %1793 = vmatpush.msra.mxu0 0.0
    %1794 = vmatpush.msra.mxu0 0.0
    %1795 = vmatpush.msra.mxu0 0.0
    %1796 = vmatpush.msra.mxu0 0.0
    %1797 = vmatpush.msra.mxu0 0.0
    %1798 = vmatpush.msra.mxu0 0.0
    %1799 = vmatpush.msra.mxu0 0.0
    %1800 = vmatpush.msra.mxu0 0.0
    %1801 = vmatpush.msra.mxu0 0.0
    %1802 = vmatpush.msra.mxu0 0.0
    %1803 = vmatpush.msra.mxu0 0.0
    %1804 = vmatpush.msra.mxu0 0.0
    %1805 = vmatpush.msra.mxu0 0.0
    %1806 = vmatpush.msra.mxu0 0.0
    %1807 = vmatpush.msra.mxu0 0.0
    %1808 = vmatpush.msra.mxu0 %v1768
    %1809 = vmatmul.f32.gmra.mxu0 %v1791
    %v1810 = vpop.f32.mrf.mxu0
    %v1811 = vadd.f32 0.0, %v1810
    %1812 = vdwg.mxu0
    %v1813 = vld [vmem:[%s10] sm:$0xff]
    %v1814 = vld [vmem:[%s10 + $0x8] sm:$0xff]
    %v1815 = vld [vmem:[%s10 + $0x10] sm:$0xff]
    %v1816 = vld [vmem:[%s10 + $0x18] sm:$0xff]
    %v1817 = vld [vmem:[%s11] sm:$0xff]
    %v1818 = vld [vmem:[%s11 + $0x8] sm:$0xff]
    %v1819 = vld [vmem:[%s11 + $0x10] sm:$0xff]
    %v1820 = vld [vmem:[%s11 + $0x18] sm:$0xff]
    %v1821 = vld [vmem:[%s11 + $0x20] sm:$0xff]
    %v1822 = vld [vmem:[%s11 + $0x28] sm:$0xff]
    %v1823 = vld [vmem:[%s11 + $0x30] sm:$0xff]
    %v1824 = vld [vmem:[%s11 + $0x38] sm:$0xff]
    %v1827 = vrot.slane %v1811, 7
    %v1828 = vsel %vm219, %v1827, %v1789
    %v1829 = vsel %vm83, %v1828, 0
    %1831 = vmatpush.msra.mxu0 0.0
    %1832 = vmatpush.msra.mxu0 0.0
    %1833 = vmatpush.msra.mxu0 0.0
    %1834 = vmatpush.msra.mxu0 0.0
    %1835 = vmatpush.msra.mxu0 0.0
    %1836 = vmatpush.msra.mxu0 0.0
    %1837 = vmatpush.msra.mxu0 0.0
    %1838 = vmatpush.msra.mxu0 0.0
    %1839 = vmatpush.msra.mxu0 %v1824
    %1840 = vmatpush.msra.mxu0 %v1823
    %1841 = vmatpush.msra.mxu0 %v1822
    %1842 = vmatpush.msra.mxu0 %v1821
    %1843 = vmatpush.msra.mxu0 %v1820
    %1844 = vmatpush.msra.mxu0 %v1819
    %1845 = vmatpush.msra.mxu0 %v1818
    %1846 = vmatpush.msra.mxu0 %v1817
    %1847 = vmatmul.f32.gmra.mxu0 %v1829
    %v1848 = vpop.f32.mrf.mxu0
    %v1849 = vadd.f32 0.0, %v1848
    %1850 = vdwg.mxu0
    %v1852 = vsel %vm173, %v1703, 0
    %1854 = vmatpush.msra.mxu0 0.0
    %1855 = vmatpush.msra.mxu0 0.0
    %1856 = vmatpush.msra.mxu0 0.0
    %1857 = vmatpush.msra.mxu0 0.0
    %1858 = vmatpush.msra.mxu0 0.0
    %1859 = vmatpush.msra.mxu0 0.0
    %1860 = vmatpush.msra.mxu0 0.0
    %1861 = vmatpush.msra.mxu0 0.0
    %1862 = vmatpush.msra.mxu0 0.0
    %1863 = vmatpush.msra.mxu0 0.0
    %1864 = vmatpush.msra.mxu0 0.0
    %1865 = vmatpush.msra.mxu0 0.0
    %1866 = vmatpush.msra.mxu0 %v1816
    %1867 = vmatpush.msra.mxu0 %v1815
    %1868 = vmatpush.msra.mxu0 %v1814
    %1869 = vmatpush.msra.mxu0 %v1813
    %1870 = vmatmul.f32.gmra.mxu0 %v1852
    %v1871 = vpop.f32.mrf.mxu0
    %v1872 = vadd.f32 %v1849, %v1871
    %1873 = vdwg.mxu0
    %v1874 = vld [vmem:[%s12] sm:$0xff]
    %v1875 = vld [vmem:[%s12 + $0x8] sm:$0xff]
    %v1876 = vld [vmem:[%s12 + $0x10] sm:$0xff]
    %v1877 = vld [vmem:[%s12 + $0x18] sm:$0xff]
    %1878 = vmatpush.msra.mxu0 0.0
    %1879 = vmatpush.msra.mxu0 0.0
    %1880 = vmatpush.msra.mxu0 0.0
    %1881 = vmatpush.msra.mxu0 0.0
    %1882 = vmatpush.msra.mxu0 0.0
    %1883 = vmatpush.msra.mxu0 0.0
    %1884 = vmatpush.msra.mxu0 0.0
    %1885 = vmatpush.msra.mxu0 0.0
    %1886 = vmatpush.msra.mxu0 0.0
    %1887 = vmatpush.msra.mxu0 0.0
    %1888 = vmatpush.msra.mxu0 0.0
    %1889 = vmatpush.msra.mxu0 0.0
    %1890 = vmatpush.msra.mxu0 %v1877
    %1891 = vmatpush.msra.mxu0 %v1876
    %1892 = vmatpush.msra.mxu0 %v1875
    %1893 = vmatpush.msra.mxu0 %v1874
    %1894 = vmatmul.f32.gmra.mxu0 %v1589
    %v1895 = vpop.f32.mrf.mxu0
    %v1896 = vadd.f32 0.0, %v1895
    %1897 = vdwg.mxu0
    %v1898 = vadd.f32 %v1872, %v1896
    %v1899 = vadd.f32 %v1898, %v129
    %v1900 = vxor.u32 %v1899, 2147483648
    %v1901 = vmul.f32 %v1900, 1.442695
    %v1902 = vpow.pop %v1901
    %v1903 = vadd.f32 %v1902, 1.0
    %v1904 = vrcp.pop %v1903
    %v1905 = vmul.f32 %v1903, %v1904
    %v1906 = vsub.f32 1.0, %v1905
    %v1907 = vmul.f32 %v1904, %v1906
    %v1908 = vadd.f32 %v1904, %v1907
    %vm1909 = vweird.f32 %v1903
    %vm1910 = vweird.f32 %v1904
    %vm1911 = vmor %vm1909, %vm1910
    %v1912 = vsel %vm1911, %v1904, %v1908
    %v1913 = vand.u32 2147483647, %v1903
    %vm1914 = vcmp.eq.f32.partialorder %v1913, 8.507059e+37
    %v1915 = vand.u32 %v1903, 2147483648
    %v1916 = vor.u32 1.1754944e-38, %v1915
    %v1917 = vsel %vm1914, %v1916, %v1912
    %v1918 = vmul.f32 1.0, %v1917
    %v1919 = vtanh.pop %v1899
    %v1920 = vmul.f32 %v1918, %v1547
    %1922 = vrot.lane.b32.xlu0 %v1919, 64
    %v1923 = vpop.permute.xlu0 %1922
    %v1925 = vmul.f32 %v1918, %v1923
    %1927 = vrot.lane.b32.xlu0 %v1925, 32
    %v1928 = vpop.permute.xlu0 %1927
    %v1930 = vadd.f32 %v1920, %v1928
    %v1931 = vtanh.pop %v1930
    %1933 = vrot.lane.b32.xlu0 %v1931, 64
    %v1934 = vpop.permute.xlu0 %1933
    %v1936 = vmul.f32 %v1918, %v1934
    %v1937 = vld [vmem:[%s14] sm:$0xff]
    %v1938 = vld [vmem:[%s14 + $0x8] sm:$0xff]
    %v1939 = vld [vmem:[%s14 + $0x10] sm:$0xff]
    %v1940 = vld [vmem:[%s14 + $0x18] sm:$0xff]
    %v1941 = vld [vmem:[%s15] sm:$0xff]
    %v1942 = vld [vmem:[%s15 + $0x8] sm:$0xff]
    %v1943 = vld [vmem:[%s15 + $0x10] sm:$0xff]
    %v1944 = vld [vmem:[%s15 + $0x18] sm:$0xff]
    %v1945 = vld [vmem:[%s15 + $0x20] sm:$0xff]
    %v1946 = vld [vmem:[%s15 + $0x28] sm:$0xff]
    %v1947 = vld [vmem:[%s15 + $0x30] sm:$0xff]
    %v1948 = vld [vmem:[%s15 + $0x38] sm:$0xff]
    %1949 = vmatpush.msra.mxu0 0.0
    %1950 = vmatpush.msra.mxu0 0.0
    %1951 = vmatpush.msra.mxu0 0.0
    %1952 = vmatpush.msra.mxu0 0.0
    %1953 = vmatpush.msra.mxu0 0.0
    %1954 = vmatpush.msra.mxu0 0.0
    %1955 = vmatpush.msra.mxu0 0.0
    %1956 = vmatpush.msra.mxu0 0.0
    %1957 = vmatpush.msra.mxu0 %v1948
    %1958 = vmatpush.msra.mxu0 %v1947
    %1959 = vmatpush.msra.mxu0 %v1946
    %1960 = vmatpush.msra.mxu0 %v1945
    %1961 = vmatpush.msra.mxu0 %v1944
    %1962 = vmatpush.msra.mxu0 %v1943
    %1963 = vmatpush.msra.mxu0 %v1942
    %1964 = vmatpush.msra.mxu0 %v1941
    %1965 = vmatmul.f32.gmra.mxu0 %v1829
    %v1966 = vpop.f32.mrf.mxu0
    %v1967 = vadd.f32 0.0, %v1966
    %1968 = vdwg.mxu0
    %1970 = vrot.lane.b32.xlu0 %v1936, 32
    %v1971 = vpop.permute.xlu0 %1970
    %v1972 = vsel %vm173, %v1971, 0
    %1974 = vmatpush.msra.mxu0 0.0
    %1975 = vmatpush.msra.mxu0 0.0
    %1976 = vmatpush.msra.mxu0 0.0
    %1977 = vmatpush.msra.mxu0 0.0
    %1978 = vmatpush.msra.mxu0 0.0
    %1979 = vmatpush.msra.mxu0 0.0
    %1980 = vmatpush.msra.mxu0 0.0
    %1981 = vmatpush.msra.mxu0 0.0
    %1982 = vmatpush.msra.mxu0 0.0
    %1983 = vmatpush.msra.mxu0 0.0
    %1984 = vmatpush.msra.mxu0 0.0
    %1985 = vmatpush.msra.mxu0 0.0
    %1986 = vmatpush.msra.mxu0 %v1940
    %1987 = vmatpush.msra.mxu0 %v1939
    %1988 = vmatpush.msra.mxu0 %v1938
    %1989 = vmatpush.msra.mxu0 %v1937
    %1990 = vmatmul.f32.gmra.mxu0 %v1972
    %v1991 = vpop.f32.mrf.mxu0
    %v1992 = vadd.f32 %v1967, %v1991
    %1993 = vdwg.mxu0
    %v1994 = vld [vmem:[%s16] sm:$0xff]
    %v1995 = vld [vmem:[%s16 + $0x8] sm:$0xff]
    %v1996 = vld [vmem:[%s16 + $0x10] sm:$0xff]
    %v1997 = vld [vmem:[%s16 + $0x18] sm:$0xff]
    %1998 = vmatpush.msra.mxu0 0.0
    %1999 = vmatpush.msra.mxu0 0.0
    %2000 = vmatpush.msra.mxu0 0.0
    %2001 = vmatpush.msra.mxu0 0.0
    %2002 = vmatpush.msra.mxu0 0.0
    %2003 = vmatpush.msra.mxu0 0.0
    %2004 = vmatpush.msra.mxu0 0.0
    %2005 = vmatpush.msra.mxu0 0.0
    %2006 = vmatpush.msra.mxu0 0.0
    %2007 = vmatpush.msra.mxu0 0.0
    %2008 = vmatpush.msra.mxu0 0.0
    %2009 = vmatpush.msra.mxu0 0.0
    %2010 = vmatpush.msra.mxu0 %v1997
    %2011 = vmatpush.msra.mxu0 %v1996
    %2012 = vmatpush.msra.mxu0 %v1995
    %2013 = vmatpush.msra.mxu0 %v1994
    %2014 = vmatmul.f32.gmra.mxu0 %v1852
    %v2015 = vpop.f32.mrf.mxu0
    %v2016 = vadd.f32 0.0, %v2015
    %2017 = vdwg.mxu0
    %v2018 = vadd.f32 %v1992, %v2016
    %v2019 = vadd.f32 %v2018, %v133
    %s2020 = scalar_lea.vmem [#allocation5], 8
    %2021 = vst.msk [vmem:[%s2020] sm:$0x3] %vm489, %v2019
    %v2022 = vsel %vm489, %v2019, -inf
    %2023 = vmax.xlane.f32.xlu0 %v2022
    %v2024 = vpop.xlane.xlu0 %2023
    %vm2025 = vcmp.ge.f32.partialorder %v2019, %v2024
    %v2026 = vsel %vm2025, %v126, 48
    %v2027 = vsel %vm489, %v2026, 2147483647
    %v2028 = vand.u32 %v2027, 65535
    %v2029 = vshra.s32 %v2027, 16
    %v2030 = vcvt.s32.f32 %v2028
    %v2031 = vcvt.s32.f32 %v2029
    %2032 = vmin.xlane.f32.xlu0 %v2031
    %v2033 = vpop.xlane.xlu0 %2032
    %vm2034 = vcmp.eq.f32.partialorder %v2031, %v2033
    %v2035 = vsel %vm2034, %v2030, inf
    %2036 = vmin.xlane.f32.xlu0 %v2035
    %v2037 = vpop.xlane.xlu0 %2036
    %v2038 = vcvt.f32.s32 %v2037
    %v2039 = vcvt.f32.s32 %v2033
    %v2040 = vshll.u32 %v2039, 16
    %v2041 = vadd.s32 %v2040, %v2038
    %s2042 = sld [smem:[#allocation2 + $0x4]]
    %p2043 = scmp.gt.s32.totalorder %s2042, 0
    %s2044 = scalar_select %p2043, 1, 0
    %s2045 = scalar_lea.vmem %s1, 8
    %v2046 = vld [vmem:[%s2045] sm:$0x3]
    %v2047 = vstv %s2044
    %v2048 = vmul.u32 %v2047, %v2046
    %s2049 = ssub.s32 1, %s2044
    %v2050 = vstv %s2049
    %v2051 = vmul.u32 %v2050, %v2041
    %v2052 = vadd.s32 %v2048, %v2051
    %2053 = vset.pattern.permute.xlu0 0
    %2054 = vperm.xlu0 %2053, %v2052
    %v2055 = vpop.permute.xlu0 %2054
    %vm2056 = vcmp.eq.s32.totalorder %v2055, %v126
    %v2057 = vsel %vm2056, 1, 0
    %v2058 = vcvt.s32.f32 %v2057
    %v2059 = vld [vmem:[%s5] sm:$0xff]
    %v2060 = vld [vmem:[%s5 + $0x8] sm:$0xff]
    %v2061 = vld [vmem:[%s5 + $0x10] sm:$0xff]
    %v2062 = vld [vmem:[%s5 + $0x18] sm:$0xff]
    %v2063 = vld [vmem:[%s5 + $0x20] sm:$0xff]
    %v2064 = vld [vmem:[%s5 + $0x28] sm:$0xff]
    %v2066 = vsel %vm145, %v2058, 0
    %2068 = vmatpush.msra.mxu0 0.0
    %2069 = vmatpush.msra.mxu0 0.0
    %2070 = vmatpush.msra.mxu0 0.0
    %2071 = vmatpush.msra.mxu0 0.0
    %2072 = vmatpush.msra.mxu0 0.0
    %2073 = vmatpush.msra.mxu0 0.0
    %2074 = vmatpush.msra.mxu0 0.0
    %2075 = vmatpush.msra.mxu0 0.0
    %2076 = vmatpush.msra.mxu0 0.0
    %2077 = vmatpush.msra.mxu0 0.0
    %2078 = vmatpush.msra.mxu0 %v2064
    %2079 = vmatpush.msra.mxu0 %v2063
    %2080 = vmatpush.msra.mxu0 %v2062
    %2081 = vmatpush.msra.mxu0 %v2061
    %2082 = vmatpush.msra.mxu0 %v2060
    %2083 = vmatpush.msra.mxu0 %v2059
    %2084 = vmatmul.f32.gmra.mxu0 %v2066
    %v2085 = vpop.f32.mrf.mxu0
    %v2086 = vadd.f32 0.0, %v2085
    %2087 = vdwg.mxu0
    %v2088 = vld [vmem:[%s6] sm:$0xff]
    %v2089 = vld [vmem:[%s6 + $0x8] sm:$0xff]
    %v2090 = vld [vmem:[%s6 + $0x10] sm:$0xff]
    %v2091 = vld [vmem:[%s6 + $0x18] sm:$0xff]
    %2092 = vmatpush.msra.mxu0 0.0
    %2093 = vmatpush.msra.mxu0 0.0
    %2094 = vmatpush.msra.mxu0 0.0
    %2095 = vmatpush.msra.mxu0 0.0
    %2096 = vmatpush.msra.mxu0 0.0
    %2097 = vmatpush.msra.mxu0 0.0
    %2098 = vmatpush.msra.mxu0 0.0
    %2099 = vmatpush.msra.mxu0 0.0
    %2100 = vmatpush.msra.mxu0 0.0
    %2101 = vmatpush.msra.mxu0 0.0
    %2102 = vmatpush.msra.mxu0 0.0
    %2103 = vmatpush.msra.mxu0 0.0
    %2104 = vmatpush.msra.mxu0 %v2091
    %2105 = vmatpush.msra.mxu0 %v2090
    %2106 = vmatpush.msra.mxu0 %v2089
    %2107 = vmatpush.msra.mxu0 %v2088
    %2108 = vmatmul.f32.gmra.mxu0 %v1972
    %v2109 = vpop.f32.mrf.mxu0
    %v2110 = vadd.f32 0.0, %v2109
    %2111 = vdwg.mxu0
    %v2113 = vrot.slane %v2110, 1
    %v2114 = vperm.slane %v2110, 0
    %v2115 = vperm.slane %v2113, 0
    %v2118 = vadd.f32 %v117, %v2114
    %v2119 = vadd.f32 %v118, %v2115
    %v2120 = vtanh.pop %v2118
    %v2121 = vtanh.pop %v2119
    %v2122 = vmul.f32 %v2120, %v121
    %v2123 = vmul.f32 %v2121, %v121
    %v2124 = vsel %vm173, %v2122, 0.0
    %2125 = vadd.xlane.f32.xlu0 %v2124
    %v2126 = vpop.xlane.xlu0 %2125
    %v2127 = vsel %vm173, %v2123, 0.0
    %2128 = vadd.xlane.f32.xlu0 %v2127
    %v2129 = vpop.xlane.xlu0 %2128
    %v2132 = vperm.slane %v2126, %v126
    %v2133 = vperm.slane %v2129, %v126
    %v2134 = vsel %vm219, %v2133, %v2132
    %v2136 = vsel %vm124, -1e+10, %v2134
    %v2137 = vsel %vm223, %v2136, -inf
    %2138 = vmax.xlane.f32.xlu0 %v2137
    %v2139 = vpop.xlane.xlu0 %2138
    %v2140 = vsub.f32 %v2136, %v2139
    %v2141 = vmul.f32 %v2140, 1.442695
    %v2142 = vpow.pop %v2141
    %v2143 = vsel %vm223, %v2142, 0.0
    %2144 = vadd.xlane.f32.xlu0 %v2143
    %v2145 = vpop.xlane.xlu0 %2144
    %v2146 = vrcp.pop %v2145
    %v2147 = vmul.f32 %v2142, %v2146
    %v2149 = vrot.slane %v2147, 1
    %v2150 = vld [vmem:[%s3] sm:$0xff]
    %v2151 = vld [vmem:[%s3 + $0x8] sm:$0xff]
    %v2152 = vsel %vm237, %v2147, 0
    %2154 = vmatpush.msra.mxu0 0.0
    %2155 = vmatpush.msra.mxu0 0.0
    %2156 = vmatpush.msra.mxu0 0.0
    %2157 = vmatpush.msra.mxu0 0.0
    %2158 = vmatpush.msra.mxu0 0.0
    %2159 = vmatpush.msra.mxu0 0.0
    %2160 = vmatpush.msra.mxu0 0.0
    %2161 = vmatpush.msra.mxu0 0.0
    %2162 = vmatpush.msra.mxu0 0.0
    %2163 = vmatpush.msra.mxu0 0.0
    %2164 = vmatpush.msra.mxu0 0.0
    %2165 = vmatpush.msra.mxu0 0.0
    %2166 = vmatpush.msra.mxu0 0.0
    %2167 = vmatpush.msra.mxu0 0.0
    %2168 = vmatpush.msra.mxu0 0.0
    %2169 = vmatpush.msra.mxu0 %v2150
    %2170 = vmatmul.f32.gmra.mxu0 %v2152
    %v2171 = vpop.f32.mrf.mxu0
    %v2172 = vadd.f32 0.0, %v2171
    %2173 = vdwg.mxu0
    %v2174 = vsel %vm237, %v2149, 0
    %2176 = vmatpush.msra.mxu0 0.0
    %2177 = vmatpush.msra.mxu0 0.0
    %2178 = vmatpush.msra.mxu0 0.0
    %2179 = vmatpush.msra.mxu0 0.0
    %2180 = vmatpush.msra.mxu0 0.0
    %2181 = vmatpush.msra.mxu0 0.0
    %2182 = vmatpush.msra.mxu0 0.0
    %2183 = vmatpush.msra.mxu0 0.0
    %2184 = vmatpush.msra.mxu0 0.0
    %2185 = vmatpush.msra.mxu0 0.0
    %2186 = vmatpush.msra.mxu0 0.0
    %2187 = vmatpush.msra.mxu0 0.0
    %2188 = vmatpush.msra.mxu0 0.0
    %2189 = vmatpush.msra.mxu0 0.0
    %2190 = vmatpush.msra.mxu0 0.0
    %2191 = vmatpush.msra.mxu0 %v2151
    %2192 = vmatmul.f32.gmra.mxu0 %v2174
    %v2193 = vpop.f32.mrf.mxu0
    %v2194 = vadd.f32 0.0, %v2193
    %2195 = vdwg.mxu0
    %v2196 = vld [vmem:[%s10] sm:$0xff]
    %v2197 = vld [vmem:[%s10 + $0x8] sm:$0xff]
    %v2198 = vld [vmem:[%s10 + $0x10] sm:$0xff]
    %v2199 = vld [vmem:[%s10 + $0x18] sm:$0xff]
    %v2200 = vld [vmem:[%s11] sm:$0xff]
    %v2201 = vld [vmem:[%s11 + $0x8] sm:$0xff]
    %v2202 = vld [vmem:[%s11 + $0x10] sm:$0xff]
    %v2203 = vld [vmem:[%s11 + $0x18] sm:$0xff]
    %v2204 = vld [vmem:[%s11 + $0x20] sm:$0xff]
    %v2205 = vld [vmem:[%s11 + $0x28] sm:$0xff]
    %v2206 = vld [vmem:[%s11 + $0x30] sm:$0xff]
    %v2207 = vld [vmem:[%s11 + $0x38] sm:$0xff]
    %v2210 = vrot.slane %v2194, 7
    %v2211 = vsel %vm219, %v2210, %v2172
    %v2212 = vsel %vm83, %v2211, 0
    %2214 = vmatpush.msra.mxu0 0.0
    %2215 = vmatpush.msra.mxu0 0.0
    %2216 = vmatpush.msra.mxu0 0.0
    %2217 = vmatpush.msra.mxu0 0.0
    %2218 = vmatpush.msra.mxu0 0.0
    %2219 = vmatpush.msra.mxu0 0.0
    %2220 = vmatpush.msra.mxu0 0.0
    %2221 = vmatpush.msra.mxu0 0.0
    %2222 = vmatpush.msra.mxu0 %v2207
    %2223 = vmatpush.msra.mxu0 %v2206
    %2224 = vmatpush.msra.mxu0 %v2205
    %2225 = vmatpush.msra.mxu0 %v2204
    %2226 = vmatpush.msra.mxu0 %v2203
    %2227 = vmatpush.msra.mxu0 %v2202
    %2228 = vmatpush.msra.mxu0 %v2201
    %2229 = vmatpush.msra.mxu0 %v2200
    %2230 = vmatmul.f32.gmra.mxu0 %v2212
    %v2231 = vpop.f32.mrf.mxu0
    %v2232 = vadd.f32 0.0, %v2231
    %2233 = vdwg.mxu0
    %v2235 = vsel %vm173, %v2086, 0
    %2237 = vmatpush.msra.mxu0 0.0
    %2238 = vmatpush.msra.mxu0 0.0
    %2239 = vmatpush.msra.mxu0 0.0
    %2240 = vmatpush.msra.mxu0 0.0
    %2241 = vmatpush.msra.mxu0 0.0
    %2242 = vmatpush.msra.mxu0 0.0
    %2243 = vmatpush.msra.mxu0 0.0
    %2244 = vmatpush.msra.mxu0 0.0
    %2245 = vmatpush.msra.mxu0 0.0
    %2246 = vmatpush.msra.mxu0 0.0
    %2247 = vmatpush.msra.mxu0 0.0
    %2248 = vmatpush.msra.mxu0 0.0
    %2249 = vmatpush.msra.mxu0 %v2199
    %2250 = vmatpush.msra.mxu0 %v2198
    %2251 = vmatpush.msra.mxu0 %v2197
    %2252 = vmatpush.msra.mxu0 %v2196
    %2253 = vmatmul.f32.gmra.mxu0 %v2235
    %v2254 = vpop.f32.mrf.mxu0
    %v2255 = vadd.f32 %v2232, %v2254
    %2256 = vdwg.mxu0
    %v2257 = vld [vmem:[%s12] sm:$0xff]
    %v2258 = vld [vmem:[%s12 + $0x8] sm:$0xff]
    %v2259 = vld [vmem:[%s12 + $0x10] sm:$0xff]
    %v2260 = vld [vmem:[%s12 + $0x18] sm:$0xff]
    %2261 = vmatpush.msra.mxu0 0.0
    %2262 = vmatpush.msra.mxu0 0.0
    %2263 = vmatpush.msra.mxu0 0.0
    %2264 = vmatpush.msra.mxu0 0.0
    %2265 = vmatpush.msra.mxu0 0.0
    %2266 = vmatpush.msra.mxu0 0.0
    %2267 = vmatpush.msra.mxu0 0.0
    %2268 = vmatpush.msra.mxu0 0.0
    %2269 = vmatpush.msra.mxu0 0.0
    %2270 = vmatpush.msra.mxu0 0.0
    %2271 = vmatpush.msra.mxu0 0.0
    %2272 = vmatpush.msra.mxu0 0.0
    %2273 = vmatpush.msra.mxu0 %v2260
    %2274 = vmatpush.msra.mxu0 %v2259
    %2275 = vmatpush.msra.mxu0 %v2258
    %2276 = vmatpush.msra.mxu0 %v2257
    %2277 = vmatmul.f32.gmra.mxu0 %v1972
    %v2278 = vpop.f32.mrf.mxu0
    %v2279 = vadd.f32 0.0, %v2278
    %2280 = vdwg.mxu0
    %v2281 = vadd.f32 %v2255, %v2279
    %v2282 = vadd.f32 %v2281, %v129
    %v2283 = vxor.u32 %v2282, 2147483648
    %v2284 = vmul.f32 %v2283, 1.442695
    %v2285 = vpow.pop %v2284
    %v2286 = vadd.f32 %v2285, 1.0
    %v2287 = vrcp.pop %v2286
    %v2288 = vmul.f32 %v2286, %v2287
    %v2289 = vsub.f32 1.0, %v2288
    %v2290 = vmul.f32 %v2287, %v2289
    %v2291 = vadd.f32 %v2287, %v2290
    %vm2292 = vweird.f32 %v2286
    %vm2293 = vweird.f32 %v2287
    %vm2294 = vmor %vm2292, %vm2293
    %v2295 = vsel %vm2294, %v2287, %v2291
    %v2296 = vand.u32 2147483647, %v2286
    %vm2297 = vcmp.eq.f32.partialorder %v2296, 8.507059e+37
    %v2298 = vand.u32 %v2286, 2147483648
    %v2299 = vor.u32 1.1754944e-38, %v2298
    %v2300 = vsel %vm2297, %v2299, %v2295
    %v2301 = vmul.f32 1.0, %v2300
    %v2302 = vtanh.pop %v2282
    %v2303 = vmul.f32 %v2301, %v1930
    %2305 = vrot.lane.b32.xlu0 %v2302, 64
    %v2306 = vpop.permute.xlu0 %2305
    %v2308 = vmul.f32 %v2301, %v2306
    %2310 = vrot.lane.b32.xlu0 %v2308, 32
    %v2311 = vpop.permute.xlu0 %2310
    %v2313 = vadd.f32 %v2303, %v2311
    %v2314 = vtanh.pop %v2313
    %2316 = vrot.lane.b32.xlu0 %v2314, 64
    %v2317 = vpop.permute.xlu0 %2316
    %v2319 = vmul.f32 %v2301, %v2317
    %v2320 = vld [vmem:[%s14] sm:$0xff]
    %v2321 = vld [vmem:[%s14 + $0x8] sm:$0xff]
    %v2322 = vld [vmem:[%s14 + $0x10] sm:$0xff]
    %v2323 = vld [vmem:[%s14 + $0x18] sm:$0xff]
    %v2324 = vld [vmem:[%s15] sm:$0xff]
    %v2325 = vld [vmem:[%s15 + $0x8] sm:$0xff]
    %v2326 = vld [vmem:[%s15 + $0x10] sm:$0xff]
    %v2327 = vld [vmem:[%s15 + $0x18] sm:$0xff]
    %v2328 = vld [vmem:[%s15 + $0x20] sm:$0xff]
    %v2329 = vld [vmem:[%s15 + $0x28] sm:$0xff]
    %v2330 = vld [vmem:[%s15 + $0x30] sm:$0xff]
    %v2331 = vld [vmem:[%s15 + $0x38] sm:$0xff]
    %2332 = vmatpush.msra.mxu0 0.0
    %2333 = vmatpush.msra.mxu0 0.0
    %2334 = vmatpush.msra.mxu0 0.0
    %2335 = vmatpush.msra.mxu0 0.0
    %2336 = vmatpush.msra.mxu0 0.0
    %2337 = vmatpush.msra.mxu0 0.0
    %2338 = vmatpush.msra.mxu0 0.0
    %2339 = vmatpush.msra.mxu0 0.0
    %2340 = vmatpush.msra.mxu0 %v2331
    %2341 = vmatpush.msra.mxu0 %v2330
    %2342 = vmatpush.msra.mxu0 %v2329
    %2343 = vmatpush.msra.mxu0 %v2328
    %2344 = vmatpush.msra.mxu0 %v2327
    %2345 = vmatpush.msra.mxu0 %v2326
    %2346 = vmatpush.msra.mxu0 %v2325
    %2347 = vmatpush.msra.mxu0 %v2324
    %2348 = vmatmul.f32.gmra.mxu0 %v2212
    %v2349 = vpop.f32.mrf.mxu0
    %v2350 = vadd.f32 0.0, %v2349
    %2351 = vdwg.mxu0
    %2353 = vrot.lane.b32.xlu0 %v2319, 32
    %v2354 = vpop.permute.xlu0 %2353
    %v2355 = vsel %vm173, %v2354, 0
    %2357 = vmatpush.msra.mxu0 0.0
    %2358 = vmatpush.msra.mxu0 0.0
    %2359 = vmatpush.msra.mxu0 0.0
    %2360 = vmatpush.msra.mxu0 0.0
    %2361 = vmatpush.msra.mxu0 0.0
    %2362 = vmatpush.msra.mxu0 0.0
    %2363 = vmatpush.msra.mxu0 0.0
    %2364 = vmatpush.msra.mxu0 0.0
    %2365 = vmatpush.msra.mxu0 0.0
    %2366 = vmatpush.msra.mxu0 0.0
    %2367 = vmatpush.msra.mxu0 0.0
    %2368 = vmatpush.msra.mxu0 0.0
    %2369 = vmatpush.msra.mxu0 %v2323
    %2370 = vmatpush.msra.mxu0 %v2322
    %2371 = vmatpush.msra.mxu0 %v2321
    %2372 = vmatpush.msra.mxu0 %v2320
    %2373 = vmatmul.f32.gmra.mxu0 %v2355
    %v2374 = vpop.f32.mrf.mxu0
    %v2375 = vadd.f32 %v2350, %v2374
    %2376 = vdwg.mxu0
    %v2377 = vld [vmem:[%s16] sm:$0xff]
    %v2378 = vld [vmem:[%s16 + $0x8] sm:$0xff]
    %v2379 = vld [vmem:[%s16 + $0x10] sm:$0xff]
    %v2380 = vld [vmem:[%s16 + $0x18] sm:$0xff]
    %2381 = vmatpush.msra.mxu0 0.0
    %2382 = vmatpush.msra.mxu0 0.0
    %2383 = vmatpush.msra.mxu0 0.0
    %2384 = vmatpush.msra.mxu0 0.0
    %2385 = vmatpush.msra.mxu0 0.0
    %2386 = vmatpush.msra.mxu0 0.0
    %2387 = vmatpush.msra.mxu0 0.0
    %2388 = vmatpush.msra.mxu0 0.0
    %2389 = vmatpush.msra.mxu0 0.0
    %2390 = vmatpush.msra.mxu0 0.0
    %2391 = vmatpush.msra.mxu0 0.0
    %2392 = vmatpush.msra.mxu0 0.0
    %2393 = vmatpush.msra.mxu0 %v2380
    %2394 = vmatpush.msra.mxu0 %v2379
    %2395 = vmatpush.msra.mxu0 %v2378
    %2396 = vmatpush.msra.mxu0 %v2377
    %2397 = vmatmul.f32.gmra.mxu0 %v2235
    %v2398 = vpop.f32.mrf.mxu0
    %v2399 = vadd.f32 0.0, %v2398
    %2400 = vdwg.mxu0
    %v2401 = vadd.f32 %v2375, %v2399
    %v2402 = vadd.f32 %v2401, %v133
    %s2403 = scalar_lea.vmem [#allocation5], 10
    %2404 = vst.msk [vmem:[%s2403] sm:$0x3] %vm489, %v2402
    // Predicated region
    $region78: #{seq2seq_forward.3} parent=1 // pred_check
      _
    $region79: #{seq2seq_forward.3} parent=1 // pred_check_branch
      %2406 = sbr.rel (0) target = $region81
    $region80: #{seq2seq_forward.3} parent=1 // pred_region
      %2408 = vsyncadd [#allocation3], 0
      %s2409 = sshll.u32 [#allocation5], 4
      %s2410 = int_to_ptr.vmem [resolvable:$true] %s2409
      %s2411 = sshll.u32 %s18, 4
      %s2412 = int_to_ptr.hbm [resolvable:$true] %s2411
      %2417 = dma.vmem_to_hbm [thread:$0]  %s2410, 192, %s2412, [#allocation3], 32, 32, 2
    $region81: #{seq2seq_forward.3} parent=1 // pred_fallthru
      _
    // Predicated region
    $region82: #{seq2seq_forward.3} parent=1 // pred_check
      _
    $region83: #{seq2seq_forward.3} parent=1 // pred_check_branch
      %2419 = sbr.rel (0) target = $region85
    $region84: #{seq2seq_forward.3} parent=1 // pred_region
      %2421 = dma.done [#allocation3], 192
    $region85: #{seq2seq_forward.3} parent=1 // pred_fallthru
      _
    %2422 = vsyncpa [#allocation3], 1
    %2423 = vsyncpa [#allocation4], 1

</llo_original>
